<compile_context>
chip_gen: v6e
topology: v6e:2x2x1
jax: 0.10.0
libtpu: 0.0.40
codegen_flags: <defaults>
</compile_context>

<pallas_src>
import functools
import numpy as np
import jax
import jax.numpy as jnp
from jax import lax
from jax.experimental import pallas as pl
from jax.experimental.pallas import tpu as pltpu

H = 32            # hidden_dim
OUT_DIM = 4       # out_dim
NUM_LAYERS = 2
LN_EPS = 1e-5     # torch.nn.LayerNorm default eps


def _fused_kernel(node_ref, edge_ref, graph_ref,
                  wzn_ref, wzh_ref, we_ref, whr_ref, bv_ref,
                  wp1_ref, bp1_ref, wp2_ref, bp2_ref,
                  out_ref, *, n_real, num_layers):
    """All MPNN layers + graph head for a block of BB graphs (grid axis = batch blocks)."""
    BB, NP, Hd = node_ref.shape
    node2d = node_ref[...].reshape(BB * NP, Hd)           # [BB*NP, H]   f32
    edge2d = edge_ref[...].reshape(BB * NP * NP, Hd)      # [BB*NP*NP, H] bf16
    graph = graph_ref[...].reshape(BB, Hd)                # [BB, H]      f32

    hid2d = jnp.zeros_like(node2d)                        # hidden = zeros_like(node_fts_dense)

    for l in range(num_layers):                           # static unroll; hidden stays on-chip
        wzn = wzn_ref[l]                                  # [H, 3H]: cols = [m_1 | m_2 | o_1] (node half)
        wzh = wzh_ref[l]                                  # [H, 3H]: same, hidden half
        we = we_ref[l]                                    # [H, H] bf16 edge projection
        whr = whr_ref[l]                                  # [4, H, H]: wg, wm1, wm2, wo2
        bv = bv_ref[l]                                    # [10, H]: b1,b2,bo1,be,bg,bm1,bm2,bo2,gamma,beta

        # z = concat([node, hidden]) @ W  ==  node @ Wn + hidden @ Wh  (no lane concat/relayout).
        zz = jnp.dot(node2d, wzn, preferred_element_type=jnp.float32)      # [BB*NP, 3H]
        if l > 0:                                                           # hidden == 0 at layer 0
            zz = zz + jnp.dot(hid2d, wzh, preferred_element_type=jnp.float32)
        msg1 = (zz[:, :Hd] + bv[0:1]).reshape(BB, NP, Hd)
        msg2 = (zz[:, Hd:2 * Hd] + bv[1:2]).reshape(BB, NP, Hd)
        h1 = zz[:, 2 * Hd:] + bv[2:3]                                       # [BB*NP, H]

        msg_e = (jnp.dot(edge2d, we, preferred_element_type=jnp.float32)
                 + bv[3:4]).reshape(BB, NP, NP, Hd)
        msg_g = jnp.dot(graph, whr[0], preferred_element_type=jnp.float32) + bv[4:5]   # [BB, H]

        # msgs[b, i, j] = msg1[b, j] + msg2[b, i] + msg_e[b, i, j] + msg_g[b]
        msgs = (msg1[:, None, :, :] + msg2[:, :, None, :] + msg_e
                + msg_g[:, None, None, :])

        # message MLP (msgs_mlp_sizes=[H, H]): relu -> Linear -> relu -> Linear
        m = jnp.maximum(msgs, 0.0).reshape(BB * NP * NP, Hd)
        m = jnp.maximum(jnp.dot(m, whr[1], preferred_element_type=jnp.float32) + bv[5:6], 0.0)
        m = jnp.dot(m, whr[2], preferred_element_type=jnp.float32) + bv[6:7]
        msgs = m.reshape(BB, NP, NP, Hd)

        # reduction = max over the source axis; adj_mat is all-ones in BaselineModel so only the
        # NP-padding rows must be excluded -> static slice (no masked select, no -1e6 sentinel).
        red = jnp.max(msgs[:, :n_real], axis=1).reshape(BB * NP, Hd)

        h2 = jnp.dot(red, whr[3], preferred_element_type=jnp.float32) + bv[7:8]
        ret = jnp.maximum(h1 + h2, 0.0)                                     # activation = relu

        # LayerNorm over the feature dim (use_ln=True).
        mu = jnp.mean(ret, axis=-1, keepdims=True)
        var = jnp.mean((ret - mu) ** 2, axis=-1, keepdims=True)
        hid2d = (ret - mu) * lax.rsqrt(var + LN_EPS) * bv[8:9] + bv[9:10]
        # padded destination rows (>= n_real) carry junk but never feed real rows (the source
        # slice above excludes them) and are excluded from the head mean below.

    # graph head: hidden.mean(dim=1) over the ORIGINAL max_nodes (incl. to_dense_batch zero
    # padding, exactly like the torch code) -> Linear -> ReLU -> Linear.
    emb = jnp.sum(hid2d.reshape(BB, NP, Hd)[:, :n_real], axis=1) * (1.0 / n_real)   # [BB, H]
    h = jnp.maximum(jnp.dot(emb, wp1_ref[...], preferred_element_type=jnp.float32)
                    + bp1_ref[...], 0.0)
    out = jnp.dot(h, wp2_ref[...], preferred_element_type=jnp.float32) + bp2_ref[...]
    out_ref[...] = out.reshape(BB, 1, out.shape[-1])


def pack_layer_params(layer_params):
    """Pack per-layer params: wzn/wzh [L,H,3H], we [L,H,H] bf16, whr [L,4,H,H], bv [L,10,H]."""
    wzn_l, wzh_l, we_l, whr_l, bv_l = [], [], [], [], []
    for p in layer_params:
        wzn_l.append(jnp.concatenate([p["w1n"], p["w2n"], p["wo1n"]], axis=1))   # [H, 3H]
        wzh_l.append(jnp.concatenate([p["w1h"], p["w2h"], p["wo1h"]], axis=1))   # [H, 3H]
        we_l.append(p["we"].astype(jnp.bfloat16))
        whr_l.append(jnp.stack([p["wg"], p["wm1"], p["wm2"], p["wo2"]]))
        bv_l.append(jnp.stack([p["b1"], p["b2"], p["bo1"], p["be"], p["bg"],
                               p["bm1"], p["bm2"], p["bo2"], p["gamma"], p["beta"]]))
    return (jnp.stack(wzn_l), jnp.stack(wzh_l), jnp.stack(we_l),
            jnp.stack(whr_l), jnp.stack(bv_l))


def baseline_forward(node_dense, edge_dense, graph_fts,
                     wzn, wzh, we_p, whr, bv, head_params, *, n_real, block_b=None):
    """Full BaselineModel forward (both MPNN layers + graph head) in one pallas_call."""
    B, NP, Hd = node_dense.shape
    L = wzn.shape[0]
    if block_b is None:
        block_b = max(1, min(B, 256))     # VMEM: ~block_b*NP*NP*H*2B per edge buffer; fits easily
    nb = pl.cdiv(B, block_b)
    B_pad = nb * block_b
    if B_pad != B:                        # pad the batch to a multiple of the graph block
        pad = B_pad - B
        node_dense = jnp.pad(node_dense, ((0, pad), (0, 0), (0, 0)))
        edge_dense = jnp.pad(edge_dense, ((0, pad), (0, 0), (0, 0), (0, 0)))
        graph_fts = jnp.pad(graph_fts, ((0, pad), (0, 0)))

    edge_dense = edge_dense.astype(jnp.bfloat16)   # dominant HBM traffic -> half the DMA bytes
    graph_r = graph_fts[:, None, :]                # [B_pad, 1, H]
    wp1 = head_params["wp1"]
    bp1 = head_params["bp1"].reshape(1, Hd)
    wp2 = head_params["wp2"]
    bp2 = head_params["bp2"].reshape(1, -1)
    out_dim = wp2.shape[1]

    kernel = functools.partial(_fused_kernel, n_real=n_real, num_layers=L)

    out = pl.pallas_call(
        kernel,
        out_shape=jax.ShapeDtypeStruct((B_pad, 1, out_dim), jnp.float32),
        grid=(nb,),
        in_specs=[
            pl.BlockSpec((block_b, NP, Hd), lambda b: (b, 0, 0)),          # node_fts_dense
            pl.BlockSpec((block_b, NP, NP, Hd), lambda b: (b, 0, 0, 0)),   # edge_fts_dense (bf16)
            pl.BlockSpec((block_b, 1, Hd), lambda b: (b, 0, 0)),           # graph_fts
            pl.BlockSpec(wzn.shape, lambda b: (0, 0, 0)),                  # m_1|m_2|o_1 (node half)
            pl.BlockSpec(wzh.shape, lambda b: (0, 0, 0)),                  # m_1|m_2|o_1 (hidden half)
            pl.BlockSpec(we_p.shape, lambda b: (0, 0, 0)),                 # edge projection (bf16)
            pl.BlockSpec(whr.shape, lambda b: (0, 0, 0, 0)),               # wg, wm1, wm2, wo2
            pl.BlockSpec(bv.shape, lambda b: (0, 0, 0)),                   # biases / LN params
            pl.BlockSpec(wp1.shape, lambda b: (0, 0)),                     # head Linear 1
            pl.BlockSpec(bp1.shape, lambda b: (0, 0)),
            pl.BlockSpec(wp2.shape, lambda b: (0, 0)),                     # head Linear 2
            pl.BlockSpec(bp2.shape, lambda b: (0, 0)),
        ],
        out_specs=pl.BlockSpec((block_b, 1, out_dim), lambda b: (b, 0, 0)),
        compiler_params=pltpu.CompilerParams(dimension_semantics=("parallel",)),
    )(node_dense, edge_dense, graph_r, wzn, wzh, we_p, whr, bv, wp1, bp1, wp2, bp2)
    return out[:B, 0, :]


def reference_forward(node, edge, graph, layer_params, head_params):
    """Pure-JAX reference at the unpadded max_nodes, consuming the same bf16-quantized edge
    features / edge-projection weights the kernel consumes (dequantized back to f32)."""
    f32 = jnp.float32
    edge = edge.astype(jnp.bfloat16).astype(f32)
    hid = jnp.zeros_like(node)
    for p in layer_params:
        z = jnp.concatenate([node, hid], axis=-1)
        msg1 = z @ jnp.concatenate([p["w1n"], p["w1h"]], axis=0) + p["b1"]
        msg2 = z @ jnp.concatenate([p["w2n"], p["w2h"]], axis=0) + p["b2"]
        msg_e = edge @ p["we"].astype(jnp.bfloat16).astype(f32) + p["be"]
        msg_g = graph @ p["wg"] + p["bg"]
        msgs = msg1[:, None, :, :] + msg2[:, :, None, :] + msg_e + msg_g[:, None, None, :]
        m = jax.nn.relu(msgs)
        m = jax.nn.relu(m @ p["wm1"] + p["bm1"])
        m = m @ p["wm2"] + p["bm2"]
        red = jnp.max(m, axis=1)                              # adj_mat is all ones
        h1 = z @ jnp.concatenate([p["wo1n"], p["wo1h"]], axis=0) + p["bo1"]
        h2 = red @ p["wo2"] + p["bo2"]
        ret = jax.nn.relu(h1 + h2)
        mu = ret.mean(-1, keepdims=True)
        var = ((ret - mu) ** 2).mean(-1, keepdims=True)
        hid = (ret - mu) * lax.rsqrt(var + LN_EPS) * p["gamma"] + p["beta"]
    emb = hid.mean(axis=1)
    h = jax.nn.relu(emb @ head_params["wp1"] + head_params["bp1"])
    return h @ head_params["wp2"] + head_params["bp2"]


if __name__ == "__main__":
    key = jax.random.PRNGKey(0)
    keys = iter(jax.random.split(key, 256))

    # ----- synthetic PyG-style batch: 8 graphs (ring topology), integer features -----
    ATOM_DIMS = [119, 5, 12, 12, 10, 6, 6, 2, 2]   # OGB atom feature cardinalities
    BOND_DIMS = [5, 6, 2]                          # OGB bond feature cardinalities
    B = 8                                          # graphs in the batch
    BLOCK_B = 4                                    # graphs per grid step -> grid = (2,)
    nodes_per_graph = [5, 3, 4, 5, 2, 3, 5, 4]
    N_REAL = max(nodes_per_graph)                  # max_nodes produced by to_dense_batch (= 5)
    N_PAD = 8                                      # padded to a sublane multiple

    batch_idx = np.concatenate([np.full(n, g, np.int32) for g, n in enumerate(nodes_per_graph)])
    num_nodes = int(batch_idx.shape[0])
    graph_starts = np.concatenate([[0], np.cumsum(nodes_per_graph)[:-1]]).astype(np.int32)

    src_l, dst_l = [], []                          # bidirectional ring edges per graph
    for g, n in enumerate(nodes_per_graph):
        s = int(graph_starts[g])
        for i in range(n):
            j = (i + 1) % n
            if n > 1:
                src_l += [s + i, s + j]
                dst_l += [s + j, s + i]
    edge_index = np.array([src_l, dst_l], dtype=np.int32)
    num_edges = edge_index.shape[1]

    x = jnp.stack([jax.random.randint(next(keys), (num_nodes,), 0, d) for d in ATOM_DIMS], axis=1)
    edge_attr = jnp.stack([jax.random.randint(next(keys), (num_edges,), 0, d) for d in BOND_DIMS], axis=1)

    # ----- AtomEncoder / BondEncoder: summed embedding lookups (glue, plain JAX) -----
    atom_tabs = [0.1 * jax.random.normal(next(keys), (d, H), jnp.float32) for d in ATOM_DIMS]
    bond_tabs = [0.1 * jax.random.normal(next(keys), (d, H), jnp.float32) for d in BOND_DIMS]
    node_fts = sum(tab[x[:, k]] for k, tab in enumerate(atom_tabs))          # [num_nodes, H]
    edge_fts = sum(tab[edge_attr[:, k]] for k, tab in enumerate(bond_tabs))  # [num_edges, H]

    # ----- to_dense_batch + dense edge feature construction (glue, mirrors torch forward) -----
    node_pos = np.array([n - graph_starts[batch_idx[n]] for n in range(num_nodes)])
    node_dense = jnp.zeros((B, N_PAD, H), jnp.float32).at[batch_idx, node_pos].set(node_fts)

    edge_dense = jnp.zeros((B, N_PAD, N_PAD, H), jnp.float32)
    for g in range(B):
        emask = batch_idx[edge_index[0]] == g
        local = edge_index[:, emask]
        if local.size == 0:
            continue
        local = local - local.min()
        edge_dense = edge_dense.at[g, local[0], local[1]].set(edge_fts[np.where(emask)[0]])

    graph_fts = jnp.zeros((B, H), jnp.float32)     # BaselineModel uses zero graph features

    # ----- deterministic parameter init -----
    layer_params = []
    for _ in range(NUM_LAYERS):
        p = {}
        for name in ["w1n", "w1h", "w2n", "w2h", "we", "wg", "wm1", "wm2", "wo1n", "wo1h", "wo2"]:
            p[name] = 0.1 * jax.random.normal(next(keys), (H, H), jnp.float32)
        for name in ["b1", "b2", "be", "bg", "bm1", "bm2", "bo1", "bo2"]:
            p[name] = 0.05 * jax.random.normal(next(keys), (H,), jnp.float32)
        p["gamma"] = jnp.ones((H,), jnp.float32)
        p["beta"] = jnp.zeros((H,), jnp.float32)
        layer_params.append(p)

    head_params = {
        "wp1": 0.1 * jax.random.normal(next(keys), (H, H), jnp.float32),
        "bp1": 0.05 * jax.random.normal(next(keys), (H,), jnp.float32),
        "wp2": 0.1 * jax.random.normal(next(keys), (H, OUT_DIM), jnp.float32),
        "bp2": 0.05 * jax.random.normal(next(keys), (OUT_DIM,), jnp.float32),
    }

    # ----- forward: single fused Pallas kernel (both MPNN layers + graph head) -----
    wzn, wzh, we_p, whr, bv = pack_layer_params(layer_params)
    out = baseline_forward(node_dense, edge_dense, graph_fts, wzn, wzh, we_p, whr, bv,
                           head_params, n_real=N_REAL, block_b=BLOCK_B)
    out = jax.block_until_ready(out)

    assert out.shape == (B, OUT_DIM)
    assert bool(jnp.all(jnp.isfinite(out)))

    # correctness check against the unpadded pure-JAX reference (full-precision matmuls);
    # tolerance 1e-4: tight enough to catch any layout / slicing / packing bug (those give
    # O(1e-2)+ errors); the only remaining slack is MXU f32-emulation pass-count rounding.
    with jax.default_matmul_precision("highest"):
        ref = reference_forward(node_dense[:, :N_REAL], edge_dense[:, :N_REAL, :N_REAL],
                                graph_fts, layer_params, head_params)
        ref = jax.block_until_ready(ref)
    rel_err = float(jnp.linalg.norm(out - ref) / (jnp.linalg.norm(ref) + 1e-6))
    assert rel_err < 1e-4, f"mismatch vs reference: rel_err={rel_err}"

    print("KERNEL_OK")
</pallas_src>

<mosaic_0001>
module attributes {stable_mosaic.version = 11 : i64} {
  func.func @_fused_kernel(%arg0: i32, %arg1: memref<4x8x32xf32, #tpu.memory_space<vmem>>, %arg2: memref<4x8x8x32xbf16, #tpu.memory_space<vmem>>, %arg3: memref<4x1x32xf32, #tpu.memory_space<vmem>>, %arg4: memref<2x32x96xf32, #tpu.memory_space<vmem>>, %arg5: memref<2x32x96xf32, #tpu.memory_space<vmem>>, %arg6: memref<2x32x32xbf16, #tpu.memory_space<vmem>>, %arg7: memref<2x4x32x32xf32, #tpu.memory_space<vmem>>, %arg8: memref<2x10x32xf32, #tpu.memory_space<vmem>>, %arg9: memref<32x32xf32, #tpu.memory_space<vmem>>, %arg10: memref<1x32xf32, #tpu.memory_space<vmem>>, %arg11: memref<32x4xf32, #tpu.memory_space<vmem>>, %arg12: memref<1x4xf32, #tpu.memory_space<vmem>>, %arg13: memref<4x1x4xf32, #tpu.memory_space<vmem>>) attributes {dimension_semantics = [#tpu.dimension_semantics<parallel>], iteration_bounds = array<i64: 2>, scalar_prefetch = 0 : i64, scratch_operands = 0 : i64, tpu.core_type = #tpu.core_type<tc>, window_params = [{transform_indices = @transform_0, window_bounds = array<i64: 4, 8, 32>}, {transform_indices = @transform_1, window_bounds = array<i64: 4, 8, 8, 32>}, {transform_indices = @transform_2, window_bounds = array<i64: 4, 1, 32>}, {pipeline_mode = #tpu.pipeline_mode<synchronous>, transform_indices = @transform_3, window_bounds = array<i64: 2, 32, 96>}, {pipeline_mode = #tpu.pipeline_mode<synchronous>, transform_indices = @transform_4, window_bounds = array<i64: 2, 32, 96>}, {pipeline_mode = #tpu.pipeline_mode<synchronous>, transform_indices = @transform_5, window_bounds = array<i64: 2, 32, 32>}, {pipeline_mode = #tpu.pipeline_mode<synchronous>, transform_indices = @transform_6, window_bounds = array<i64: 2, 4, 32, 32>}, {pipeline_mode = #tpu.pipeline_mode<synchronous>, transform_indices = @transform_7, window_bounds = array<i64: 2, 10, 32>}, {pipeline_mode = #tpu.pipeline_mode<synchronous>, transform_indices = @transform_8, window_bounds = array<i64: 32, 32>}, {pipeline_mode = #tpu.pipeline_mode<synchronous>, transform_indices = @transform_9, window_bounds = array<i64: 1, 32>}, {pipeline_mode = #tpu.pipeline_mode<synchronous>, transform_indices = @transform_10, window_bounds = array<i64: 32, 4>}, {pipeline_mode = #tpu.pipeline_mode<synchronous>, transform_indices = @transform_11, window_bounds = array<i64: 1, 4>}, {transform_indices = @transform_12, window_bounds = array<i64: 4, 1, 4>}]} {
    %c0 = arith.constant 0 : index
    %c0_0 = arith.constant 0 : index
    %c0_1 = arith.constant 0 : index
    %0 = vector.load %arg1[%c0, %c0_0, %c0_1] : memref<4x8x32xf32, #tpu.memory_space<vmem>>, vector<4x8x32xf32>
    %1 = vector.shape_cast %0 : vector<4x8x32xf32> to vector<32x32xf32>
    %c0_2 = arith.constant 0 : index
    %c0_3 = arith.constant 0 : index
    %c0_4 = arith.constant 0 : index
    %c0_5 = arith.constant 0 : index
    %2 = vector.load %arg2[%c0_2, %c0_3, %c0_4, %c0_5] : memref<4x8x8x32xbf16, #tpu.memory_space<vmem>>, vector<4x8x8x32xbf16>
    %3 = vector.shape_cast %2 : vector<4x8x8x32xbf16> to vector<256x32xbf16>
    %c0_6 = arith.constant 0 : index
    %c0_7 = arith.constant 0 : index
    %c0_8 = arith.constant 0 : index
    %4 = vector.load %arg3[%c0_6, %c0_7, %c0_8] : memref<4x1x32xf32, #tpu.memory_space<vmem>>, vector<4x1x32xf32>
    %5 = vector.shape_cast %4 : vector<4x1x32xf32> to vector<4x32xf32>
    %c0_9 = arith.constant 0 : index
    %c0_10 = arith.constant 0 : index
    %c0_11 = arith.constant 0 : index
    %6 = vector.load %arg4[%c0_9, %c0_10, %c0_11] : memref<2x32x96xf32, #tpu.memory_space<vmem>>, vector<1x32x96xf32>
    %7 = vector.shape_cast %6 : vector<1x32x96xf32> to vector<32x96xf32>
    %c0_12 = arith.constant 0 : index
    %c0_13 = arith.constant 0 : index
    %c0_14 = arith.constant 0 : index
    %8 = vector.load %arg6[%c0_12, %c0_13, %c0_14] : memref<2x32x32xbf16, #tpu.memory_space<vmem>>, vector<1x32x32xbf16>
    %9 = vector.shape_cast %8 : vector<1x32x32xbf16> to vector<32x32xbf16>
    %c0_15 = arith.constant 0 : index
    %c0_16 = arith.constant 0 : index
    %c0_17 = arith.constant 0 : index
    %c0_18 = arith.constant 0 : index
    %10 = vector.load %arg7[%c0_15, %c0_16, %c0_17, %c0_18] : memref<2x4x32x32xf32, #tpu.memory_space<vmem>>, vector<1x4x32x32xf32>
    %11 = vector.shape_cast %10 : vector<1x4x32x32xf32> to vector<4x32x32xf32>
    %c0_19 = arith.constant 0 : index
    %c0_20 = arith.constant 0 : index
    %c0_21 = arith.constant 0 : index
    %12 = vector.load %arg8[%c0_19, %c0_20, %c0_21] : memref<2x10x32xf32, #tpu.memory_space<vmem>>, vector<1x10x32xf32>
    %13 = vector.shape_cast %12 : vector<1x10x32xf32> to vector<10x32xf32>
    %cst = arith.constant dense<0.000000e+00> : vector<32x96xf32>
    %14 = tpu.matmul %1, %7, %cst {dimension_numbers = #tpu.dot_dimension_numbers<[1], [0], [0], [1], [0, 0, 1, 1], [], []>} : vector<32x32xf32>, vector<32x96xf32>, vector<32x96xf32> -> vector<32x96xf32>
    %15 = vector.extract_strided_slice %14 {offsets = [0, 0], sizes = [32, 32], strides = [1, 1]} : vector<32x96xf32> to vector<32x32xf32>
    %16 = vector.extract_strided_slice %13 {offsets = [0, 0], sizes = [1, 32], strides = [1, 1]} : vector<10x32xf32> to vector<1x32xf32>
    %17 = vector.broadcast %16 : vector<1x32xf32> to vector<32x32xf32>
    %18 = arith.addf %15, %17 : vector<32x32xf32>
    %19 = vector.shape_cast %18 : vector<32x32xf32> to vector<4x8x32xf32>
    %20 = vector.extract_strided_slice %14 {offsets = [0, 32], sizes = [32, 32], strides = [1, 1]} : vector<32x96xf32> to vector<32x32xf32>
    %21 = vector.extract_strided_slice %13 {offsets = [1, 0], sizes = [1, 32], strides = [1, 1]} : vector<10x32xf32> to vector<1x32xf32>
    %22 = vector.broadcast %21 : vector<1x32xf32> to vector<32x32xf32>
    %23 = arith.addf %20, %22 : vector<32x32xf32>
    %24 = vector.shape_cast %23 : vector<32x32xf32> to vector<4x8x32xf32>
    %25 = vector.extract_strided_slice %14 {offsets = [0, 64], sizes = [32, 32], strides = [1, 1]} : vector<32x96xf32> to vector<32x32xf32>
    %26 = vector.extract_strided_slice %13 {offsets = [2, 0], sizes = [1, 32], strides = [1, 1]} : vector<10x32xf32> to vector<1x32xf32>
    %27 = vector.broadcast %26 : vector<1x32xf32> to vector<32x32xf32>
    %28 = arith.addf %25, %27 : vector<32x32xf32>
    %cst_22 = arith.constant dense<0.000000e+00> : vector<256x32xf32>
    %29 = tpu.matmul %3, %9, %cst_22 {dimension_numbers = #tpu.dot_dimension_numbers<[1], [0], [0], [1], [0, 0, 1, 1], [], []>} : vector<256x32xbf16>, vector<32x32xbf16>, vector<256x32xf32> -> vector<256x32xf32>
    %30 = vector.extract_strided_slice %13 {offsets = [3, 0], sizes = [1, 32], strides = [1, 1]} : vector<10x32xf32> to vector<1x32xf32>
    %31 = vector.broadcast %30 : vector<1x32xf32> to vector<256x32xf32>
    %32 = arith.addf %29, %31 : vector<256x32xf32>
    %33 = vector.shape_cast %32 : vector<256x32xf32> to vector<4x8x8x32xf32>
    %34 = vector.extract_strided_slice %11 {offsets = [0, 0, 0], sizes = [1, 32, 32], strides = [1, 1, 1]} : vector<4x32x32xf32> to vector<1x32x32xf32>
    %35 = vector.shape_cast %34 : vector<1x32x32xf32> to vector<32x32xf32>
    %cst_23 = arith.constant dense<0.000000e+00> : vector<4x32xf32>
    %36 = tpu.matmul %5, %35, %cst_23 {dimension_numbers = #tpu.dot_dimension_numbers<[1], [0], [0], [1], [0, 0, 1, 1], [], []>} : vector<4x32xf32>, vector<32x32xf32>, vector<4x32xf32> -> vector<4x32xf32>
    %37 = vector.extract_strided_slice %13 {offsets = [4, 0], sizes = [1, 32], strides = [1, 1]} : vector<10x32xf32> to vector<1x32xf32>
    %38 = vector.broadcast %37 : vector<1x32xf32> to vector<4x32xf32>
    %39 = arith.addf %36, %38 : vector<4x32xf32>
    %40 = vector.shape_cast %19 : vector<4x8x32xf32> to vector<4x1x8x32xf32>
    %41 = vector.shape_cast %24 : vector<4x8x32xf32> to vector<4x8x1x32xf32>
    %42 = vector.broadcast %40 : vector<4x1x8x32xf32> to vector<4x8x8x32xf32>
    %43 = vector.broadcast %41 : vector<4x8x1x32xf32> to vector<4x8x8x32xf32>
    %44 = arith.addf %42, %43 : vector<4x8x8x32xf32>
    %45 = arith.addf %44, %33 : vector<4x8x8x32xf32>
    %46 = vector.shape_cast %39 : vector<4x32xf32> to vector<4x1x1x32xf32>
    %47 = vector.broadcast %46 : vector<4x1x1x32xf32> to vector<4x8x8x32xf32>
    %48 = arith.addf %45, %47 : vector<4x8x8x32xf32>
    %cst_24 = arith.constant 0.000000e+00 : f32
    %49 = vector.broadcast %cst_24 : f32 to vector<4x8x8x32xf32>
    %50 = arith.maximumf %48, %49 : vector<4x8x8x32xf32>
    %51 = vector.shape_cast %50 : vector<4x8x8x32xf32> to vector<256x32xf32>
    %52 = vector.extract_strided_slice %11 {offsets = [1, 0, 0], sizes = [1, 32, 32], strides = [1, 1, 1]} : vector<4x32x32xf32> to vector<1x32x32xf32>
    %53 = vector.shape_cast %52 : vector<1x32x32xf32> to vector<32x32xf32>
    %cst_25 = arith.constant dense<0.000000e+00> : vector<256x32xf32>
    %54 = tpu.matmul %51, %53, %cst_25 {dimension_numbers = #tpu.dot_dimension_numbers<[1], [0], [0], [1], [0, 0, 1, 1], [], []>} : vector<256x32xf32>, vector<32x32xf32>, vector<256x32xf32> -> vector<256x32xf32>
    %55 = vector.extract_strided_slice %13 {offsets = [5, 0], sizes = [1, 32], strides = [1, 1]} : vector<10x32xf32> to vector<1x32xf32>
    %56 = vector.broadcast %55 : vector<1x32xf32> to vector<256x32xf32>
    %57 = arith.addf %54, %56 : vector<256x32xf32>
    %cst_26 = arith.constant 0.000000e+00 : f32
    %58 = vector.broadcast %cst_26 : f32 to vector<256x32xf32>
    %59 = arith.maximumf %57, %58 : vector<256x32xf32>
    %60 = vector.extract_strided_slice %11 {offsets = [2, 0, 0], sizes = [1, 32, 32], strides = [1, 1, 1]} : vector<4x32x32xf32> to vector<1x32x32xf32>
    %61 = vector.shape_cast %60 : vector<1x32x32xf32> to vector<32x32xf32>
    %cst_27 = arith.constant dense<0.000000e+00> : vector<256x32xf32>
    %62 = tpu.matmul %59, %61, %cst_27 {dimension_numbers = #tpu.dot_dimension_numbers<[1], [0], [0], [1], [0, 0, 1, 1], [], []>} : vector<256x32xf32>, vector<32x32xf32>, vector<256x32xf32> -> vector<256x32xf32>
    %63 = vector.extract_strided_slice %13 {offsets = [6, 0], sizes = [1, 32], strides = [1, 1]} : vector<10x32xf32> to vector<1x32xf32>
    %64 = vector.broadcast %63 : vector<1x32xf32> to vector<256x32xf32>
    %65 = arith.addf %62, %64 : vector<256x32xf32>
    %66 = vector.shape_cast %65 : vector<256x32xf32> to vector<4x8x8x32xf32>
    %67 = vector.extract_strided_slice %66 {offsets = [0, 0, 0, 0], sizes = [4, 5, 8, 32], strides = [1, 1, 1, 1]} : vector<4x8x8x32xf32> to vector<4x5x8x32xf32>
    %cst_28 = arith.constant dense<0xFF800000> : vector<4x8x32xf32>
    %68 = vector.multi_reduction <maximumf>, %67, %cst_28 [1] : vector<4x5x8x32xf32> to vector<4x8x32xf32>
    %69 = vector.shape_cast %68 : vector<4x8x32xf32> to vector<32x32xf32>
    %70 = vector.extract_strided_slice %11 {offsets = [3, 0, 0], sizes = [1, 32, 32], strides = [1, 1, 1]} : vector<4x32x32xf32> to vector<1x32x32xf32>
    %71 = vector.shape_cast %70 : vector<1x32x32xf32> to vector<32x32xf32>
    %cst_29 = arith.constant dense<0.000000e+00> : vector<32x32xf32>
    %72 = tpu.matmul %69, %71, %cst_29 {dimension_numbers = #tpu.dot_dimension_numbers<[1], [0], [0], [1], [0, 0, 1, 1], [], []>} : vector<32x32xf32>, vector<32x32xf32>, vector<32x32xf32> -> vector<32x32xf32>
    %73 = vector.extract_strided_slice %13 {offsets = [7, 0], sizes = [1, 32], strides = [1, 1]} : vector<10x32xf32> to vector<1x32xf32>
    %74 = vector.broadcast %73 : vector<1x32xf32> to vector<32x32xf32>
    %75 = arith.addf %72, %74 : vector<32x32xf32>
    %76 = arith.addf %28, %75 : vector<32x32xf32>
    %cst_30 = arith.constant 0.000000e+00 : f32
    %77 = vector.broadcast %cst_30 : f32 to vector<32x32xf32>
    %78 = arith.maximumf %76, %77 : vector<32x32xf32>
    %cst_31 = arith.constant dense<0.000000e+00> : vector<32xf32>
    %79 = vector.multi_reduction <add>, %78, %cst_31 [1] : vector<32x32xf32> to vector<32xf32>
    %80 = vector.shape_cast %79 : vector<32xf32> to vector<32x1xf32>
    %cst_32 = arith.constant 3.200000e+01 : f32
    %81 = vector.broadcast %cst_32 : f32 to vector<32x1xf32>
    %82 = arith.divf %80, %81 : vector<32x1xf32>
    %83 = vector.broadcast %82 : vector<32x1xf32> to vector<32x32xf32>
    %84 = arith.subf %78, %83 : vector<32x32xf32>
    %85 = arith.mulf %84, %84 : vector<32x32xf32>
    %cst_33 = arith.constant dense<0.000000e+00> : vector<32xf32>
    %86 = vector.multi_reduction <add>, %85, %cst_33 [1] : vector<32x32xf32> to vector<32xf32>
    %87 = vector.shape_cast %86 : vector<32xf32> to vector<32x1xf32>
    %cst_34 = arith.constant 3.200000e+01 : f32
    %88 = vector.broadcast %cst_34 : f32 to vector<32x1xf32>
    %89 = arith.divf %87, %88 : vector<32x1xf32>
    %90 = vector.broadcast %82 : vector<32x1xf32> to vector<32x32xf32>
    %91 = arith.subf %78, %90 : vector<32x32xf32>
    %cst_35 = arith.constant 9.99999974E-6 : f32
    %92 = vector.broadcast %cst_35 : f32 to vector<32x1xf32>
    %93 = arith.addf %89, %92 : vector<32x1xf32>
    %94 = math.rsqrt %93 : vector<32x1xf32>
    %95 = vector.broadcast %94 : vector<32x1xf32> to vector<32x32xf32>
    %96 = arith.mulf %91, %95 : vector<32x32xf32>
    %97 = vector.extract_strided_slice %13 {offsets = [8, 0], sizes = [1, 32], strides = [1, 1]} : vector<10x32xf32> to vector<1x32xf32>
    %98 = vector.broadcast %97 : vector<1x32xf32> to vector<32x32xf32>
    %99 = arith.mulf %96, %98 : vector<32x32xf32>
    %100 = vector.extract_strided_slice %13 {offsets = [9, 0], sizes = [1, 32], strides = [1, 1]} : vector<10x32xf32> to vector<1x32xf32>
    %101 = vector.broadcast %100 : vector<1x32xf32> to vector<32x32xf32>
    %102 = arith.addf %99, %101 : vector<32x32xf32>
    %c1 = arith.constant 1 : index
    %c0_36 = arith.constant 0 : index
    %c0_37 = arith.constant 0 : index
    %103 = vector.load %arg4[%c1, %c0_36, %c0_37] : memref<2x32x96xf32, #tpu.memory_space<vmem>>, vector<1x32x96xf32>
    %104 = vector.shape_cast %103 : vector<1x32x96xf32> to vector<32x96xf32>
    %c1_38 = arith.constant 1 : index
    %c0_39 = arith.constant 0 : index
    %c0_40 = arith.constant 0 : index
    %105 = vector.load %arg5[%c1_38, %c0_39, %c0_40] : memref<2x32x96xf32, #tpu.memory_space<vmem>>, vector<1x32x96xf32>
    %106 = vector.shape_cast %105 : vector<1x32x96xf32> to vector<32x96xf32>
    %c1_41 = arith.constant 1 : index
    %c0_42 = arith.constant 0 : index
    %c0_43 = arith.constant 0 : index
    %107 = vector.load %arg6[%c1_41, %c0_42, %c0_43] : memref<2x32x32xbf16, #tpu.memory_space<vmem>>, vector<1x32x32xbf16>
    %108 = vector.shape_cast %107 : vector<1x32x32xbf16> to vector<32x32xbf16>
    %c1_44 = arith.constant 1 : index
    %c0_45 = arith.constant 0 : index
    %c0_46 = arith.constant 0 : index
    %c0_47 = arith.constant 0 : index
    %109 = vector.load %arg7[%c1_44, %c0_45, %c0_46, %c0_47] : memref<2x4x32x32xf32, #tpu.memory_space<vmem>>, vector<1x4x32x32xf32>
    %110 = vector.shape_cast %109 : vector<1x4x32x32xf32> to vector<4x32x32xf32>
    %c1_48 = arith.constant 1 : index
    %c0_49 = arith.constant 0 : index
    %c0_50 = arith.constant 0 : index
    %111 = vector.load %arg8[%c1_48, %c0_49, %c0_50] : memref<2x10x32xf32, #tpu.memory_space<vmem>>, vector<1x10x32xf32>
    %112 = vector.shape_cast %111 : vector<1x10x32xf32> to vector<10x32xf32>
    %cst_51 = arith.constant dense<0.000000e+00> : vector<32x96xf32>
    %113 = tpu.matmul %1, %104, %cst_51 {dimension_numbers = #tpu.dot_dimension_numbers<[1], [0], [0], [1], [0, 0, 1, 1], [], []>} : vector<32x32xf32>, vector<32x96xf32>, vector<32x96xf32> -> vector<32x96xf32>
    %cst_52 = arith.constant dense<0.000000e+00> : vector<32x96xf32>
    %114 = tpu.matmul %102, %106, %cst_52 {dimension_numbers = #tpu.dot_dimension_numbers<[1], [0], [0], [1], [0, 0, 1, 1], [], []>} : vector<32x32xf32>, vector<32x96xf32>, vector<32x96xf32> -> vector<32x96xf32>
    %115 = arith.addf %113, %114 : vector<32x96xf32>
    %116 = vector.extract_strided_slice %115 {offsets = [0, 0], sizes = [32, 32], strides = [1, 1]} : vector<32x96xf32> to vector<32x32xf32>
    %117 = vector.extract_strided_slice %112 {offsets = [0, 0], sizes = [1, 32], strides = [1, 1]} : vector<10x32xf32> to vector<1x32xf32>
    %118 = vector.broadcast %117 : vector<1x32xf32> to vector<32x32xf32>
    %119 = arith.addf %116, %118 : vector<32x32xf32>
    %120 = vector.shape_cast %119 : vector<32x32xf32> to vector<4x8x32xf32>
    %121 = vector.extract_strided_slice %115 {offsets = [0, 32], sizes = [32, 32], strides = [1, 1]} : vector<32x96xf32> to vector<32x32xf32>
    %122 = vector.extract_strided_slice %112 {offsets = [1, 0], sizes = [1, 32], strides = [1, 1]} : vector<10x32xf32> to vector<1x32xf32>
    %123 = vector.broadcast %122 : vector<1x32xf32> to vector<32x32xf32>
    %124 = arith.addf %121, %123 : vector<32x32xf32>
    %125 = vector.shape_cast %124 : vector<32x32xf32> to vector<4x8x32xf32>
    %126 = vector.extract_strided_slice %115 {offsets = [0, 64], sizes = [32, 32], strides = [1, 1]} : vector<32x96xf32> to vector<32x32xf32>
    %127 = vector.extract_strided_slice %112 {offsets = [2, 0], sizes = [1, 32], strides = [1, 1]} : vector<10x32xf32> to vector<1x32xf32>
    %128 = vector.broadcast %127 : vector<1x32xf32> to vector<32x32xf32>
    %129 = arith.addf %126, %128 : vector<32x32xf32>
    %cst_53 = arith.constant dense<0.000000e+00> : vector<256x32xf32>
    %130 = tpu.matmul %3, %108, %cst_53 {dimension_numbers = #tpu.dot_dimension_numbers<[1], [0], [0], [1], [0, 0, 1, 1], [], []>} : vector<256x32xbf16>, vector<32x32xbf16>, vector<256x32xf32> -> vector<256x32xf32>
    %131 = vector.extract_strided_slice %112 {offsets = [3, 0], sizes = [1, 32], strides = [1, 1]} : vector<10x32xf32> to vector<1x32xf32>
    %132 = vector.broadcast %131 : vector<1x32xf32> to vector<256x32xf32>
    %133 = arith.addf %130, %132 : vector<256x32xf32>
    %134 = vector.shape_cast %133 : vector<256x32xf32> to vector<4x8x8x32xf32>
    %135 = vector.extract_strided_slice %110 {offsets = [0, 0, 0], sizes = [1, 32, 32], strides = [1, 1, 1]} : vector<4x32x32xf32> to vector<1x32x32xf32>
    %136 = vector.shape_cast %135 : vector<1x32x32xf32> to vector<32x32xf32>
    %cst_54 = arith.constant dense<0.000000e+00> : vector<4x32xf32>
    %137 = tpu.matmul %5, %136, %cst_54 {dimension_numbers = #tpu.dot_dimension_numbers<[1], [0], [0], [1], [0, 0, 1, 1], [], []>} : vector<4x32xf32>, vector<32x32xf32>, vector<4x32xf32> -> vector<4x32xf32>
    %138 = vector.extract_strided_slice %112 {offsets = [4, 0], sizes = [1, 32], strides = [1, 1]} : vector<10x32xf32> to vector<1x32xf32>
    %139 = vector.broadcast %138 : vector<1x32xf32> to vector<4x32xf32>
    %140 = arith.addf %137, %139 : vector<4x32xf32>
    %141 = vector.shape_cast %120 : vector<4x8x32xf32> to vector<4x1x8x32xf32>
    %142 = vector.shape_cast %125 : vector<4x8x32xf32> to vector<4x8x1x32xf32>
    %143 = vector.broadcast %141 : vector<4x1x8x32xf32> to vector<4x8x8x32xf32>
    %144 = vector.broadcast %142 : vector<4x8x1x32xf32> to vector<4x8x8x32xf32>
    %145 = arith.addf %143, %144 : vector<4x8x8x32xf32>
    %146 = arith.addf %145, %134 : vector<4x8x8x32xf32>
    %147 = vector.shape_cast %140 : vector<4x32xf32> to vector<4x1x1x32xf32>
    %148 = vector.broadcast %147 : vector<4x1x1x32xf32> to vector<4x8x8x32xf32>
    %149 = arith.addf %146, %148 : vector<4x8x8x32xf32>
    %cst_55 = arith.constant 0.000000e+00 : f32
    %150 = vector.broadcast %cst_55 : f32 to vector<4x8x8x32xf32>
    %151 = arith.maximumf %149, %150 : vector<4x8x8x32xf32>
    %152 = vector.shape_cast %151 : vector<4x8x8x32xf32> to vector<256x32xf32>
    %153 = vector.extract_strided_slice %110 {offsets = [1, 0, 0], sizes = [1, 32, 32], strides = [1, 1, 1]} : vector<4x32x32xf32> to vector<1x32x32xf32>
    %154 = vector.shape_cast %153 : vector<1x32x32xf32> to vector<32x32xf32>
    %cst_56 = arith.constant dense<0.000000e+00> : vector<256x32xf32>
    %155 = tpu.matmul %152, %154, %cst_56 {dimension_numbers = #tpu.dot_dimension_numbers<[1], [0], [0], [1], [0, 0, 1, 1], [], []>} : vector<256x32xf32>, vector<32x32xf32>, vector<256x32xf32> -> vector<256x32xf32>
    %156 = vector.extract_strided_slice %112 {offsets = [5, 0], sizes = [1, 32], strides = [1, 1]} : vector<10x32xf32> to vector<1x32xf32>
    %157 = vector.broadcast %156 : vector<1x32xf32> to vector<256x32xf32>
    %158 = arith.addf %155, %157 : vector<256x32xf32>
    %cst_57 = arith.constant 0.000000e+00 : f32
    %159 = vector.broadcast %cst_57 : f32 to vector<256x32xf32>
    %160 = arith.maximumf %158, %159 : vector<256x32xf32>
    %161 = vector.extract_strided_slice %110 {offsets = [2, 0, 0], sizes = [1, 32, 32], strides = [1, 1, 1]} : vector<4x32x32xf32> to vector<1x32x32xf32>
    %162 = vector.shape_cast %161 : vector<1x32x32xf32> to vector<32x32xf32>
    %cst_58 = arith.constant dense<0.000000e+00> : vector<256x32xf32>
    %163 = tpu.matmul %160, %162, %cst_58 {dimension_numbers = #tpu.dot_dimension_numbers<[1], [0], [0], [1], [0, 0, 1, 1], [], []>} : vector<256x32xf32>, vector<32x32xf32>, vector<256x32xf32> -> vector<256x32xf32>
    %164 = vector.extract_strided_slice %112 {offsets = [6, 0], sizes = [1, 32], strides = [1, 1]} : vector<10x32xf32> to vector<1x32xf32>
    %165 = vector.broadcast %164 : vector<1x32xf32> to vector<256x32xf32>
    %166 = arith.addf %163, %165 : vector<256x32xf32>
    %167 = vector.shape_cast %166 : vector<256x32xf32> to vector<4x8x8x32xf32>
    %168 = vector.extract_strided_slice %167 {offsets = [0, 0, 0, 0], sizes = [4, 5, 8, 32], strides = [1, 1, 1, 1]} : vector<4x8x8x32xf32> to vector<4x5x8x32xf32>
    %cst_59 = arith.constant dense<0xFF800000> : vector<4x8x32xf32>
    %169 = vector.multi_reduction <maximumf>, %168, %cst_59 [1] : vector<4x5x8x32xf32> to vector<4x8x32xf32>
    %170 = vector.shape_cast %169 : vector<4x8x32xf32> to vector<32x32xf32>
    %171 = vector.extract_strided_slice %110 {offsets = [3, 0, 0], sizes = [1, 32, 32], strides = [1, 1, 1]} : vector<4x32x32xf32> to vector<1x32x32xf32>
    %172 = vector.shape_cast %171 : vector<1x32x32xf32> to vector<32x32xf32>
    %cst_60 = arith.constant dense<0.000000e+00> : vector<32x32xf32>
    %173 = tpu.matmul %170, %172, %cst_60 {dimension_numbers = #tpu.dot_dimension_numbers<[1], [0], [0], [1], [0, 0, 1, 1], [], []>} : vector<32x32xf32>, vector<32x32xf32>, vector<32x32xf32> -> vector<32x32xf32>
    %174 = vector.extract_strided_slice %112 {offsets = [7, 0], sizes = [1, 32], strides = [1, 1]} : vector<10x32xf32> to vector<1x32xf32>
    %175 = vector.broadcast %174 : vector<1x32xf32> to vector<32x32xf32>
    %176 = arith.addf %173, %175 : vector<32x32xf32>
    %177 = arith.addf %129, %176 : vector<32x32xf32>
    %cst_61 = arith.constant 0.000000e+00 : f32
    %178 = vector.broadcast %cst_61 : f32 to vector<32x32xf32>
    %179 = arith.maximumf %177, %178 : vector<32x32xf32>
    %cst_62 = arith.constant dense<0.000000e+00> : vector<32xf32>
    %180 = vector.multi_reduction <add>, %179, %cst_62 [1] : vector<32x32xf32> to vector<32xf32>
    %181 = vector.shape_cast %180 : vector<32xf32> to vector<32x1xf32>
    %cst_63 = arith.constant 3.200000e+01 : f32
    %182 = vector.broadcast %cst_63 : f32 to vector<32x1xf32>
    %183 = arith.divf %181, %182 : vector<32x1xf32>
    %184 = vector.broadcast %183 : vector<32x1xf32> to vector<32x32xf32>
    %185 = arith.subf %179, %184 : vector<32x32xf32>
    %186 = arith.mulf %185, %185 : vector<32x32xf32>
    %cst_64 = arith.constant dense<0.000000e+00> : vector<32xf32>
    %187 = vector.multi_reduction <add>, %186, %cst_64 [1] : vector<32x32xf32> to vector<32xf32>
    %188 = vector.shape_cast %187 : vector<32xf32> to vector<32x1xf32>
    %cst_65 = arith.constant 3.200000e+01 : f32
    %189 = vector.broadcast %cst_65 : f32 to vector<32x1xf32>
    %190 = arith.divf %188, %189 : vector<32x1xf32>
    %191 = vector.broadcast %183 : vector<32x1xf32> to vector<32x32xf32>
    %192 = arith.subf %179, %191 : vector<32x32xf32>
    %cst_66 = arith.constant 9.99999974E-6 : f32
    %193 = vector.broadcast %cst_66 : f32 to vector<32x1xf32>
    %194 = arith.addf %190, %193 : vector<32x1xf32>
    %195 = math.rsqrt %194 : vector<32x1xf32>
    %196 = vector.broadcast %195 : vector<32x1xf32> to vector<32x32xf32>
    %197 = arith.mulf %192, %196 : vector<32x32xf32>
    %198 = vector.extract_strided_slice %112 {offsets = [8, 0], sizes = [1, 32], strides = [1, 1]} : vector<10x32xf32> to vector<1x32xf32>
    %199 = vector.broadcast %198 : vector<1x32xf32> to vector<32x32xf32>
    %200 = arith.mulf %197, %199 : vector<32x32xf32>
    %201 = vector.extract_strided_slice %112 {offsets = [9, 0], sizes = [1, 32], strides = [1, 1]} : vector<10x32xf32> to vector<1x32xf32>
    %202 = vector.broadcast %201 : vector<1x32xf32> to vector<32x32xf32>
    %203 = arith.addf %200, %202 : vector<32x32xf32>
    %204 = vector.shape_cast %203 : vector<32x32xf32> to vector<4x8x32xf32>
    %205 = vector.extract_strided_slice %204 {offsets = [0, 0, 0], sizes = [4, 5, 32], strides = [1, 1, 1]} : vector<4x8x32xf32> to vector<4x5x32xf32>
    %cst_67 = arith.constant dense<0.000000e+00> : vector<4x32xf32>
    %206 = vector.multi_reduction <add>, %205, %cst_67 [1] : vector<4x5x32xf32> to vector<4x32xf32>
    %cst_68 = arith.constant 2.000000e-01 : f32
    %207 = vector.broadcast %cst_68 : f32 to vector<4x32xf32>
    %208 = arith.mulf %206, %207 : vector<4x32xf32>
    %c0_69 = arith.constant 0 : index
    %c0_70 = arith.constant 0 : index
    %209 = vector.load %arg9[%c0_69, %c0_70] : memref<32x32xf32, #tpu.memory_space<vmem>>, vector<32x32xf32>
    %cst_71 = arith.constant dense<0.000000e+00> : vector<4x32xf32>
    %210 = tpu.matmul %208, %209, %cst_71 {dimension_numbers = #tpu.dot_dimension_numbers<[1], [0], [0], [1], [0, 0, 1, 1], [], []>} : vector<4x32xf32>, vector<32x32xf32>, vector<4x32xf32> -> vector<4x32xf32>
    %c0_72 = arith.constant 0 : index
    %c0_73 = arith.constant 0 : index
    %211 = vector.load %arg10[%c0_72, %c0_73] : memref<1x32xf32, #tpu.memory_space<vmem>>, vector<1x32xf32>
    %212 = vector.broadcast %211 : vector<1x32xf32> to vector<4x32xf32>
    %213 = arith.addf %210, %212 : vector<4x32xf32>
    %cst_74 = arith.constant 0.000000e+00 : f32
    %214 = vector.broadcast %cst_74 : f32 to vector<4x32xf32>
    %215 = arith.maximumf %213, %214 : vector<4x32xf32>
    %c0_75 = arith.constant 0 : index
    %c0_76 = arith.constant 0 : index
    %216 = vector.load %arg11[%c0_75, %c0_76] : memref<32x4xf32, #tpu.memory_space<vmem>>, vector<32x4xf32>
    %cst_77 = arith.constant dense<0.000000e+00> : vector<4x4xf32>
    %217 = tpu.matmul %215, %216, %cst_77 {dimension_numbers = #tpu.dot_dimension_numbers<[1], [0], [0], [1], [0, 0, 1, 1], [], []>} : vector<4x32xf32>, vector<32x4xf32>, vector<4x4xf32> -> vector<4x4xf32>
    %c0_78 = arith.constant 0 : index
    %c0_79 = arith.constant 0 : index
    %218 = vector.load %arg12[%c0_78, %c0_79] : memref<1x4xf32, #tpu.memory_space<vmem>>, vector<1x4xf32>
    %219 = vector.broadcast %218 : vector<1x4xf32> to vector<4x4xf32>
    %220 = arith.addf %217, %219 : vector<4x4xf32>
    %221 = vector.shape_cast %220 : vector<4x4xf32> to vector<4x1x4xf32>
    %c0_80 = arith.constant 0 : index
    %c0_81 = arith.constant 0 : index
    %c0_82 = arith.constant 0 : index
    %222 = vector.load %arg13[%c0_80, %c0_81, %c0_82] : memref<4x1x4xf32, #tpu.memory_space<vmem>>, vector<4x1x4xf32>
    tpu.vector_store %arg13[%c0_80, %c0_81, %c0_82], %221 {strides = array<i32>} : memref<4x1x4xf32, #tpu.memory_space<vmem>>, vector<4x1x4xf32>,
    return
  }
  func.func @transform_0(%arg0: i32) -> (i32, i32, i32) {
    %c0_i32 = arith.constant 0 : i32
    %c0_i32_0 = arith.constant 0 : i32
    %c0_i32_1 = arith.constant 0 : i32
    return %arg0, %c0_i32, %c0_i32_0 : i32, i32, i32
  }
  func.func @transform_1(%arg0: i32) -> (i32, i32, i32, i32) {
    %c0_i32 = arith.constant 0 : i32
    %c0_i32_0 = arith.constant 0 : i32
    %c0_i32_1 = arith.constant 0 : i32
    %c0_i32_2 = arith.constant 0 : i32
    return %arg0, %c0_i32, %c0_i32_0, %c0_i32_1 : i32, i32, i32, i32
  }
  func.func @transform_2(%arg0: i32) -> (i32, i32, i32) {
    %c0_i32 = arith.constant 0 : i32
    %c0_i32_0 = arith.constant 0 : i32
    %c0_i32_1 = arith.constant 0 : i32
    return %arg0, %c0_i32, %c0_i32_0 : i32, i32, i32
  }
  func.func @transform_3(%arg0: i32) -> (i32, i32, i32) {
    %c0_i32 = arith.constant 0 : i32
    %c0_i32_0 = arith.constant 0 : i32
    %c0_i32_1 = arith.constant 0 : i32
    %c0_i32_2 = arith.constant 0 : i32
    return %c0_i32, %c0_i32_0, %c0_i32_1 : i32, i32, i32
  }
  func.func @transform_4(%arg0: i32) -> (i32, i32, i32) {
    %c0_i32 = arith.constant 0 : i32
    %c0_i32_0 = arith.constant 0 : i32
    %c0_i32_1 = arith.constant 0 : i32
    %c0_i32_2 = arith.constant 0 : i32
    return %c0_i32, %c0_i32_0, %c0_i32_1 : i32, i32, i32
  }
  func.func @transform_5(%arg0: i32) -> (i32, i32, i32) {
    %c0_i32 = arith.constant 0 : i32
    %c0_i32_0 = arith.constant 0 : i32
    %c0_i32_1 = arith.constant 0 : i32
    %c0_i32_2 = arith.constant 0 : i32
    return %c0_i32, %c0_i32_0, %c0_i32_1 : i32, i32, i32
  }
  func.func @transform_6(%arg0: i32) -> (i32, i32, i32, i32) {
    %c0_i32 = arith.constant 0 : i32
    %c0_i32_0 = arith.constant 0 : i32
    %c0_i32_1 = arith.constant 0 : i32
    %c0_i32_2 = arith.constant 0 : i32
    %c0_i32_3 = arith.constant 0 : i32
    return %c0_i32, %c0_i32_0, %c0_i32_1, %c0_i32_2 : i32, i32, i32, i32
  }
  func.func @transform_7(%arg0: i32) -> (i32, i32, i32) {
    %c0_i32 = arith.constant 0 : i32
    %c0_i32_0 = arith.constant 0 : i32
    %c0_i32_1 = arith.constant 0 : i32
    %c0_i32_2 = arith.constant 0 : i32
    return %c0_i32, %c0_i32_0, %c0_i32_1 : i32, i32, i32
  }
  func.func @transform_8(%arg0: i32) -> (i32, i32) {
    %c0_i32 = arith.constant 0 : i32
    %c0_i32_0 = arith.constant 0 : i32
    %c0_i32_1 = arith.constant 0 : i32
    return %c0_i32, %c0_i32_0 : i32, i32
  }
  func.func @transform_9(%arg0: i32) -> (i32, i32) {
    %c0_i32 = arith.constant 0 : i32
    %c0_i32_0 = arith.constant 0 : i32
    %c0_i32_1 = arith.constant 0 : i32
    return %c0_i32, %c0_i32_0 : i32, i32
  }
  func.func @transform_10(%arg0: i32) -> (i32, i32) {
    %c0_i32 = arith.constant 0 : i32
    %c0_i32_0 = arith.constant 0 : i32
    %c0_i32_1 = arith.constant 0 : i32
    return %c0_i32, %c0_i32_0 : i32, i32
  }
  func.func @transform_11(%arg0: i32) -> (i32, i32) {
    %c0_i32 = arith.constant 0 : i32
    %c0_i32_0 = arith.constant 0 : i32
    %c0_i32_1 = arith.constant 0 : i32
    return %c0_i32, %c0_i32_0 : i32, i32
  }
  func.func @transform_12(%arg0: i32) -> (i32, i32, i32) {
    %c0_i32 = arith.constant 0 : i32
    %c0_i32_0 = arith.constant 0 : i32
    %c0_i32_1 = arith.constant 0 : i32
    return %arg0, %c0_i32, %c0_i32_0 : i32, i32, i32
  }
}

</mosaic_0001>

<llo_original>
// kernel: tpu_custom_call.1
$region0: #{tpu_custom_call.1}
  #allocation0 [shape = 'u32[]', space=smem, size = 0x4, offset = 0x4, fixed_abs, tag = 'smem constant byte address 0x4 - core index']
  #allocation1 [shape = 'u32[144,128]{1,0:T(1,128)}', space=vmem, size = 0x12000, scoped, tag = 'internal scratch']
  %s0 = inlined_call_operand.vmem [shape: f32[8,8,32], index: 0, kind: input, shape index: {}]
  %s1 = inlined_call_operand.hbm [shape: bf16[8,8,8,32], index: 1, kind: input, shape index: {}]
  %s2 = inlined_call_operand.hbm [shape: f32[8,1,32], index: 2, kind: input, shape index: {}]
  %s3 = inlined_call_operand.hbm [shape: f32[2,32,96], index: 3, kind: input, shape index: {}]
  %s4 = inlined_call_operand.hbm [shape: f32[2,32,96], index: 4, kind: input, shape index: {}]
  %s5 = inlined_call_operand.vmem [shape: bf16[2,32,32], index: 5, kind: input, shape index: {}]
  %s6 = inlined_call_operand.hbm [shape: f32[2,4,32,32], index: 6, kind: input, shape index: {}]
  %s7 = inlined_call_operand.vmem [shape: f32[2,10,32], index: 7, kind: input, shape index: {}]
  %s8 = inlined_call_operand.hbm [shape: f32[32,32], index: 8, kind: input, shape index: {}]
  %s9 = inlined_call_operand.vmem [shape: f32[1,32], index: 9, kind: input, shape index: {}]
  %s10 = inlined_call_operand.vmem [shape: f32[32,4], index: 10, kind: input, shape index: {}]
  %s11 = inlined_call_operand.vmem [shape: f32[1,4], index: 11, kind: input, shape index: {}]
  %s12 = inlined_call_operand.vmem [shape: f32[8,1,4], index: 12, kind: output, shape index: {}]
  %s13 = sld [smem:[#allocation0]]
  $region105: #{tpu_custom_call.1} parent=0
    _
  %s15 = ssub.s32 1, %s13
  %s16 = scalar_select 0, %s15, %s13
  $region1: #{tpu_custom_call.1} parent=0
    #allocation2 [shape = 'u8[131072]{0}', space=vmem, size = 0x20000, scoped, tag = 'input window, operand 1']
    #allocation3 [shape = 's32[2]{0}', space=sflag, size = 0x8, scoped, tag = 'scoped memory for tpu_custom_call.1']
    #allocation4 [shape = 'u8[4096]{0}', space=vmem, size = 0x1000, scoped, tag = 'input window, operand 2']
    #allocation5 [shape = 's32[2]{0}', space=sflag, size = 0x8, scoped, tag = 'scoped memory for tpu_custom_call.1']
    #allocation6 [shape = 'u8[32768]{0}', space=vmem, size = 0x8000, scoped, tag = 'input window, operand 3, single buffered']
    #allocation7 [shape = 'u8[32768]{0}', space=vmem, size = 0x8000, scoped, tag = 'input window, operand 4, single buffered']
    #allocation8 [shape = 's32[1]{0}', space=sflag, size = 0x4, scoped, tag = 'scoped memory for tpu_custom_call.1']
    #allocation9 [shape = 'u8[131072]{0}', space=vmem, size = 0x20000, scoped, tag = 'input window, operand 6, single buffered']
    #allocation10 [shape = 'u8[16384]{0}', space=vmem, size = 0x4000, scoped, tag = 'input window, operand 8, single buffered']
    #allocation11 [shape = 's32[1]{0}', space=sflag, size = 0x4, scoped, tag = 'scoped memory for tpu_custom_call.1']
    %17 = vsyncpa [#allocation3], 0
    %s18 = scalar_lea.sflag [#allocation3], 1
    %19 = vsyncpa %s18, 0
    %20 = vsyncpa [#allocation5], 0
    %s21 = scalar_lea.sflag [#allocation5], 1
    %22 = vsyncpa %s21, 0
    %23 = vsyncpa [#allocation8], 0
    %24 = vsyncpa [#allocation11], 0
    loop: start=0, step=1, limit=4
    $region2: #{tpu_custom_call.1} parent=1 // loop_pre_header
      _
    $region3: #{tpu_custom_call.1} parent=1 // loop_header
      %s26 = sphi 0, %s30
      %p27 = scmp.ge.s32.totalorder %s26, 4
      %s36 = sphi 0, %s38
      %s39 = sphi 0, %s36
      %s40 = sphi 0, %s39
      %s56 = sphi 0, %s40
      %s62 = sphi 0, %s64
      %s65 = sphi 0, %s62
      %s66 = sphi 0, %s65
      %s82 = sphi 0, %s66
      %s88 = sphi 0, %s90
      %s91 = sphi 0, %s88
      %s92 = sphi 0, %s91
      %s108 = sphi 0, %s92
      %s112 = sphi 0, %s112
      %s114 = sphi 0, %s112
      %s115 = sphi 0, %s114
      %s129 = sphi 0, %s115
      %s133 = sphi 0, %s133
      %s135 = sphi 0, %s133
      %s136 = sphi 0, %s135
      %s150 = sphi 0, %s136
      %s154 = sphi 0, %s154
      %s156 = sphi 0, %s154
      %s157 = sphi 0, %s156
      %s171 = sphi 0, %s157
      %s175 = sphi 0, %s175
      %s177 = sphi 0, %s175
      %s178 = sphi 0, %s177
      %s192 = sphi 0, %s178
      %s196 = sphi 0, %s196
      %s198 = sphi 0, %s196
      %s199 = sphi 0, %s198
      %s213 = sphi 0, %s199
      %s217 = sphi 0, %s217
      %s219 = sphi 0, %s217
      %s220 = sphi 0, %s219
      %s234 = sphi 0, %s220
      %s238 = sphi 0, %s238
      %s240 = sphi 0, %s238
      %s241 = sphi 0, %s240
      %s255 = sphi 0, %s241
      %s259 = sphi 0, %s259
      %s261 = sphi 0, %s259
      %s262 = sphi 0, %s261
      %s276 = sphi 0, %s262
      %s280 = sphi 0, %s280
      %s282 = sphi 0, %s280
      %s283 = sphi 0, %s282
      %s297 = sphi 0, %s283
      %s303 = sphi 0, %s305
      %s306 = sphi 0, %s303
      %s307 = sphi 0, %s306
      %s323 = sphi 0, %s307
    $region4: #{tpu_custom_call.1} parent=1 // loop_header_branch
      %29 = sbr.rel (%p27) target = $region8
    $region5: #{tpu_custom_call.1} parent=1 // loop_body
      %s31 = ssub.s32 %s26, 1
      %s32 = ssub.s32 %s26, 2
      %s33 = sadd.s32 %s26, 1
      %s34 = ssub.s32 %s26, %s33
      %p35 = scmp.eq.s32.totalorder %s34, 0
      %s37 = sadd.s32 %s36, 1
      %s38 = scalar_select %p35, %s36, %s37
      %p41 = pneg %p35
      %p42 = scmp.eq.s32.totalorder %s26, 1
      %p43 = por %p41, %p42
      %p44 = scmp.ne.s32.totalorder %s36, %s39
      %p45 = scmp.eq.s32.totalorder %s26, 0
      %p46 = por %p44, %p45
      %p47 = scmp.ne.s32.totalorder %s36, %s39
      %p48 = scmp.eq.s32.totalorder %s31, 1
      %p49 = por %p47, %p48
      %p50 = scmp.ne.s32.totalorder %s39, %s40
      %p51 = scmp.eq.s32.totalorder %s31, 0
      %p52 = por %p50, %p51
      %p53 = scmp.ne.s32.totalorder %s39, %s40
      %p54 = scmp.eq.s32.totalorder %s32, 1
      %p55 = por %p53, %p54
      %p57 = scmp.ne.s32.totalorder %s40, %s56
      %p58 = scmp.eq.s32.totalorder %s32, 0
      %p59 = por %p57, %p58
      %s60 = ssub.s32 %s26, %s33
      %p61 = scmp.eq.s32.totalorder %s60, 0
      %s63 = sadd.s32 %s62, 1
      %s64 = scalar_select %p61, %s62, %s63
      %p67 = pneg %p61
      %p68 = scmp.eq.s32.totalorder %s26, 1
      %p69 = por %p67, %p68
      %p70 = scmp.ne.s32.totalorder %s62, %s65
      %p71 = scmp.eq.s32.totalorder %s26, 0
      %p72 = por %p70, %p71
      %p73 = scmp.ne.s32.totalorder %s62, %s65
      %p74 = scmp.eq.s32.totalorder %s31, 1
      %p75 = por %p73, %p74
      %p76 = scmp.ne.s32.totalorder %s65, %s66
      %p77 = scmp.eq.s32.totalorder %s31, 0
      %p78 = por %p76, %p77
      %p79 = scmp.ne.s32.totalorder %s65, %s66
      %p80 = scmp.eq.s32.totalorder %s32, 1
      %p81 = por %p79, %p80
      %p83 = scmp.ne.s32.totalorder %s66, %s82
      %p84 = scmp.eq.s32.totalorder %s32, 0
      %p85 = por %p83, %p84
      %s86 = ssub.s32 %s26, %s33
      %p87 = scmp.eq.s32.totalorder %s86, 0
      %s89 = sadd.s32 %s88, 1
      %s90 = scalar_select %p87, %s88, %s89
      %p93 = pneg %p87
      %p94 = scmp.eq.s32.totalorder %s26, 1
      %p95 = por %p93, %p94
      %p96 = scmp.ne.s32.totalorder %s88, %s91
      %p97 = scmp.eq.s32.totalorder %s26, 0
      %p98 = por %p96, %p97
      %p99 = scmp.ne.s32.totalorder %s88, %s91
      %p100 = scmp.eq.s32.totalorder %s31, 1
      %p101 = por %p99, %p100
      %p102 = scmp.ne.s32.totalorder %s91, %s92
      %p103 = scmp.eq.s32.totalorder %s31, 0
      %p104 = por %p102, %p103
      %p105 = scmp.ne.s32.totalorder %s91, %s92
      %p106 = scmp.eq.s32.totalorder %s32, 1
      %p107 = por %p105, %p106
      %p109 = scmp.ne.s32.totalorder %s92, %s108
      %p110 = scmp.eq.s32.totalorder %s32, 0
      %p111 = por %p109, %p110
      %s113 = sadd.s32 %s112, 1
      %p116 = scmp.eq.s32.totalorder %s26, 1
      %p117 = scmp.ne.s32.totalorder %s112, %s114
      %p118 = scmp.eq.s32.totalorder %s26, 0
      %p119 = por %p117, %p118
      %p120 = scmp.ne.s32.totalorder %s112, %s114
      %p121 = scmp.eq.s32.totalorder %s31, 1
      %p122 = por %p120, %p121
      %p123 = scmp.ne.s32.totalorder %s114, %s115
      %p124 = scmp.eq.s32.totalorder %s31, 0
      %p125 = por %p123, %p124
      %p126 = scmp.ne.s32.totalorder %s114, %s115
      %p127 = scmp.eq.s32.totalorder %s32, 1
      %p128 = por %p126, %p127
      %p130 = scmp.ne.s32.totalorder %s115, %s129
      %p131 = scmp.eq.s32.totalorder %s32, 0
      %p132 = por %p130, %p131
      %s134 = sadd.s32 %s133, 1
      %p137 = scmp.eq.s32.totalorder %s26, 1
      %p138 = scmp.ne.s32.totalorder %s133, %s135
      %p139 = scmp.eq.s32.totalorder %s26, 0
      %p140 = por %p138, %p139
      %p141 = scmp.ne.s32.totalorder %s133, %s135
      %p142 = scmp.eq.s32.totalorder %s31, 1
      %p143 = por %p141, %p142
      %p144 = scmp.ne.s32.totalorder %s135, %s136
      %p145 = scmp.eq.s32.totalorder %s31, 0
      %p146 = por %p144, %p145
      %p147 = scmp.ne.s32.totalorder %s135, %s136
      %p148 = scmp.eq.s32.totalorder %s32, 1
      %p149 = por %p147, %p148
      %p151 = scmp.ne.s32.totalorder %s136, %s150
      %p152 = scmp.eq.s32.totalorder %s32, 0
      %p153 = por %p151, %p152
      %s155 = sadd.s32 %s154, 1
      %p158 = scmp.eq.s32.totalorder %s26, 1
      %p159 = scmp.ne.s32.totalorder %s154, %s156
      %p160 = scmp.eq.s32.totalorder %s26, 0
      %p161 = por %p159, %p160
      %p162 = scmp.ne.s32.totalorder %s154, %s156
      %p163 = scmp.eq.s32.totalorder %s31, 1
      %p164 = por %p162, %p163
      %p165 = scmp.ne.s32.totalorder %s156, %s157
      %p166 = scmp.eq.s32.totalorder %s31, 0
      %p167 = por %p165, %p166
      %p168 = scmp.ne.s32.totalorder %s156, %s157
      %p169 = scmp.eq.s32.totalorder %s32, 1
      %p170 = por %p168, %p169
      %p172 = scmp.ne.s32.totalorder %s157, %s171
      %p173 = scmp.eq.s32.totalorder %s32, 0
      %p174 = por %p172, %p173
      %s176 = sadd.s32 %s175, 1
      %p179 = scmp.eq.s32.totalorder %s26, 1
      %p180 = scmp.ne.s32.totalorder %s175, %s177
      %p181 = scmp.eq.s32.totalorder %s26, 0
      %p182 = por %p180, %p181
      %p183 = scmp.ne.s32.totalorder %s175, %s177
      %p184 = scmp.eq.s32.totalorder %s31, 1
      %p185 = por %p183, %p184
      %p186 = scmp.ne.s32.totalorder %s177, %s178
      %p187 = scmp.eq.s32.totalorder %s31, 0
      %p188 = por %p186, %p187
      %p189 = scmp.ne.s32.totalorder %s177, %s178
      %p190 = scmp.eq.s32.totalorder %s32, 1
      %p191 = por %p189, %p190
      %p193 = scmp.ne.s32.totalorder %s178, %s192
      %p194 = scmp.eq.s32.totalorder %s32, 0
      %p195 = por %p193, %p194
      %s197 = sadd.s32 %s196, 1
      %p200 = scmp.eq.s32.totalorder %s26, 1
      %p201 = scmp.ne.s32.totalorder %s196, %s198
      %p202 = scmp.eq.s32.totalorder %s26, 0
      %p203 = por %p201, %p202
      %p204 = scmp.ne.s32.totalorder %s196, %s198
      %p205 = scmp.eq.s32.totalorder %s31, 1
      %p206 = por %p204, %p205
      %p207 = scmp.ne.s32.totalorder %s198, %s199
      %p208 = scmp.eq.s32.totalorder %s31, 0
      %p209 = por %p207, %p208
      %p210 = scmp.ne.s32.totalorder %s198, %s199
      %p211 = scmp.eq.s32.totalorder %s32, 1
      %p212 = por %p210, %p211
      %p214 = scmp.ne.s32.totalorder %s199, %s213
      %p215 = scmp.eq.s32.totalorder %s32, 0
      %p216 = por %p214, %p215
      %s218 = sadd.s32 %s217, 1
      %p221 = scmp.eq.s32.totalorder %s26, 1
      %p222 = scmp.ne.s32.totalorder %s217, %s219
      %p223 = scmp.eq.s32.totalorder %s26, 0
      %p224 = por %p222, %p223
      %p225 = scmp.ne.s32.totalorder %s217, %s219
      %p226 = scmp.eq.s32.totalorder %s31, 1
      %p227 = por %p225, %p226
      %p228 = scmp.ne.s32.totalorder %s219, %s220
      %p229 = scmp.eq.s32.totalorder %s31, 0
      %p230 = por %p228, %p229
      %p231 = scmp.ne.s32.totalorder %s219, %s220
      %p232 = scmp.eq.s32.totalorder %s32, 1
      %p233 = por %p231, %p232
      %p235 = scmp.ne.s32.totalorder %s220, %s234
      %p236 = scmp.eq.s32.totalorder %s32, 0
      %p237 = por %p235, %p236
      %s239 = sadd.s32 %s238, 1
      %p242 = scmp.eq.s32.totalorder %s26, 1
      %p243 = scmp.ne.s32.totalorder %s238, %s240
      %p244 = scmp.eq.s32.totalorder %s26, 0
      %p245 = por %p243, %p244
      %p246 = scmp.ne.s32.totalorder %s238, %s240
      %p247 = scmp.eq.s32.totalorder %s31, 1
      %p248 = por %p246, %p247
      %p249 = scmp.ne.s32.totalorder %s240, %s241
      %p250 = scmp.eq.s32.totalorder %s31, 0
      %p251 = por %p249, %p250
      %p252 = scmp.ne.s32.totalorder %s240, %s241
      %p253 = scmp.eq.s32.totalorder %s32, 1
      %p254 = por %p252, %p253
      %p256 = scmp.ne.s32.totalorder %s241, %s255
      %p257 = scmp.eq.s32.totalorder %s32, 0
      %p258 = por %p256, %p257
      %s260 = sadd.s32 %s259, 1
      %p263 = scmp.eq.s32.totalorder %s26, 1
      %p264 = scmp.ne.s32.totalorder %s259, %s261
      %p265 = scmp.eq.s32.totalorder %s26, 0
      %p266 = por %p264, %p265
      %p267 = scmp.ne.s32.totalorder %s259, %s261
      %p268 = scmp.eq.s32.totalorder %s31, 1
      %p269 = por %p267, %p268
      %p270 = scmp.ne.s32.totalorder %s261, %s262
      %p271 = scmp.eq.s32.totalorder %s31, 0
      %p272 = por %p270, %p271
      %p273 = scmp.ne.s32.totalorder %s261, %s262
      %p274 = scmp.eq.s32.totalorder %s32, 1
      %p275 = por %p273, %p274
      %p277 = scmp.ne.s32.totalorder %s262, %s276
      %p278 = scmp.eq.s32.totalorder %s32, 0
      %p279 = por %p277, %p278
      %s281 = sadd.s32 %s280, 1
      %p284 = scmp.eq.s32.totalorder %s26, 1
      %p285 = scmp.ne.s32.totalorder %s280, %s282
      %p286 = scmp.eq.s32.totalorder %s26, 0
      %p287 = por %p285, %p286
      %p288 = scmp.ne.s32.totalorder %s280, %s282
      %p289 = scmp.eq.s32.totalorder %s31, 1
      %p290 = por %p288, %p289
      %p291 = scmp.ne.s32.totalorder %s282, %s283
      %p292 = scmp.eq.s32.totalorder %s31, 0
      %p293 = por %p291, %p292
      %p294 = scmp.ne.s32.totalorder %s282, %s283
      %p295 = scmp.eq.s32.totalorder %s32, 1
      %p296 = por %p294, %p295
      %p298 = scmp.ne.s32.totalorder %s283, %s297
      %p299 = scmp.eq.s32.totalorder %s32, 0
      %p300 = por %p298, %p299
      %s301 = ssub.s32 %s26, %s33
      %p302 = scmp.eq.s32.totalorder %s301, 0
      %s304 = sadd.s32 %s303, 1
      %s305 = scalar_select %p302, %s303, %s304
      %p308 = pneg %p302
      %p309 = scmp.eq.s32.totalorder %s26, 1
      %p310 = por %p308, %p309
      %p311 = scmp.ne.s32.totalorder %s303, %s306
      %p312 = scmp.eq.s32.totalorder %s26, 0
      %p313 = por %p311, %p312
      %p314 = scmp.ne.s32.totalorder %s303, %s306
      %p315 = scmp.eq.s32.totalorder %s31, 1
      %p316 = por %p314, %p315
      %p317 = scmp.ne.s32.totalorder %s306, %s307
      %p318 = scmp.eq.s32.totalorder %s31, 0
      %p319 = por %p317, %p318
      %p320 = scmp.ne.s32.totalorder %s306, %s307
      %p321 = scmp.eq.s32.totalorder %s32, 1
      %p322 = por %p320, %p321
      %p324 = scmp.ne.s32.totalorder %s307, %s323
      %p325 = scmp.eq.s32.totalorder %s32, 0
      %p326 = por %p324, %p325
      %p327 = scmp.le.s32.totalorder 1, %s26
      %p328 = scmp.lt.s32.totalorder %s26, 3
      %p329 = pnand %p327, %p328
      %p330 = pneg %p329
      // Predicated region
      $region9: #{tpu_custom_call.1} parent=5 // pred_check
        _
      $region10: #{tpu_custom_call.1} parent=5 // pred_check_branch
        %332 = sbr.rel (%p329) target = $region12
      $region11: #{tpu_custom_call.1} parent=5 // pred_region
        %s333 = ssub.s32 %s26, 1
        // Predicated region
        $region13: #{tpu_custom_call.1} parent=11 // pred_check
          %p334 = pneg %p125
        $region14: #{tpu_custom_call.1} parent=11 // pred_check_branch
          %336 = sbr.rel (%p334) target = $region16
        $region15: #{tpu_custom_call.1} parent=11 // pred_region
          %s338 = ssub.s32 1024, 1024
          %339 = vsyncadd [#allocation5], %s338
          %s340 = sshll.u32 [#allocation6], 4
          %s341 = int_to_ptr.vmem [resolvable:$true] %s340
          %346 = dma.hbm_to_vmem [thread:$0]  %s3, 1024, %s341, [#allocation5], 128, 128, 8
        $region16: #{tpu_custom_call.1} parent=11 // pred_fallthru
          _
        // Predicated region
        $region17: #{tpu_custom_call.1} parent=11 // pred_check
          %p347 = pneg %p146
        $region18: #{tpu_custom_call.1} parent=11 // pred_check_branch
          %349 = sbr.rel (%p347) target = $region20
        $region19: #{tpu_custom_call.1} parent=11 // pred_region
          %s351 = ssub.s32 1024, 1024
          %352 = vsyncadd [#allocation8], %s351
          %s353 = sshll.u32 [#allocation7], 4
          %s354 = int_to_ptr.vmem [resolvable:$true] %s353
          %359 = dma.hbm_to_vmem [thread:$0]  %s4, 1024, %s354, [#allocation8], 128, 128, 8
        $region20: #{tpu_custom_call.1} parent=11 // pred_fallthru
          _
        // Predicated region
        $region21: #{tpu_custom_call.1} parent=11 // pred_check
          %p360 = pneg %p167
        $region22: #{tpu_custom_call.1} parent=11 // pred_check_branch
          %362 = sbr.rel (%p360) target = $region24
        $region23: #{tpu_custom_call.1} parent=11 // pred_region
          _
        $region24: #{tpu_custom_call.1} parent=11 // pred_fallthru
          _
        // Predicated region
        $region25: #{tpu_custom_call.1} parent=11 // pred_check
          %p363 = pneg %p188
        $region26: #{tpu_custom_call.1} parent=11 // pred_check_branch
          %365 = sbr.rel (%p363) target = $region28
        $region27: #{tpu_custom_call.1} parent=11 // pred_region
          %s367 = ssub.s32 4096, 4096
          %368 = vsyncadd [#allocation8], %s367
          %s369 = sshll.u32 [#allocation9], 4
          %s370 = int_to_ptr.vmem [resolvable:$true] %s369
          %375 = dma.hbm_to_vmem [thread:$0]  %s6, 4096, %s370, [#allocation8], 128, 128, 8
        $region28: #{tpu_custom_call.1} parent=11 // pred_fallthru
          _
        // Predicated region
        $region29: #{tpu_custom_call.1} parent=11 // pred_check
          %p376 = pneg %p209
        $region30: #{tpu_custom_call.1} parent=11 // pred_check_branch
          %378 = sbr.rel (%p376) target = $region32
        $region31: #{tpu_custom_call.1} parent=11 // pred_region
          _
        $region32: #{tpu_custom_call.1} parent=11 // pred_fallthru
          _
        // Predicated region
        $region33: #{tpu_custom_call.1} parent=11 // pred_check
          %p379 = pneg %p230
        $region34: #{tpu_custom_call.1} parent=11 // pred_check_branch
          %381 = sbr.rel (%p379) target = $region36
        $region35: #{tpu_custom_call.1} parent=11 // pred_region
          %s383 = ssub.s32 512, 512
          %384 = vsyncadd [#allocation11], %s383
          %s385 = sshll.u32 [#allocation10], 4
          %s386 = int_to_ptr.vmem [resolvable:$true] %s385
          %391 = dma.hbm_to_vmem [thread:$0]  %s8, 512, %s386, [#allocation11], 128, 128, 8
        $region36: #{tpu_custom_call.1} parent=11 // pred_fallthru
          _
        // Predicated region
        $region37: #{tpu_custom_call.1} parent=11 // pred_check
          %p392 = pneg %p251
        $region38: #{tpu_custom_call.1} parent=11 // pred_check_branch
          %394 = sbr.rel (%p392) target = $region40
        $region39: #{tpu_custom_call.1} parent=11 // pred_region
          _
        $region40: #{tpu_custom_call.1} parent=11 // pred_fallthru
          _
        // Predicated region
        $region41: #{tpu_custom_call.1} parent=11 // pred_check
          %p395 = pneg %p272
        $region42: #{tpu_custom_call.1} parent=11 // pred_check_branch
          %397 = sbr.rel (%p395) target = $region44
        $region43: #{tpu_custom_call.1} parent=11 // pred_region
          _
        $region44: #{tpu_custom_call.1} parent=11 // pred_fallthru
          _
        // Predicated region
        $region45: #{tpu_custom_call.1} parent=11 // pred_check
          %p398 = pneg %p293
        $region46: #{tpu_custom_call.1} parent=11 // pred_check_branch
          %400 = sbr.rel (%p398) target = $region48
        $region47: #{tpu_custom_call.1} parent=11 // pred_region
          _
        $region48: #{tpu_custom_call.1} parent=11 // pred_fallthru
          _
      $region12: #{tpu_custom_call.1} parent=5 // pred_fallthru
        _
      %p401 = scmp.lt.s32.totalorder %s26, 2
      // Predicated region
      $region49: #{tpu_custom_call.1} parent=5 // pred_check
        %p402 = pneg %p401
      $region50: #{tpu_custom_call.1} parent=5 // pred_check_branch
        %404 = sbr.rel (%p402) target = $region52
      $region51: #{tpu_custom_call.1} parent=5 // pred_region
        // Predicated region
        $region53: #{tpu_custom_call.1} parent=51 // pred_check
          %p405 = pneg %p46
        $region54: #{tpu_custom_call.1} parent=51 // pred_check_branch
          %407 = sbr.rel (%p405) target = $region56
        $region55: #{tpu_custom_call.1} parent=51 // pred_region
          %s408 = smul.u32 4, %s26
          %p409 = scmp.lt.s32.totalorder %s408, 7
          %s410 = scalar_select %p409, %s408, 7
          %s411 = smul.addr %s410, 8
          %s412 = scalar_lea.vmem %s0, %s411
          %s413 = smul.u32 4, %s26
        $region56: #{tpu_custom_call.1} parent=51 // pred_fallthru
          _
        // Predicated region
        $region57: #{tpu_custom_call.1} parent=51 // pred_check
          %p414 = pneg %p72
        $region58: #{tpu_custom_call.1} parent=51 // pred_check_branch
          %416 = sbr.rel (%p414) target = $region60
        $region59: #{tpu_custom_call.1} parent=51 // pred_region
          %s417 = sand.u32 %s62, 1
          %s418 = scalar_lea.sflag [#allocation3], %s417
          %s419 = sand.u32 %s62, 1
          %s420 = smul.addr %s419, 128
          %s421 = scalar_lea.vmem [#allocation2], %s420
          %s422 = smul.u32 4, %s26
          %s424 = ssub.s32 2048, 2048
          %425 = vsyncadd %s418, %s424
          %s426 = smul.addr %s422, 8
          %s427 = smul.addr %s426, 64
          %s428 = scalar_lea.hbm %s1, %s427
          %s429 = sshll.u32 %s421, 4
          %s430 = int_to_ptr.vmem [resolvable:$true] %s429
          %435 = dma.hbm_to_vmem [thread:$0]  %s428, 2048, %s430, %s418, 64, 64, 4
        $region60: #{tpu_custom_call.1} parent=51 // pred_fallthru
          _
        // Predicated region
        $region61: #{tpu_custom_call.1} parent=51 // pred_check
          %p436 = pneg %p98
        $region62: #{tpu_custom_call.1} parent=51 // pred_check_branch
          %438 = sbr.rel (%p436) target = $region64
        $region63: #{tpu_custom_call.1} parent=51 // pred_region
          %s439 = sand.u32 %s26, 1
          %s440 = scalar_lea.sflag [#allocation5], %s439
          %s441 = sand.u32 %s88, 1
          %s442 = smul.addr %s441, 4
          %s443 = scalar_lea.vmem [#allocation4], %s442
          %s444 = smul.u32 4, %s26
          %s446 = ssub.s32 64, 64
          %447 = vsyncadd %s440, %s446
          %s448 = smul.addr %s444, 16
          %s449 = scalar_lea.hbm %s2, %s448
          %s450 = sshll.u32 %s443, 4
          %s451 = int_to_ptr.vmem [resolvable:$true] %s450
          %456 = dma.hbm_to_vmem [thread:$0]  %s449, 64, %s451, %s440, 16, 16, 1
        $region64: #{tpu_custom_call.1} parent=51 // pred_fallthru
          _
      $region52: #{tpu_custom_call.1} parent=5 // pred_fallthru
        _
      %p457 = scmp.le.s32.totalorder 1, %s26
      %p458 = scmp.lt.s32.totalorder %s26, 3
      %p459 = pnand %p457, %p458
      %p460 = pneg %p459
      // Predicated region
      $region65: #{tpu_custom_call.1} parent=5 // pred_check
        _
      $region66: #{tpu_custom_call.1} parent=5 // pred_check_branch
        %462 = sbr.rel (%p459) target = $region68
      $region67: #{tpu_custom_call.1} parent=5 // pred_region
        %s463 = ssub.s32 %s26, 1
        %s464 = sand.u32 %s65, 1
        %s465 = scalar_lea.sflag [#allocation3], %s464
        %s466 = sand.u32 %s65, 1
        %s467 = smul.addr %s466, 128
        %s468 = scalar_lea.vmem [#allocation2], %s467
        // Predicated region
        $region69: #{tpu_custom_call.1} parent=67 // pred_check
          %p469 = pneg %p78
        $region70: #{tpu_custom_call.1} parent=67 // pred_check_branch
          %471 = sbr.rel (%p469) target = $region72
        $region71: #{tpu_custom_call.1} parent=67 // pred_region
          %472 = dma.done %s465, 2048
        $region72: #{tpu_custom_call.1} parent=67 // pred_fallthru
          _
        %s473 = sand.u32 %s31, 1
        %s474 = scalar_lea.sflag [#allocation5], %s473
        %s475 = sand.u32 %s91, 1
        %s476 = smul.addr %s475, 4
        %s477 = scalar_lea.vmem [#allocation4], %s476
        // Predicated region
        $region73: #{tpu_custom_call.1} parent=67 // pred_check
          %p478 = pneg %p104
        $region74: #{tpu_custom_call.1} parent=67 // pred_check_branch
          %480 = sbr.rel (%p478) target = $region76
        $region75: #{tpu_custom_call.1} parent=67 // pred_region
          %481 = dma.done %s474, 64
        $region76: #{tpu_custom_call.1} parent=67 // pred_fallthru
          _
        // Predicated region
        $region77: #{tpu_custom_call.1} parent=67 // pred_check
          %p482 = pneg %p125
        $region78: #{tpu_custom_call.1} parent=67 // pred_check_branch
          %484 = sbr.rel (%p482) target = $region80
        $region79: #{tpu_custom_call.1} parent=67 // pred_region
          %485 = dma.done [#allocation5], 1024
        $region80: #{tpu_custom_call.1} parent=67 // pred_fallthru
          _
        // Predicated region
        $region81: #{tpu_custom_call.1} parent=67 // pred_check
          %p486 = pneg %p146
        $region82: #{tpu_custom_call.1} parent=67 // pred_check_branch
          %488 = sbr.rel (%p486) target = $region84
        $region83: #{tpu_custom_call.1} parent=67 // pred_region
          %489 = dma.done [#allocation8], 1024
        $region84: #{tpu_custom_call.1} parent=67 // pred_fallthru
          _
        // Predicated region
        $region85: #{tpu_custom_call.1} parent=67 // pred_check
          %p490 = pneg %p188
        $region86: #{tpu_custom_call.1} parent=67 // pred_check_branch
          %492 = sbr.rel (%p490) target = $region88
        $region87: #{tpu_custom_call.1} parent=67 // pred_region
          %493 = dma.done [#allocation8], 4096
        $region88: #{tpu_custom_call.1} parent=67 // pred_fallthru
          _
        // Predicated region
        $region89: #{tpu_custom_call.1} parent=67 // pred_check
          %p494 = pneg %p230
        $region90: #{tpu_custom_call.1} parent=67 // pred_check_branch
          %496 = sbr.rel (%p494) target = $region92
        $region91: #{tpu_custom_call.1} parent=67 // pred_region
          %497 = dma.done [#allocation11], 512
        $region92: #{tpu_custom_call.1} parent=67 // pred_fallthru
          _
        %s498 = smul.u32 4, %s31
        %p499 = scmp.lt.s32.totalorder %s498, 7
        %s500 = scalar_select %p499, %s498, 7
        %s501 = smul.addr %s500, 8
        %s502 = scalar_lea.vmem %s0, %s501
        %p503 = pneg %p52
        %p504 = pneg %p49
        %s505 = sand.u32 %s65, 1
        %s506 = scalar_lea.sflag [#allocation3], %s505
        %s507 = sand.u32 %s65, 1
        %s508 = smul.addr %s507, 128
        %s509 = scalar_lea.vmem [#allocation2], %s508
        %p510 = pneg %p78
        %p511 = pneg %p75
        %s512 = sand.u32 %s31, 1
        %s513 = scalar_lea.sflag [#allocation5], %s512
        %s514 = sand.u32 %s91, 1
        %s515 = smul.addr %s514, 4
        %s516 = scalar_lea.vmem [#allocation4], %s515
        %p517 = pneg %p104
        %p518 = pneg %p101
        %p519 = pneg %p125
        %p520 = pneg %p122
        %p521 = pneg %p146
        %p522 = pneg %p143
        %p523 = pneg %p167
        %p524 = pneg %p164
        %p525 = pneg %p188
        %p526 = pneg %p185
        %p527 = pneg %p209
        %p528 = pneg %p206
        %p529 = pneg %p230
        %p530 = pneg %p227
        %p531 = pneg %p251
        %p532 = pneg %p248
        %p533 = pneg %p272
        %p534 = pneg %p269
        %p535 = pneg %p293
        %p536 = pneg %p290
        %p537 = pneg %p319
        %p538 = pneg %p316
        %s539 = smul.u32 4, %s31
        %p540 = scmp.lt.s32.totalorder %s539, 7
        %s541 = scalar_select %p540, %s539, 7
        %s542 = scalar_lea.vmem %s12, %s541
        %s543 = smul.u32 4, %s31
        %p544 = scmp.lt.s32.totalorder %s543, 7
        %s545 = scalar_select %p544, %s543, 7
        %s546 = smul.addr %s545, 8
        %s547 = scalar_lea.vmem %s0, %s546
        %s548 = smul.u32 4, %s31
        %s549 = smul.u32 4, %s31
        %s550 = smul.u32 4, %s31
        %s551 = smul.u32 4, %s31
        %p552 = scmp.lt.s32.totalorder %s551, 7
        %s553 = scalar_select %p552, %s551, 7
        %s554 = scalar_lea.vmem %s12, %s553
        %s555 = smul.u32 4, %s31
        %v557 = vld [vmem:[%s547] sm:$0xff]
        %v558 = vld [vmem:[%s547 + $0x8] sm:$0xff]
        %v559 = vld [vmem:[%s547 + $0x10] sm:$0xff]
        %v560 = vld [vmem:[%s547 + $0x18] sm:$0xff]
        %v561 = vld [vmem:[%s468] sm:$0xf]
        %v562 = vld [vmem:[%s468 + $0x4] sm:$0xf]
        %v563 = vld [vmem:[%s468 + $0x8] sm:$0xf]
        %v564 = vld [vmem:[%s468 + $0xc] sm:$0xf]
        %v565 = vld [vmem:[%s468 + $0x10] sm:$0xf]
        %v566 = vld [vmem:[%s468 + $0x14] sm:$0xf]
        %v567 = vld [vmem:[%s468 + $0x18] sm:$0xf]
        %v568 = vld [vmem:[%s468 + $0x1c] sm:$0xf]
        %v569 = vld [vmem:[%s468 + $0x20] sm:$0xf]
        %v570 = vld [vmem:[%s468 + $0x24] sm:$0xf]
        %v571 = vld [vmem:[%s468 + $0x28] sm:$0xf]
        %v572 = vld [vmem:[%s468 + $0x2c] sm:$0xf]
        %v573 = vld [vmem:[%s468 + $0x30] sm:$0xf]
        %v574 = vld [vmem:[%s468 + $0x34] sm:$0xf]
        %v575 = vld [vmem:[%s468 + $0x38] sm:$0xf]
        %v576 = vld [vmem:[%s468 + $0x3c] sm:$0xf]
        %v577 = vld [vmem:[%s468 + $0x40] sm:$0xf]
        %v578 = vld [vmem:[%s468 + $0x44] sm:$0xf]
        %v579 = vld [vmem:[%s468 + $0x48] sm:$0xf]
        %v580 = vld [vmem:[%s468 + $0x4c] sm:$0xf]
        %v581 = vld [vmem:[%s468 + $0x50] sm:$0xf]
        %v582 = vld [vmem:[%s468 + $0x54] sm:$0xf]
        %v583 = vld [vmem:[%s468 + $0x58] sm:$0xf]
        %v584 = vld [vmem:[%s468 + $0x5c] sm:$0xf]
        %v585 = vld [vmem:[%s468 + $0x60] sm:$0xf]
        %v586 = vld [vmem:[%s468 + $0x64] sm:$0xf]
        %v587 = vld [vmem:[%s468 + $0x68] sm:$0xf]
        %v588 = vld [vmem:[%s468 + $0x6c] sm:$0xf]
        %v589 = vld [vmem:[%s468 + $0x70] sm:$0xf]
        %v590 = vld [vmem:[%s468 + $0x74] sm:$0xf]
        %v591 = vld [vmem:[%s468 + $0x78] sm:$0xf]
        %v592 = vld [vmem:[%s468 + $0x7c] sm:$0xf]
        %v593 = vld [vmem:[%s477] sm:$0x1]
        %v594 = vld [vmem:[%s477 + $0x1] sm:$0x1]
        %v595 = vld [vmem:[%s477 + $0x2] sm:$0x1]
        %v596 = vld [vmem:[%s477 + $0x3] sm:$0x1]
        %v597 = vld [vmem:[#allocation6] sm:$0xff]
        %v598 = vld [vmem:[#allocation6 + $0x8] sm:$0xff]
        %v599 = vld [vmem:[#allocation6 + $0x10] sm:$0xff]
        %v600 = vld [vmem:[#allocation6 + $0x18] sm:$0xff]
        %v601 = vld [vmem:[%s5] sm:$0xf]
        %v602 = vld [vmem:[%s5 + $0x4] sm:$0xf]
        %v603 = vld [vmem:[%s5 + $0x8] sm:$0xf]
        %v604 = vld [vmem:[%s5 + $0xc] sm:$0xf]
        %v605 = vld [vmem:[#allocation9] sm:$0xff]
        %v606 = vld [vmem:[#allocation9 + $0x8] sm:$0xff]
        %v607 = vld [vmem:[#allocation9 + $0x10] sm:$0xff]
        %v608 = vld [vmem:[#allocation9 + $0x18] sm:$0xff]
        %v609 = vld [vmem:[#allocation9 + $0x20] sm:$0xff]
        %v610 = vld [vmem:[#allocation9 + $0x28] sm:$0xff]
        %v611 = vld [vmem:[#allocation9 + $0x30] sm:$0xff]
        %v612 = vld [vmem:[#allocation9 + $0x38] sm:$0xff]
        %v613 = vld [vmem:[#allocation9 + $0x40] sm:$0xff]
        %v614 = vld [vmem:[#allocation9 + $0x48] sm:$0xff]
        %v615 = vld [vmem:[#allocation9 + $0x50] sm:$0xff]
        %v616 = vld [vmem:[#allocation9 + $0x58] sm:$0xff]
        %v617 = vld [vmem:[#allocation9 + $0x60] sm:$0xff]
        %v618 = vld [vmem:[#allocation9 + $0x68] sm:$0xff]
        %v619 = vld [vmem:[#allocation9 + $0x70] sm:$0xff]
        %v620 = vld [vmem:[#allocation9 + $0x78] sm:$0xff]
        %v621 = vld [vmem:[%s7] sm:$0xff]
        %v622 = vld [vmem:[%s7 + $0x8] sm:$0x3]
        %vm623 = vcmask 261120
        %v625 = vsel %vm623, %v557, 0
        %v628 = vsel %vm623, %v558, 0
        %v631 = vsel %vm623, %v559, 0
        %v634 = vsel %vm623, %v560, 0
        %636 = vmatprep.subr.mxu0 0.0
        %637 = vmatpush1.msra.mxu0 0.0
        %638 = vmatprep.subr.mxu0 0.0
        %639 = vmatpush1.msra.mxu0 0.0
        %640 = vmatprep.subr.mxu0 0.0
        %641 = vmatpush1.msra.mxu0 0.0
        %642 = vmatprep.subr.mxu0 0.0
        %643 = vmatpush1.msra.mxu0 0.0
        %644 = vmatprep.subr.mxu0 0.0
        %645 = vmatpush1.msra.mxu0 0.0
        %646 = vmatprep.subr.mxu0 0.0
        %647 = vmatpush1.msra.mxu0 0.0
        %648 = vmatprep.subr.mxu0 0.0
        %649 = vmatpush1.msra.mxu0 0.0
        %650 = vmatprep.subr.mxu0 0.0
        %651 = vmatpush1.msra.mxu0 0.0
        %652 = vmatprep.subr.mxu0 0.0
        %653 = vmatpush1.msra.mxu0 0.0
        %654 = vmatprep.subr.mxu0 0.0
        %655 = vmatpush1.msra.mxu0 0.0
        %656 = vmatprep.subr.mxu0 0.0
        %657 = vmatpush1.msra.mxu0 0.0
        %658 = vmatprep.subr.mxu0 0.0
        %659 = vmatpush1.msra.mxu0 0.0
        %660 = vmatprep.subr.mxu0 0.0
        %661 = vmatpush1.msra.mxu0 %v600
        %662 = vmatprep.subr.mxu0 0.0
        %663 = vmatpush1.msra.mxu0 %v599
        %664 = vmatprep.subr.mxu0 0.0
        %665 = vmatpush1.msra.mxu0 %v598
        %666 = vmatprep.subr.mxu0 0.0
        %667 = vmatpush1.msra.mxu0 %v597
        %668 = vmatprep.subr.mxu0 0.0
        %669 = vmatpush2.msra.mxu0 0.0
        %670 = vmatprep.subr.mxu0 0.0
        %671 = vmatpush2.msra.mxu0 0.0
        %672 = vmatprep.subr.mxu0 0.0
        %673 = vmatpush2.msra.mxu0 0.0
        %674 = vmatprep.subr.mxu0 0.0
        %675 = vmatpush2.msra.mxu0 0.0
        %676 = vmatprep.subr.mxu0 0.0
        %677 = vmatpush2.msra.mxu0 0.0
        %678 = vmatprep.subr.mxu0 0.0
        %679 = vmatpush2.msra.mxu0 0.0
        %680 = vmatprep.subr.mxu0 0.0
        %681 = vmatpush2.msra.mxu0 0.0
        %682 = vmatprep.subr.mxu0 0.0
        %683 = vmatpush2.msra.mxu0 0.0
        %684 = vmatprep.subr.mxu0 0.0
        %685 = vmatpush2.msra.mxu0 0.0
        %686 = vmatprep.subr.mxu0 0.0
        %687 = vmatpush2.msra.mxu0 0.0
        %688 = vmatprep.subr.mxu0 0.0
        %689 = vmatpush2.msra.mxu0 0.0
        %690 = vmatprep.subr.mxu0 0.0
        %691 = vmatpush2.msra.mxu0 0.0
        %692 = vmatprep.subr.mxu0 0.0
        %693 = vmatpush2.msra.mxu0 0.0
        %694 = vmatprep.subr.mxu0 0.0
        %695 = vmatpush2.msra.mxu0 0.0
        %696 = vmatprep.subr.mxu0 0.0
        %697 = vmatpush2.msra.mxu0 0.0
        %698 = vmatprep.subr.mxu0 0.0
        %699 = vmatpush2.msra.mxu0 0.0
        %700 = vmatprep.mubr.f32.mxu0 0.0
        %701 = vmatmul.mubr.f32.gmra.mxu0 %v625
        %v702 = vpop.f32.mrf.mxu0
        %v703 = vadd.f32 0.0, %v702
        %v704 = vpop.f32.mrf.mxu0
        %705 = vmatprep.mubr.f32.mxu0 0.0
        %706 = vmatmul.mubr.f32.gmra.mxu0 %v628
        %v707 = vpop.f32.mrf.mxu0
        %v708 = vadd.f32 0.0, %v707
        %v709 = vpop.f32.mrf.mxu0
        %710 = vmatprep.mubr.f32.mxu0 0.0
        %711 = vmatmul.mubr.f32.gmra.mxu0 %v631
        %v712 = vpop.f32.mrf.mxu0
        %v713 = vadd.f32 0.0, %v712
        %v714 = vpop.f32.mrf.mxu0
        %715 = vmatprep.mubr.f32.mxu0 0.0
        %716 = vmatmul.mubr.f32.gmra.mxu0 %v634
        %v717 = vpop.f32.mrf.mxu0
        %v718 = vadd.f32 0.0, %v717
        %v719 = vpop.f32.mrf.mxu0
        %720 = vdwg.mxu0
        %v721 = vlaneseq
        %v722 = vshrl.u32 %v721, 7
        %v723 = vsub.s32 0, %v722
        %v724 = vrot.slane %v621, %v723
        %v725 = vadd.f32 %v703, %v724
        %v726 = vadd.f32 %v708, %v724
        %v727 = vadd.f32 %v713, %v724
        %v728 = vadd.f32 %v718, %v724
        %v729 = vlaneseq
        %v730 = vshrl.u32 %v729, 7
        %v731 = vsub.s32 1, %v730
        %v732 = vrot.slane %v621, %v731
        %734 = vrot.lane.b32.xlu0 %v732, 32
        %v735 = vpop.permute.xlu0 %734
        %v737 = vadd.f32 %v703, %v735
        %v738 = vadd.f32 %v708, %v735
        %v739 = vadd.f32 %v713, %v735
        %v740 = vadd.f32 %v718, %v735
        %v741 = vlaneseq
        %v742 = vshrl.u32 %v741, 7
        %v743 = vsub.s32 2, %v742
        %v744 = vrot.slane %v621, %v743
        %746 = vrot.lane.b32.xlu0 %v744, 64
        %v747 = vpop.permute.xlu0 %746
        %v749 = vadd.f32 %v703, %v747
        %v750 = vadd.f32 %v708, %v747
        %v751 = vadd.f32 %v713, %v747
        %v752 = vadd.f32 %v718, %v747
        %v753 = vlaneseq
        %v754 = vshrl.u32 %v753, 7
        %v755 = vsub.s32 3, %v754
        %v756 = vrot.slane %v621, %v755
        %v789 = vunpack.c.l.b16 %v561
        %v790 = vunpack.c.l.b16 %v562
        %v791 = vunpack.c.l.b16 %v563
        %v792 = vunpack.c.l.b16 %v564
        %v793 = vunpack.c.l.b16 %v565
        %v794 = vunpack.c.l.b16 %v566
        %v795 = vunpack.c.l.b16 %v567
        %v796 = vunpack.c.l.b16 %v568
        %v797 = vunpack.c.l.b16 %v569
        %v798 = vunpack.c.l.b16 %v570
        %v799 = vunpack.c.l.b16 %v571
        %v800 = vunpack.c.l.b16 %v572
        %v801 = vunpack.c.l.b16 %v573
        %v802 = vunpack.c.l.b16 %v574
        %v803 = vunpack.c.l.b16 %v575
        %v804 = vunpack.c.l.b16 %v576
        %v805 = vunpack.c.l.b16 %v577
        %v806 = vunpack.c.l.b16 %v578
        %v807 = vunpack.c.l.b16 %v579
        %v808 = vunpack.c.l.b16 %v580
        %v809 = vunpack.c.l.b16 %v581
        %v810 = vunpack.c.l.b16 %v582
        %v811 = vunpack.c.l.b16 %v583
        %v812 = vunpack.c.l.b16 %v584
        %v813 = vunpack.c.l.b16 %v585
        %v814 = vunpack.c.l.b16 %v586
        %v815 = vunpack.c.l.b16 %v587
        %v816 = vunpack.c.l.b16 %v588
        %v817 = vunpack.c.l.b16 %v589
        %v818 = vunpack.c.l.b16 %v590
        %v819 = vunpack.c.l.b16 %v591
        %v820 = vunpack.c.l.b16 %v592
        %v821 = vpack.c.b16 %v790, %v789
        %v822 = vpack.c.b16 %v792, %v791
        %v823 = vpack.c.b16 %v794, %v793
        %v824 = vpack.c.b16 %v796, %v795
        %v825 = vpack.c.b16 %v798, %v797
        %v826 = vpack.c.b16 %v800, %v799
        %v827 = vpack.c.b16 %v802, %v801
        %v828 = vpack.c.b16 %v804, %v803
        %v829 = vpack.c.b16 %v806, %v805
        %v830 = vpack.c.b16 %v808, %v807
        %v831 = vpack.c.b16 %v810, %v809
        %v832 = vpack.c.b16 %v812, %v811
        %v833 = vpack.c.b16 %v814, %v813
        %v834 = vpack.c.b16 %v816, %v815
        %v835 = vpack.c.b16 %v818, %v817
        %v836 = vpack.c.b16 %v820, %v819
        %v841 = vunpack.c.l.b16 %v601
        %v842 = vunpack.c.l.b16 %v602
        %v843 = vunpack.c.l.b16 %v603
        %v844 = vunpack.c.l.b16 %v604
        %v845 = vpack.c.b16 %v842, %v841
        %v846 = vpack.c.b16 %v844, %v843
        %v850 = vsel %vm623, %v821, 0
        %v853 = vsel %vm623, %v822, 0
        %v856 = vsel %vm623, %v823, 0
        %v859 = vsel %vm623, %v824, 0
        %v862 = vsel %vm623, %v825, 0
        %v865 = vsel %vm623, %v826, 0
        %v868 = vsel %vm623, %v827, 0
        %v871 = vsel %vm623, %v828, 0
        %v874 = vsel %vm623, %v829, 0
        %v877 = vsel %vm623, %v830, 0
        %v880 = vsel %vm623, %v831, 0
        %v883 = vsel %vm623, %v832, 0
        %v886 = vsel %vm623, %v833, 0
        %v889 = vsel %vm623, %v834, 0
        %v892 = vsel %vm623, %v835, 0
        %v895 = vsel %vm623, %v836, 0
        %897 = vmatprep.subr.bf16.mxu0 0
        %898 = vmatpush1.bf16.msra.mxu0 0
        %899 = vmatprep.subr.bf16.mxu0 0
        %900 = vmatpush1.bf16.msra.mxu0 0
        %901 = vmatprep.subr.bf16.mxu0 0
        %902 = vmatpush1.bf16.msra.mxu0 0
        %903 = vmatprep.subr.bf16.mxu0 0
        %904 = vmatpush1.bf16.msra.mxu0 0
        %905 = vmatprep.subr.bf16.mxu0 0
        %906 = vmatpush1.bf16.msra.mxu0 0
        %907 = vmatprep.subr.bf16.mxu0 0
        %908 = vmatpush1.bf16.msra.mxu0 0
        %909 = vmatprep.subr.bf16.mxu0 0
        %910 = vmatpush1.bf16.msra.mxu0 %v846
        %911 = vmatprep.subr.bf16.mxu0 0
        %912 = vmatpush1.bf16.msra.mxu0 %v845
        %913 = vmatprep.subr.bf16.mxu0 0
        %914 = vmatpush2.bf16.msra.mxu0 0
        %915 = vmatprep.subr.bf16.mxu0 0
        %916 = vmatpush2.bf16.msra.mxu0 0
        %917 = vmatprep.subr.bf16.mxu0 0
        %918 = vmatpush2.bf16.msra.mxu0 0
        %919 = vmatprep.subr.bf16.mxu0 0
        %920 = vmatpush2.bf16.msra.mxu0 0
        %921 = vmatprep.subr.bf16.mxu0 0
        %922 = vmatpush2.bf16.msra.mxu0 0
        %923 = vmatprep.subr.bf16.mxu0 0
        %924 = vmatpush2.bf16.msra.mxu0 0
        %925 = vmatprep.subr.bf16.mxu0 0
        %926 = vmatpush2.bf16.msra.mxu0 0
        %927 = vmatprep.subr.bf16.mxu0 0
        %928 = vmatpush2.bf16.msra.mxu0 0
        %929 = vmatprep.mubr.bf16.mxu0 0
        %930 = vmatmul.mubr.bf16.gmra.mxu0 %v850
        %v931 = vpop.f32.mrf.mxu0
        %v932 = vadd.f32 %v756, %v931
        %v933 = vpop.f32.mrf.mxu0
        %v934 = vpop.f32.mrf.mxu0
        %v935 = vadd.f32 %v756, %v934
        %v936 = vpop.f32.mrf.mxu0
        %937 = vmatprep.mubr.bf16.mxu0 0
        %938 = vmatmul.mubr.bf16.gmra.mxu0 %v853
        %v939 = vpop.f32.mrf.mxu0
        %v940 = vadd.f32 %v756, %v939
        %v941 = vpop.f32.mrf.mxu0
        %v942 = vpop.f32.mrf.mxu0
        %v943 = vadd.f32 %v756, %v942
        %v944 = vpop.f32.mrf.mxu0
        %945 = vmatprep.mubr.bf16.mxu0 0
        %946 = vmatmul.mubr.bf16.gmra.mxu0 %v856
        %v947 = vpop.f32.mrf.mxu0
        %v948 = vadd.f32 %v756, %v947
        %v949 = vpop.f32.mrf.mxu0
        %v950 = vpop.f32.mrf.mxu0
        %v951 = vadd.f32 %v756, %v950
        %v952 = vpop.f32.mrf.mxu0
        %953 = vmatprep.mubr.bf16.mxu0 0
        %954 = vmatmul.mubr.bf16.gmra.mxu0 %v859
        %v955 = vpop.f32.mrf.mxu0
        %v956 = vadd.f32 %v756, %v955
        %v957 = vpop.f32.mrf.mxu0
        %v958 = vpop.f32.mrf.mxu0
        %v959 = vadd.f32 %v756, %v958
        %v960 = vpop.f32.mrf.mxu0
        %961 = vmatprep.mubr.bf16.mxu0 0
        %962 = vmatmul.mubr.bf16.gmra.mxu0 %v862
        %v963 = vpop.f32.mrf.mxu0
        %v964 = vadd.f32 %v756, %v963
        %v965 = vpop.f32.mrf.mxu0
        %v966 = vpop.f32.mrf.mxu0
        %v967 = vadd.f32 %v756, %v966
        %v968 = vpop.f32.mrf.mxu0
        %969 = vmatprep.mubr.bf16.mxu0 0
        %970 = vmatmul.mubr.bf16.gmra.mxu0 %v865
        %v971 = vpop.f32.mrf.mxu0
        %v972 = vadd.f32 %v756, %v971
        %v973 = vpop.f32.mrf.mxu0
        %v974 = vpop.f32.mrf.mxu0
        %v975 = vadd.f32 %v756, %v974
        %v976 = vpop.f32.mrf.mxu0
        %977 = vmatprep.mubr.bf16.mxu0 0
        %978 = vmatmul.mubr.bf16.gmra.mxu0 %v868
        %v979 = vpop.f32.mrf.mxu0
        %v980 = vadd.f32 %v756, %v979
        %v981 = vpop.f32.mrf.mxu0
        %v982 = vpop.f32.mrf.mxu0
        %v983 = vadd.f32 %v756, %v982
        %v984 = vpop.f32.mrf.mxu0
        %985 = vmatprep.mubr.bf16.mxu0 0
        %986 = vmatmul.mubr.bf16.gmra.mxu0 %v871
        %v987 = vpop.f32.mrf.mxu0
        %v988 = vadd.f32 %v756, %v987
        %v989 = vpop.f32.mrf.mxu0
        %v990 = vpop.f32.mrf.mxu0
        %v991 = vadd.f32 %v756, %v990
        %v992 = vpop.f32.mrf.mxu0
        %993 = vmatprep.mubr.bf16.mxu0 0
        %994 = vmatmul.mubr.bf16.gmra.mxu0 %v874
        %v995 = vpop.f32.mrf.mxu0
        %v996 = vadd.f32 %v756, %v995
        %v997 = vpop.f32.mrf.mxu0
        %v998 = vpop.f32.mrf.mxu0
        %v999 = vadd.f32 %v756, %v998
        %v1000 = vpop.f32.mrf.mxu0
        %1001 = vmatprep.mubr.bf16.mxu0 0
        %1002 = vmatmul.mubr.bf16.gmra.mxu0 %v877
        %v1003 = vpop.f32.mrf.mxu0
        %v1004 = vadd.f32 %v756, %v1003
        %v1005 = vpop.f32.mrf.mxu0
        %v1006 = vpop.f32.mrf.mxu0
        %v1007 = vadd.f32 %v756, %v1006
        %v1008 = vpop.f32.mrf.mxu0
        %1009 = vmatprep.mubr.bf16.mxu0 0
        %1010 = vmatmul.mubr.bf16.gmra.mxu0 %v880
        %v1011 = vpop.f32.mrf.mxu0
        %v1012 = vadd.f32 %v756, %v1011
        %v1013 = vpop.f32.mrf.mxu0
        %v1014 = vpop.f32.mrf.mxu0
        %v1015 = vadd.f32 %v756, %v1014
        %v1016 = vpop.f32.mrf.mxu0
        %1017 = vmatprep.mubr.bf16.mxu0 0
        %1018 = vmatmul.mubr.bf16.gmra.mxu0 %v883
        %v1019 = vpop.f32.mrf.mxu0
        %v1020 = vadd.f32 %v756, %v1019
        %v1021 = vpop.f32.mrf.mxu0
        %v1022 = vpop.f32.mrf.mxu0
        %v1023 = vadd.f32 %v756, %v1022
        %v1024 = vpop.f32.mrf.mxu0
        %1025 = vmatprep.mubr.bf16.mxu0 0
        %1026 = vmatmul.mubr.bf16.gmra.mxu0 %v886
        %v1027 = vpop.f32.mrf.mxu0
        %v1028 = vadd.f32 %v756, %v1027
        %v1029 = vpop.f32.mrf.mxu0
        %v1030 = vpop.f32.mrf.mxu0
        %v1031 = vadd.f32 %v756, %v1030
        %v1032 = vpop.f32.mrf.mxu0
        %1033 = vmatprep.mubr.bf16.mxu0 0
        %1034 = vmatmul.mubr.bf16.gmra.mxu0 %v889
        %v1035 = vpop.f32.mrf.mxu0
        %v1036 = vadd.f32 %v756, %v1035
        %v1037 = vpop.f32.mrf.mxu0
        %v1038 = vpop.f32.mrf.mxu0
        %v1039 = vadd.f32 %v756, %v1038
        %v1040 = vpop.f32.mrf.mxu0
        %1041 = vmatprep.mubr.bf16.mxu0 0
        %1042 = vmatmul.mubr.bf16.gmra.mxu0 %v892
        %v1043 = vpop.f32.mrf.mxu0
        %v1044 = vadd.f32 %v756, %v1043
        %v1045 = vpop.f32.mrf.mxu0
        %v1046 = vpop.f32.mrf.mxu0
        %v1047 = vadd.f32 %v756, %v1046
        %v1048 = vpop.f32.mrf.mxu0
        %1049 = vmatprep.mubr.bf16.mxu0 0
        %1050 = vmatmul.mubr.bf16.gmra.mxu0 %v895
        %v1051 = vpop.f32.mrf.mxu0
        %v1052 = vadd.f32 %v756, %v1051
        %v1053 = vpop.f32.mrf.mxu0
        %v1054 = vpop.f32.mrf.mxu0
        %v1055 = vadd.f32 %v756, %v1054
        %v1056 = vpop.f32.mrf.mxu0
        %1057 = vdwg.mxu0
        %v1058 = vlaneseq
        %v1059 = vshrl.u32 %v1058, 7
        %v1060 = vsub.s32 4, %v1059
        %v1061 = vrot.slane %v621, %v1060
        %v1066 = vcombine.low %v593, %v594
        %v1067 = vcombine.low %v595, %v596
        %v1069 = vunpack.c.l.s4 1966171168
        %v1070 = vunpack.c.0.s8 %v1069
        %v1071 = vlaneseq
        %v1072 = vshrl.u32 %v1071, 7
        %v1073 = vsub.s32 %v1070, %v1072
        %v1074 = vrot.slane %v1066, %v1073
        %v1076 = vunpack.c.l.s4 1966171168
        %v1077 = vunpack.c.0.s8 %v1076
        %v1078 = vlaneseq
        %v1079 = vshrl.u32 %v1078, 7
        %v1080 = vsub.s32 %v1077, %v1079
        %v1081 = vrot.slane %v1067, %v1080
        %v1082 = vcombine.low %v1074, %v1081
        %v1084 = vunpack.c.l.s4 1966171168
        %v1085 = vunpack.c.0.s8 %v1084
        %v1086 = vlaneseq
        %v1087 = vshrl.u32 %v1086, 7
        %v1088 = vsub.s32 %v1085, %v1087
        %v1089 = vrot.slane %v1082, %v1088
        %v1090 = vsel %vm623, %v1089, 0
        %1092 = vmatprep.subr.mxu0 0.0
        %1093 = vmatpush1.msra.mxu0 0.0
        %1094 = vmatprep.subr.mxu0 0.0
        %1095 = vmatpush1.msra.mxu0 0.0
        %1096 = vmatprep.subr.mxu0 0.0
        %1097 = vmatpush1.msra.mxu0 0.0
        %1098 = vmatprep.subr.mxu0 0.0
        %1099 = vmatpush1.msra.mxu0 0.0
        %1100 = vmatprep.subr.mxu0 0.0
        %1101 = vmatpush1.msra.mxu0 0.0
        %1102 = vmatprep.subr.mxu0 0.0
        %1103 = vmatpush1.msra.mxu0 0.0
        %1104 = vmatprep.subr.mxu0 0.0
        %1105 = vmatpush1.msra.mxu0 0.0
        %1106 = vmatprep.subr.mxu0 0.0
        %1107 = vmatpush1.msra.mxu0 0.0
        %1108 = vmatprep.subr.mxu0 0.0
        %1109 = vmatpush1.msra.mxu0 0.0
        %1110 = vmatprep.subr.mxu0 0.0
        %1111 = vmatpush1.msra.mxu0 0.0
        %1112 = vmatprep.subr.mxu0 0.0
        %1113 = vmatpush1.msra.mxu0 0.0
        %1114 = vmatprep.subr.mxu0 0.0
        %1115 = vmatpush1.msra.mxu0 0.0
        %1116 = vmatprep.subr.mxu0 0.0
        %1117 = vmatpush1.msra.mxu0 %v608
        %1118 = vmatprep.subr.mxu0 0.0
        %1119 = vmatpush1.msra.mxu0 %v607
        %1120 = vmatprep.subr.mxu0 0.0
        %1121 = vmatpush1.msra.mxu0 %v606
        %1122 = vmatprep.subr.mxu0 0.0
        %1123 = vmatpush1.msra.mxu0 %v605
        %1124 = vmatprep.subr.mxu0 0.0
        %1125 = vmatpush2.msra.mxu0 0.0
        %1126 = vmatprep.subr.mxu0 0.0
        %1127 = vmatpush2.msra.mxu0 0.0
        %1128 = vmatprep.subr.mxu0 0.0
        %1129 = vmatpush2.msra.mxu0 0.0
        %1130 = vmatprep.subr.mxu0 0.0
        %1131 = vmatpush2.msra.mxu0 0.0
        %1132 = vmatprep.subr.mxu0 0.0
        %1133 = vmatpush2.msra.mxu0 0.0
        %1134 = vmatprep.subr.mxu0 0.0
        %1135 = vmatpush2.msra.mxu0 0.0
        %1136 = vmatprep.subr.mxu0 0.0
        %1137 = vmatpush2.msra.mxu0 0.0
        %1138 = vmatprep.subr.mxu0 0.0
        %1139 = vmatpush2.msra.mxu0 0.0
        %1140 = vmatprep.subr.mxu0 0.0
        %1141 = vmatpush2.msra.mxu0 0.0
        %1142 = vmatprep.subr.mxu0 0.0
        %1143 = vmatpush2.msra.mxu0 0.0
        %1144 = vmatprep.subr.mxu0 0.0
        %1145 = vmatpush2.msra.mxu0 0.0
        %1146 = vmatprep.subr.mxu0 0.0
        %1147 = vmatpush2.msra.mxu0 0.0
        %1148 = vmatprep.subr.mxu0 0.0
        %1149 = vmatpush2.msra.mxu0 0.0
        %1150 = vmatprep.subr.mxu0 0.0
        %1151 = vmatpush2.msra.mxu0 0.0
        %1152 = vmatprep.subr.mxu0 0.0
        %1153 = vmatpush2.msra.mxu0 0.0
        %1154 = vmatprep.subr.mxu0 0.0
        %1155 = vmatpush2.msra.mxu0 0.0
        %1156 = vmatprep.mubr.f32.mxu0 0.0
        %1157 = vmatmul.mubr.f32.gmra.mxu0 %v1090
        %v1158 = vpop.f32.mrf.mxu0
        %v1159 = vadd.f32 %v1061, %v1158
        %v1160 = vpop.f32.mrf.mxu0
        %1161 = vdwg.mxu0
        %v1166 = vcombine.high %v737, %v737
        %v1168 = vunpack.c.l.s4 1966171168
        %v1169 = vunpack.c.0.s8 %v1168
        %v1170 = vlaneseq
        %v1171 = vshrl.u32 %v1170, 7
        %v1172 = vsub.s32 %v1169, %v1171
        %v1173 = vrot.slane %v737, %v1172
        %v1175 = vunpack.c.l.s4 1966171168
        %v1176 = vunpack.c.0.s8 %v1175
        %v1177 = vlaneseq
        %v1178 = vshrl.u32 %v1177, 7
        %v1179 = vsub.s32 %v1176, %v1178
        %v1180 = vrot.slane %v1166, %v1179
        %v1181 = vcombine.high %v1173, %v1173
        %v1182 = vcombine.high %v1180, %v1180
        %v1184 = vunpack.c.l.s4 1966171168
        %v1185 = vunpack.c.0.s8 %v1184
        %v1186 = vlaneseq
        %v1187 = vshrl.u32 %v1186, 7
        %v1188 = vsub.s32 %v1185, %v1187
        %v1189 = vrot.slane %v1173, %v1188
        %v1191 = vunpack.c.l.s4 1966171168
        %v1192 = vunpack.c.0.s8 %v1191
        %v1193 = vlaneseq
        %v1194 = vshrl.u32 %v1193, 7
        %v1195 = vsub.s32 %v1192, %v1194
        %v1196 = vrot.slane %v1180, %v1195
        %v1198 = vunpack.c.l.s4 1966171168
        %v1199 = vunpack.c.0.s8 %v1198
        %v1200 = vlaneseq
        %v1201 = vshrl.u32 %v1200, 7
        %v1202 = vsub.s32 %v1199, %v1201
        %v1203 = vrot.slane %v1181, %v1202
        %v1205 = vunpack.c.l.s4 1966171168
        %v1206 = vunpack.c.0.s8 %v1205
        %v1207 = vlaneseq
        %v1208 = vshrl.u32 %v1207, 7
        %v1209 = vsub.s32 %v1206, %v1208
        %v1210 = vrot.slane %v1182, %v1209
        %v1211 = vcombine.high %v1189, %v1189
        %v1212 = vcombine.high %v1196, %v1196
        %v1213 = vcombine.high %v1203, %v1203
        %v1214 = vcombine.high %v1210, %v1210
        %v1215 = vcombine.high %v738, %v738
        %v1217 = vunpack.c.l.s4 1966171168
        %v1218 = vunpack.c.0.s8 %v1217
        %v1219 = vlaneseq
        %v1220 = vshrl.u32 %v1219, 7
        %v1221 = vsub.s32 %v1218, %v1220
        %v1222 = vrot.slane %v738, %v1221
        %v1224 = vunpack.c.l.s4 1966171168
        %v1225 = vunpack.c.0.s8 %v1224
        %v1226 = vlaneseq
        %v1227 = vshrl.u32 %v1226, 7
        %v1228 = vsub.s32 %v1225, %v1227
        %v1229 = vrot.slane %v1215, %v1228
        %v1230 = vcombine.high %v1222, %v1222
        %v1231 = vcombine.high %v1229, %v1229
        %v1233 = vunpack.c.l.s4 1966171168
        %v1234 = vunpack.c.0.s8 %v1233
        %v1235 = vlaneseq
        %v1236 = vshrl.u32 %v1235, 7
        %v1237 = vsub.s32 %v1234, %v1236
        %v1238 = vrot.slane %v1222, %v1237
        %v1240 = vunpack.c.l.s4 1966171168
        %v1241 = vunpack.c.0.s8 %v1240
        %v1242 = vlaneseq
        %v1243 = vshrl.u32 %v1242, 7
        %v1244 = vsub.s32 %v1241, %v1243
        %v1245 = vrot.slane %v1229, %v1244
        %v1247 = vunpack.c.l.s4 1966171168
        %v1248 = vunpack.c.0.s8 %v1247
        %v1249 = vlaneseq
        %v1250 = vshrl.u32 %v1249, 7
        %v1251 = vsub.s32 %v1248, %v1250
        %v1252 = vrot.slane %v1230, %v1251
        %v1254 = vunpack.c.l.s4 1966171168
        %v1255 = vunpack.c.0.s8 %v1254
        %v1256 = vlaneseq
        %v1257 = vshrl.u32 %v1256, 7
        %v1258 = vsub.s32 %v1255, %v1257
        %v1259 = vrot.slane %v1231, %v1258
        %v1260 = vcombine.high %v1238, %v1238
        %v1261 = vcombine.high %v1245, %v1245
        %v1262 = vcombine.high %v1252, %v1252
        %v1263 = vcombine.high %v1259, %v1259
        %v1264 = vcombine.high %v739, %v739
        %v1266 = vunpack.c.l.s4 1966171168
        %v1267 = vunpack.c.0.s8 %v1266
        %v1268 = vlaneseq
        %v1269 = vshrl.u32 %v1268, 7
        %v1270 = vsub.s32 %v1267, %v1269
        %v1271 = vrot.slane %v739, %v1270
        %v1273 = vunpack.c.l.s4 1966171168
        %v1274 = vunpack.c.0.s8 %v1273
        %v1275 = vlaneseq
        %v1276 = vshrl.u32 %v1275, 7
        %v1277 = vsub.s32 %v1274, %v1276
        %v1278 = vrot.slane %v1264, %v1277
        %v1279 = vcombine.high %v1271, %v1271
        %v1280 = vcombine.high %v1278, %v1278
        %v1282 = vunpack.c.l.s4 1966171168
        %v1283 = vunpack.c.0.s8 %v1282
        %v1284 = vlaneseq
        %v1285 = vshrl.u32 %v1284, 7
        %v1286 = vsub.s32 %v1283, %v1285
        %v1287 = vrot.slane %v1271, %v1286
        %v1289 = vunpack.c.l.s4 1966171168
        %v1290 = vunpack.c.0.s8 %v1289
        %v1291 = vlaneseq
        %v1292 = vshrl.u32 %v1291, 7
        %v1293 = vsub.s32 %v1290, %v1292
        %v1294 = vrot.slane %v1278, %v1293
        %v1296 = vunpack.c.l.s4 1966171168
        %v1297 = vunpack.c.0.s8 %v1296
        %v1298 = vlaneseq
        %v1299 = vshrl.u32 %v1298, 7
        %v1300 = vsub.s32 %v1297, %v1299
        %v1301 = vrot.slane %v1279, %v1300
        %v1303 = vunpack.c.l.s4 1966171168
        %v1304 = vunpack.c.0.s8 %v1303
        %v1305 = vlaneseq
        %v1306 = vshrl.u32 %v1305, 7
        %v1307 = vsub.s32 %v1304, %v1306
        %v1308 = vrot.slane %v1280, %v1307
        %v1309 = vcombine.high %v1287, %v1287
        %v1310 = vcombine.high %v1294, %v1294
        %v1311 = vcombine.high %v1301, %v1301
        %v1312 = vcombine.high %v1308, %v1308
        %v1313 = vcombine.high %v740, %v740
        %v1315 = vunpack.c.l.s4 1966171168
        %v1316 = vunpack.c.0.s8 %v1315
        %v1317 = vlaneseq
        %v1318 = vshrl.u32 %v1317, 7
        %v1319 = vsub.s32 %v1316, %v1318
        %v1320 = vrot.slane %v740, %v1319
        %v1322 = vunpack.c.l.s4 1966171168
        %v1323 = vunpack.c.0.s8 %v1322
        %v1324 = vlaneseq
        %v1325 = vshrl.u32 %v1324, 7
        %v1326 = vsub.s32 %v1323, %v1325
        %v1327 = vrot.slane %v1313, %v1326
        %v1328 = vcombine.high %v1320, %v1320
        %v1329 = vcombine.high %v1327, %v1327
        %v1331 = vunpack.c.l.s4 1966171168
        %v1332 = vunpack.c.0.s8 %v1331
        %v1333 = vlaneseq
        %v1334 = vshrl.u32 %v1333, 7
        %v1335 = vsub.s32 %v1332, %v1334
        %v1336 = vrot.slane %v1320, %v1335
        %v1338 = vunpack.c.l.s4 1966171168
        %v1339 = vunpack.c.0.s8 %v1338
        %v1340 = vlaneseq
        %v1341 = vshrl.u32 %v1340, 7
        %v1342 = vsub.s32 %v1339, %v1341
        %v1343 = vrot.slane %v1327, %v1342
        %v1345 = vunpack.c.l.s4 1966171168
        %v1346 = vunpack.c.0.s8 %v1345
        %v1347 = vlaneseq
        %v1348 = vshrl.u32 %v1347, 7
        %v1349 = vsub.s32 %v1346, %v1348
        %v1350 = vrot.slane %v1328, %v1349
        %v1352 = vunpack.c.l.s4 1966171168
        %v1353 = vunpack.c.0.s8 %v1352
        %v1354 = vlaneseq
        %v1355 = vshrl.u32 %v1354, 7
        %v1356 = vsub.s32 %v1353, %v1355
        %v1357 = vrot.slane %v1329, %v1356
        %v1358 = vcombine.high %v1336, %v1336
        %v1359 = vcombine.high %v1343, %v1343
        %v1360 = vcombine.high %v1350, %v1350
        %v1361 = vcombine.high %v1357, %v1357
        %v1362 = vlaneseq
        %v1363 = vshrl.u32 %v1362, 7
        %v1364 = vsub.s32 0, %v1363
        %v1365 = vrot.slane %v1189, %v1364
        %v1366 = vlaneseq
        %v1367 = vshrl.u32 %v1366, 7
        %v1368 = vsub.s32 0, %v1367
        %v1369 = vrot.slane %v1203, %v1368
        %v1370 = vlaneseq
        %v1371 = vshrl.u32 %v1370, 7
        %v1372 = vsub.s32 0, %v1371
        %v1373 = vrot.slane %v1211, %v1372
        %v1374 = vlaneseq
        %v1375 = vshrl.u32 %v1374, 7
        %v1376 = vsub.s32 0, %v1375
        %v1377 = vrot.slane %v1213, %v1376
        %v1378 = vlaneseq
        %v1379 = vshrl.u32 %v1378, 7
        %v1380 = vsub.s32 0, %v1379
        %v1381 = vrot.slane %v1196, %v1380
        %v1382 = vlaneseq
        %v1383 = vshrl.u32 %v1382, 7
        %v1384 = vsub.s32 0, %v1383
        %v1385 = vrot.slane %v1210, %v1384
        %v1386 = vlaneseq
        %v1387 = vshrl.u32 %v1386, 7
        %v1388 = vsub.s32 0, %v1387
        %v1389 = vrot.slane %v1212, %v1388
        %v1390 = vlaneseq
        %v1391 = vshrl.u32 %v1390, 7
        %v1392 = vsub.s32 0, %v1391
        %v1393 = vrot.slane %v1214, %v1392
        %v1394 = vlaneseq
        %v1395 = vshrl.u32 %v1394, 7
        %v1396 = vsub.s32 0, %v1395
        %v1397 = vrot.slane %v1238, %v1396
        %v1398 = vlaneseq
        %v1399 = vshrl.u32 %v1398, 7
        %v1400 = vsub.s32 0, %v1399
        %v1401 = vrot.slane %v1252, %v1400
        %v1402 = vlaneseq
        %v1403 = vshrl.u32 %v1402, 7
        %v1404 = vsub.s32 0, %v1403
        %v1405 = vrot.slane %v1260, %v1404
        %v1406 = vlaneseq
        %v1407 = vshrl.u32 %v1406, 7
        %v1408 = vsub.s32 0, %v1407
        %v1409 = vrot.slane %v1262, %v1408
        %v1410 = vlaneseq
        %v1411 = vshrl.u32 %v1410, 7
        %v1412 = vsub.s32 0, %v1411
        %v1413 = vrot.slane %v1245, %v1412
        %v1414 = vlaneseq
        %v1415 = vshrl.u32 %v1414, 7
        %v1416 = vsub.s32 0, %v1415
        %v1417 = vrot.slane %v1259, %v1416
        %v1418 = vlaneseq
        %v1419 = vshrl.u32 %v1418, 7
        %v1420 = vsub.s32 0, %v1419
        %v1421 = vrot.slane %v1261, %v1420
        %v1422 = vlaneseq
        %v1423 = vshrl.u32 %v1422, 7
        %v1424 = vsub.s32 0, %v1423
        %v1425 = vrot.slane %v1263, %v1424
        %v1426 = vlaneseq
        %v1427 = vshrl.u32 %v1426, 7
        %v1428 = vsub.s32 0, %v1427
        %v1429 = vrot.slane %v1287, %v1428
        %v1430 = vlaneseq
        %v1431 = vshrl.u32 %v1430, 7
        %v1432 = vsub.s32 0, %v1431
        %v1433 = vrot.slane %v1301, %v1432
        %v1434 = vlaneseq
        %v1435 = vshrl.u32 %v1434, 7
        %v1436 = vsub.s32 0, %v1435
        %v1437 = vrot.slane %v1309, %v1436
        %v1438 = vlaneseq
        %v1439 = vshrl.u32 %v1438, 7
        %v1440 = vsub.s32 0, %v1439
        %v1441 = vrot.slane %v1311, %v1440
        %v1442 = vlaneseq
        %v1443 = vshrl.u32 %v1442, 7
        %v1444 = vsub.s32 0, %v1443
        %v1445 = vrot.slane %v1294, %v1444
        %v1446 = vlaneseq
        %v1447 = vshrl.u32 %v1446, 7
        %v1448 = vsub.s32 0, %v1447
        %v1449 = vrot.slane %v1308, %v1448
        %v1450 = vlaneseq
        %v1451 = vshrl.u32 %v1450, 7
        %v1452 = vsub.s32 0, %v1451
        %v1453 = vrot.slane %v1310, %v1452
        %v1454 = vlaneseq
        %v1455 = vshrl.u32 %v1454, 7
        %v1456 = vsub.s32 0, %v1455
        %v1457 = vrot.slane %v1312, %v1456
        %v1458 = vlaneseq
        %v1459 = vshrl.u32 %v1458, 7
        %v1460 = vsub.s32 0, %v1459
        %v1461 = vrot.slane %v1336, %v1460
        %v1462 = vlaneseq
        %v1463 = vshrl.u32 %v1462, 7
        %v1464 = vsub.s32 0, %v1463
        %v1465 = vrot.slane %v1350, %v1464
        %v1466 = vlaneseq
        %v1467 = vshrl.u32 %v1466, 7
        %v1468 = vsub.s32 0, %v1467
        %v1469 = vrot.slane %v1358, %v1468
        %v1470 = vlaneseq
        %v1471 = vshrl.u32 %v1470, 7
        %v1472 = vsub.s32 0, %v1471
        %v1473 = vrot.slane %v1360, %v1472
        %v1474 = vlaneseq
        %v1475 = vshrl.u32 %v1474, 7
        %v1476 = vsub.s32 0, %v1475
        %v1477 = vrot.slane %v1343, %v1476
        %v1478 = vlaneseq
        %v1479 = vshrl.u32 %v1478, 7
        %v1480 = vsub.s32 0, %v1479
        %v1481 = vrot.slane %v1357, %v1480
        %v1482 = vlaneseq
        %v1483 = vshrl.u32 %v1482, 7
        %v1484 = vsub.s32 0, %v1483
        %v1485 = vrot.slane %v1359, %v1484
        %v1486 = vlaneseq
        %v1487 = vshrl.u32 %v1486, 7
        %v1488 = vsub.s32 0, %v1487
        %v1489 = vrot.slane %v1361, %v1488
        %1490 = vrot.lane.b32.xlu0 %v1365, 96
        %v1491 = vpop.permute.xlu0 %1490
        %1492 = vrot.lane.b32.xlu0 %v1369, 96
        %v1493 = vpop.permute.xlu0 %1492
        %1494 = vrot.lane.b32.xlu0 %v1373, 96
        %v1495 = vpop.permute.xlu0 %1494
        %1496 = vrot.lane.b32.xlu0 %v1377, 96
        %v1497 = vpop.permute.xlu0 %1496
        %1498 = vrot.lane.b32.xlu0 %v1381, 96
        %v1499 = vpop.permute.xlu0 %1498
        %1500 = vrot.lane.b32.xlu0 %v1385, 96
        %v1501 = vpop.permute.xlu0 %1500
        %1502 = vrot.lane.b32.xlu0 %v1389, 96
        %v1503 = vpop.permute.xlu0 %1502
        %1504 = vrot.lane.b32.xlu0 %v1393, 96
        %v1505 = vpop.permute.xlu0 %1504
        %1506 = vrot.lane.b32.xlu0 %v1397, 96
        %v1507 = vpop.permute.xlu0 %1506
        %1508 = vrot.lane.b32.xlu0 %v1401, 96
        %v1509 = vpop.permute.xlu0 %1508
        %1510 = vrot.lane.b32.xlu0 %v1405, 96
        %v1511 = vpop.permute.xlu0 %1510
        %1512 = vrot.lane.b32.xlu0 %v1409, 96
        %v1513 = vpop.permute.xlu0 %1512
        %1514 = vrot.lane.b32.xlu0 %v1413, 96
        %v1515 = vpop.permute.xlu0 %1514
        %1516 = vrot.lane.b32.xlu0 %v1417, 96
        %v1517 = vpop.permute.xlu0 %1516
        %1518 = vrot.lane.b32.xlu0 %v1421, 96
        %v1519 = vpop.permute.xlu0 %1518
        %1520 = vrot.lane.b32.xlu0 %v1425, 96
        %v1521 = vpop.permute.xlu0 %1520
        %1522 = vrot.lane.b32.xlu0 %v1429, 96
        %v1523 = vpop.permute.xlu0 %1522
        %1524 = vrot.lane.b32.xlu0 %v1433, 96
        %v1525 = vpop.permute.xlu0 %1524
        %1526 = vrot.lane.b32.xlu0 %v1437, 96
        %v1527 = vpop.permute.xlu0 %1526
        %1528 = vrot.lane.b32.xlu0 %v1441, 96
        %v1529 = vpop.permute.xlu0 %1528
        %1530 = vrot.lane.b32.xlu0 %v1445, 96
        %v1531 = vpop.permute.xlu0 %1530
        %1532 = vrot.lane.b32.xlu0 %v1449, 96
        %v1533 = vpop.permute.xlu0 %1532
        %1534 = vrot.lane.b32.xlu0 %v1453, 96
        %v1535 = vpop.permute.xlu0 %1534
        %1536 = vrot.lane.b32.xlu0 %v1457, 96
        %v1537 = vpop.permute.xlu0 %1536
        %1538 = vrot.lane.b32.xlu0 %v1461, 96
        %v1539 = vpop.permute.xlu0 %1538
        %1540 = vrot.lane.b32.xlu0 %v1465, 96
        %v1541 = vpop.permute.xlu0 %1540
        %1542 = vrot.lane.b32.xlu0 %v1469, 96
        %v1543 = vpop.permute.xlu0 %1542
        %1544 = vrot.lane.b32.xlu0 %v1473, 96
        %v1545 = vpop.permute.xlu0 %1544
        %1546 = vrot.lane.b32.xlu0 %v1477, 96
        %v1547 = vpop.permute.xlu0 %1546
        %1548 = vrot.lane.b32.xlu0 %v1481, 96
        %v1549 = vpop.permute.xlu0 %1548
        %1550 = vrot.lane.b32.xlu0 %v1485, 96
        %v1551 = vpop.permute.xlu0 %1550
        %1552 = vrot.lane.b32.xlu0 %v1489, 96
        %v1553 = vpop.permute.xlu0 %1552
        %v1586 = vadd.f32 %v725, %v1491
        %v1587 = vadd.f32 %v725, %v1493
        %v1588 = vadd.f32 %v725, %v1495
        %v1589 = vadd.f32 %v725, %v1497
        %v1590 = vadd.f32 %v725, %v1499
        %v1591 = vadd.f32 %v725, %v1501
        %v1592 = vadd.f32 %v725, %v1503
        %v1593 = vadd.f32 %v725, %v1505
        %v1594 = vadd.f32 %v726, %v1507
        %v1595 = vadd.f32 %v726, %v1509
        %v1596 = vadd.f32 %v726, %v1511
        %v1597 = vadd.f32 %v726, %v1513
        %v1598 = vadd.f32 %v726, %v1515
        %v1599 = vadd.f32 %v726, %v1517
        %v1600 = vadd.f32 %v726, %v1519
        %v1601 = vadd.f32 %v726, %v1521
        %v1602 = vadd.f32 %v727, %v1523
        %v1603 = vadd.f32 %v727, %v1525
        %v1604 = vadd.f32 %v727, %v1527
        %v1605 = vadd.f32 %v727, %v1529
        %v1606 = vadd.f32 %v727, %v1531
        %v1607 = vadd.f32 %v727, %v1533
        %v1608 = vadd.f32 %v727, %v1535
        %v1609 = vadd.f32 %v727, %v1537
        %v1610 = vadd.f32 %v728, %v1539
        %v1611 = vadd.f32 %v728, %v1541
        %v1612 = vadd.f32 %v728, %v1543
        %v1613 = vadd.f32 %v728, %v1545
        %v1614 = vadd.f32 %v728, %v1547
        %v1615 = vadd.f32 %v728, %v1549
        %v1616 = vadd.f32 %v728, %v1551
        %v1617 = vadd.f32 %v728, %v1553
        %v1618 = vadd.f32 %v1586, %v932
        %v1619 = vadd.f32 %v1587, %v935
        %v1620 = vadd.f32 %v1588, %v940
        %v1621 = vadd.f32 %v1589, %v943
        %v1622 = vadd.f32 %v1590, %v948
        %v1623 = vadd.f32 %v1591, %v951
        %v1624 = vadd.f32 %v1592, %v956
        %v1625 = vadd.f32 %v1593, %v959
        %v1626 = vadd.f32 %v1594, %v964
        %v1627 = vadd.f32 %v1595, %v967
        %v1628 = vadd.f32 %v1596, %v972
        %v1629 = vadd.f32 %v1597, %v975
        %v1630 = vadd.f32 %v1598, %v980
        %v1631 = vadd.f32 %v1599, %v983
        %v1632 = vadd.f32 %v1600, %v988
        %v1633 = vadd.f32 %v1601, %v991
        %v1634 = vadd.f32 %v1602, %v996
        %v1635 = vadd.f32 %v1603, %v999
        %v1636 = vadd.f32 %v1604, %v1004
        %v1637 = vadd.f32 %v1605, %v1007
        %v1638 = vadd.f32 %v1606, %v1012
        %v1639 = vadd.f32 %v1607, %v1015
        %v1640 = vadd.f32 %v1608, %v1020
        %v1641 = vadd.f32 %v1609, %v1023
        %v1642 = vadd.f32 %v1610, %v1028
        %v1643 = vadd.f32 %v1611, %v1031
        %v1644 = vadd.f32 %v1612, %v1036
        %v1645 = vadd.f32 %v1613, %v1039
        %v1646 = vadd.f32 %v1614, %v1044
        %v1647 = vadd.f32 %v1615, %v1047
        %v1648 = vadd.f32 %v1616, %v1052
        %v1649 = vadd.f32 %v1617, %v1055
        %v1652 = vunpack.c.l.s4 1966171168
        %v1653 = vunpack.c.0.s8 %v1652
        %v1654 = vlaneseq
        %v1655 = vshrl.u32 %v1654, 7
        %v1656 = vsub.s32 %v1653, %v1655
        %v1657 = vrot.slane %v1159, %v1656
        %v1658 = vcombine.high %v1657, %v1657
        %v1660 = vunpack.c.l.s4 1966171168
        %v1661 = vunpack.c.0.s8 %v1660
        %v1662 = vlaneseq
        %v1663 = vshrl.u32 %v1662, 7
        %v1664 = vsub.s32 %v1661, %v1663
        %v1665 = vrot.slane %v1657, %v1664
        %v1667 = vunpack.c.l.s4 1966171168
        %v1668 = vunpack.c.0.s8 %v1667
        %v1669 = vlaneseq
        %v1670 = vshrl.u32 %v1669, 7
        %v1671 = vsub.s32 %v1668, %v1670
        %v1672 = vrot.slane %v1658, %v1671
        %v1673 = vcombine.high %v1665, %v1665
        %v1674 = vcombine.high %v1672, %v1672
        %v1675 = vlaneseq
        %v1676 = vshrl.u32 %v1675, 7
        %v1677 = vsub.s32 0, %v1676
        %v1678 = vrot.slane %v1665, %v1677
        %v1679 = vlaneseq
        %v1680 = vshrl.u32 %v1679, 7
        %v1681 = vsub.s32 0, %v1680
        %v1682 = vrot.slane %v1672, %v1681
        %v1683 = vlaneseq
        %v1684 = vshrl.u32 %v1683, 7
        %v1685 = vsub.s32 0, %v1684
        %v1686 = vrot.slane %v1673, %v1685
        %v1687 = vlaneseq
        %v1688 = vshrl.u32 %v1687, 7
        %v1689 = vsub.s32 0, %v1688
        %v1690 = vrot.slane %v1674, %v1689
        %v1695 = vadd.f32 %v1618, %v1678
        %v1696 = vadd.f32 %v1619, %v1678
        %v1697 = vadd.f32 %v1620, %v1678
        %v1698 = vadd.f32 %v1621, %v1678
        %v1699 = vadd.f32 %v1622, %v1678
        %v1700 = vadd.f32 %v1623, %v1678
        %v1701 = vadd.f32 %v1624, %v1678
        %v1702 = vadd.f32 %v1625, %v1678
        %v1703 = vadd.f32 %v1626, %v1682
        %v1704 = vadd.f32 %v1627, %v1682
        %v1705 = vadd.f32 %v1628, %v1682
        %v1706 = vadd.f32 %v1629, %v1682
        %v1707 = vadd.f32 %v1630, %v1682
        %v1708 = vadd.f32 %v1631, %v1682
        %v1709 = vadd.f32 %v1632, %v1682
        %v1710 = vadd.f32 %v1633, %v1682
        %v1711 = vadd.f32 %v1634, %v1686
        %v1712 = vadd.f32 %v1635, %v1686
        %v1713 = vadd.f32 %v1636, %v1686
        %v1714 = vadd.f32 %v1637, %v1686
        %v1715 = vadd.f32 %v1638, %v1686
        %v1716 = vadd.f32 %v1639, %v1686
        %v1717 = vadd.f32 %v1640, %v1686
        %v1718 = vadd.f32 %v1641, %v1686
        %v1719 = vadd.f32 %v1642, %v1690
        %v1720 = vadd.f32 %v1643, %v1690
        %v1721 = vadd.f32 %v1644, %v1690
        %v1722 = vadd.f32 %v1645, %v1690
        %v1723 = vadd.f32 %v1646, %v1690
        %v1724 = vadd.f32 %v1647, %v1690
        %v1725 = vadd.f32 %v1648, %v1690
        %v1726 = vadd.f32 %v1649, %v1690
        %v1727 = vmax.f32 %v1695, 0.0
        %v1728 = vmax.f32 %v1696, 0.0
        %v1729 = vmax.f32 %v1697, 0.0
        %v1730 = vmax.f32 %v1698, 0.0
        %v1731 = vmax.f32 %v1699, 0.0
        %v1732 = vmax.f32 %v1700, 0.0
        %v1733 = vmax.f32 %v1701, 0.0
        %v1734 = vmax.f32 %v1702, 0.0
        %v1735 = vmax.f32 %v1703, 0.0
        %v1736 = vmax.f32 %v1704, 0.0
        %v1737 = vmax.f32 %v1705, 0.0
        %v1738 = vmax.f32 %v1706, 0.0
        %v1739 = vmax.f32 %v1707, 0.0
        %v1740 = vmax.f32 %v1708, 0.0
        %v1741 = vmax.f32 %v1709, 0.0
        %v1742 = vmax.f32 %v1710, 0.0
        %v1743 = vmax.f32 %v1711, 0.0
        %v1744 = vmax.f32 %v1712, 0.0
        %v1745 = vmax.f32 %v1713, 0.0
        %v1746 = vmax.f32 %v1714, 0.0
        %v1747 = vmax.f32 %v1715, 0.0
        %v1748 = vmax.f32 %v1716, 0.0
        %v1749 = vmax.f32 %v1717, 0.0
        %v1750 = vmax.f32 %v1718, 0.0
        %v1751 = vmax.f32 %v1719, 0.0
        %v1752 = vmax.f32 %v1720, 0.0
        %v1753 = vmax.f32 %v1721, 0.0
        %v1754 = vmax.f32 %v1722, 0.0
        %v1755 = vmax.f32 %v1723, 0.0
        %v1756 = vmax.f32 %v1724, 0.0
        %v1757 = vmax.f32 %v1725, 0.0
        %v1758 = vmax.f32 %v1726, 0.0
        %v1759 = vlaneseq
        %v1760 = vshrl.u32 %v1759, 7
        %v1761 = vsub.s32 5, %v1760
        %v1762 = vrot.slane %v621, %v1761
        %v1764 = vsel %vm623, %v1727, 0
        %v1767 = vsel %vm623, %v1728, 0
        %v1770 = vsel %vm623, %v1729, 0
        %v1773 = vsel %vm623, %v1730, 0
        %v1776 = vsel %vm623, %v1731, 0
        %v1779 = vsel %vm623, %v1732, 0
        %v1782 = vsel %vm623, %v1733, 0
        %v1785 = vsel %vm623, %v1734, 0
        %v1788 = vsel %vm623, %v1735, 0
        %v1791 = vsel %vm623, %v1736, 0
        %v1794 = vsel %vm623, %v1737, 0
        %v1797 = vsel %vm623, %v1738, 0
        %v1800 = vsel %vm623, %v1739, 0
        %v1803 = vsel %vm623, %v1740, 0
        %v1806 = vsel %vm623, %v1741, 0
        %v1809 = vsel %vm623, %v1742, 0
        %v1812 = vsel %vm623, %v1743, 0
        %v1815 = vsel %vm623, %v1744, 0
        %v1818 = vsel %vm623, %v1745, 0
        %v1821 = vsel %vm623, %v1746, 0
        %v1824 = vsel %vm623, %v1747, 0
        %v1827 = vsel %vm623, %v1748, 0
        %v1830 = vsel %vm623, %v1749, 0
        %v1833 = vsel %vm623, %v1750, 0
        %v1836 = vsel %vm623, %v1751, 0
        %v1839 = vsel %vm623, %v1752, 0
        %v1842 = vsel %vm623, %v1753, 0
        %v1845 = vsel %vm623, %v1754, 0
        %v1848 = vsel %vm623, %v1755, 0
        %v1851 = vsel %vm623, %v1756, 0
        %v1854 = vsel %vm623, %v1757, 0
        %v1857 = vsel %vm623, %v1758, 0
        %1859 = vmatprep.subr.mxu0 0.0
        %1860 = vmatpush1.msra.mxu0 0.0
        %1861 = vmatprep.subr.mxu0 0.0
        %1862 = vmatpush1.msra.mxu0 0.0
        %1863 = vmatprep.subr.mxu0 0.0
        %1864 = vmatpush1.msra.mxu0 0.0
        %1865 = vmatprep.subr.mxu0 0.0
        %1866 = vmatpush1.msra.mxu0 0.0
        %1867 = vmatprep.subr.mxu0 0.0
        %1868 = vmatpush1.msra.mxu0 0.0
        %1869 = vmatprep.subr.mxu0 0.0
        %1870 = vmatpush1.msra.mxu0 0.0
        %1871 = vmatprep.subr.mxu0 0.0
        %1872 = vmatpush1.msra.mxu0 0.0
        %1873 = vmatprep.subr.mxu0 0.0
        %1874 = vmatpush1.msra.mxu0 0.0
        %1875 = vmatprep.subr.mxu0 0.0
        %1876 = vmatpush1.msra.mxu0 0.0
        %1877 = vmatprep.subr.mxu0 0.0
        %1878 = vmatpush1.msra.mxu0 0.0
        %1879 = vmatprep.subr.mxu0 0.0
        %1880 = vmatpush1.msra.mxu0 0.0
        %1881 = vmatprep.subr.mxu0 0.0
        %1882 = vmatpush1.msra.mxu0 0.0
        %1883 = vmatprep.subr.mxu0 0.0
        %1884 = vmatpush1.msra.mxu0 %v612
        %1885 = vmatprep.subr.mxu0 0.0
        %1886 = vmatpush1.msra.mxu0 %v611
        %1887 = vmatprep.subr.mxu0 0.0
        %1888 = vmatpush1.msra.mxu0 %v610
        %1889 = vmatprep.subr.mxu0 0.0
        %1890 = vmatpush1.msra.mxu0 %v609
        %1891 = vmatprep.subr.mxu0 0.0
        %1892 = vmatpush2.msra.mxu0 0.0
        %1893 = vmatprep.subr.mxu0 0.0
        %1894 = vmatpush2.msra.mxu0 0.0
        %1895 = vmatprep.subr.mxu0 0.0
        %1896 = vmatpush2.msra.mxu0 0.0
        %1897 = vmatprep.subr.mxu0 0.0
        %1898 = vmatpush2.msra.mxu0 0.0
        %1899 = vmatprep.subr.mxu0 0.0
        %1900 = vmatpush2.msra.mxu0 0.0
        %1901 = vmatprep.subr.mxu0 0.0
        %1902 = vmatpush2.msra.mxu0 0.0
        %1903 = vmatprep.subr.mxu0 0.0
        %1904 = vmatpush2.msra.mxu0 0.0
        %1905 = vmatprep.subr.mxu0 0.0
        %1906 = vmatpush2.msra.mxu0 0.0
        %1907 = vmatprep.subr.mxu0 0.0
        %1908 = vmatpush2.msra.mxu0 0.0
        %1909 = vmatprep.subr.mxu0 0.0
        %1910 = vmatpush2.msra.mxu0 0.0
        %1911 = vmatprep.subr.mxu0 0.0
        %1912 = vmatpush2.msra.mxu0 0.0
        %1913 = vmatprep.subr.mxu0 0.0
        %1914 = vmatpush2.msra.mxu0 0.0
        %1915 = vmatprep.subr.mxu0 0.0
        %1916 = vmatpush2.msra.mxu0 0.0
        %1917 = vmatprep.subr.mxu0 0.0
        %1918 = vmatpush2.msra.mxu0 0.0
        %1919 = vmatprep.subr.mxu0 0.0
        %1920 = vmatpush2.msra.mxu0 0.0
        %1921 = vmatprep.subr.mxu0 0.0
        %1922 = vmatpush2.msra.mxu0 0.0
        %1923 = vmatprep.mubr.f32.mxu0 0.0
        %1924 = vmatmul.mubr.f32.gmra.mxu0 %v1764
        %v1925 = vpop.f32.mrf.mxu0
        %v1926 = vadd.f32 %v1762, %v1925
        %v1927 = vpop.f32.mrf.mxu0
        %1928 = vmatprep.mubr.f32.mxu0 0.0
        %1929 = vmatmul.mubr.f32.gmra.mxu0 %v1767
        %v1930 = vpop.f32.mrf.mxu0
        %v1931 = vadd.f32 %v1762, %v1930
        %v1932 = vpop.f32.mrf.mxu0
        %1933 = vmatprep.mubr.f32.mxu0 0.0
        %1934 = vmatmul.mubr.f32.gmra.mxu0 %v1770
        %v1935 = vpop.f32.mrf.mxu0
        %v1936 = vadd.f32 %v1762, %v1935
        %v1937 = vpop.f32.mrf.mxu0
        %1938 = vmatprep.mubr.f32.mxu0 0.0
        %1939 = vmatmul.mubr.f32.gmra.mxu0 %v1773
        %v1940 = vpop.f32.mrf.mxu0
        %v1941 = vadd.f32 %v1762, %v1940
        %v1942 = vpop.f32.mrf.mxu0
        %1943 = vmatprep.mubr.f32.mxu0 0.0
        %1944 = vmatmul.mubr.f32.gmra.mxu0 %v1776
        %v1945 = vpop.f32.mrf.mxu0
        %v1946 = vadd.f32 %v1762, %v1945
        %v1947 = vpop.f32.mrf.mxu0
        %1948 = vmatprep.mubr.f32.mxu0 0.0
        %1949 = vmatmul.mubr.f32.gmra.mxu0 %v1779
        %v1950 = vpop.f32.mrf.mxu0
        %v1951 = vadd.f32 %v1762, %v1950
        %v1952 = vpop.f32.mrf.mxu0
        %1953 = vmatprep.mubr.f32.mxu0 0.0
        %1954 = vmatmul.mubr.f32.gmra.mxu0 %v1782
        %v1955 = vpop.f32.mrf.mxu0
        %v1956 = vadd.f32 %v1762, %v1955
        %v1957 = vpop.f32.mrf.mxu0
        %1958 = vmatprep.mubr.f32.mxu0 0.0
        %1959 = vmatmul.mubr.f32.gmra.mxu0 %v1785
        %v1960 = vpop.f32.mrf.mxu0
        %v1961 = vadd.f32 %v1762, %v1960
        %v1962 = vpop.f32.mrf.mxu0
        %1963 = vmatprep.mubr.f32.mxu0 0.0
        %1964 = vmatmul.mubr.f32.gmra.mxu0 %v1788
        %v1965 = vpop.f32.mrf.mxu0
        %v1966 = vadd.f32 %v1762, %v1965
        %v1967 = vpop.f32.mrf.mxu0
        %1968 = vmatprep.mubr.f32.mxu0 0.0
        %1969 = vmatmul.mubr.f32.gmra.mxu0 %v1791
        %v1970 = vpop.f32.mrf.mxu0
        %v1971 = vadd.f32 %v1762, %v1970
        %v1972 = vpop.f32.mrf.mxu0
        %1973 = vmatprep.mubr.f32.mxu0 0.0
        %1974 = vmatmul.mubr.f32.gmra.mxu0 %v1794
        %v1975 = vpop.f32.mrf.mxu0
        %v1976 = vadd.f32 %v1762, %v1975
        %v1977 = vpop.f32.mrf.mxu0
        %1978 = vmatprep.mubr.f32.mxu0 0.0
        %1979 = vmatmul.mubr.f32.gmra.mxu0 %v1797
        %v1980 = vpop.f32.mrf.mxu0
        %v1981 = vadd.f32 %v1762, %v1980
        %v1982 = vpop.f32.mrf.mxu0
        %1983 = vmatprep.mubr.f32.mxu0 0.0
        %1984 = vmatmul.mubr.f32.gmra.mxu0 %v1800
        %v1985 = vpop.f32.mrf.mxu0
        %v1986 = vadd.f32 %v1762, %v1985
        %v1987 = vpop.f32.mrf.mxu0
        %1988 = vmatprep.mubr.f32.mxu0 0.0
        %1989 = vmatmul.mubr.f32.gmra.mxu0 %v1803
        %v1990 = vpop.f32.mrf.mxu0
        %v1991 = vadd.f32 %v1762, %v1990
        %v1992 = vpop.f32.mrf.mxu0
        %1993 = vmatprep.mubr.f32.mxu0 0.0
        %1994 = vmatmul.mubr.f32.gmra.mxu0 %v1806
        %v1995 = vpop.f32.mrf.mxu0
        %v1996 = vadd.f32 %v1762, %v1995
        %v1997 = vpop.f32.mrf.mxu0
        %1998 = vmatprep.mubr.f32.mxu0 0.0
        %1999 = vmatmul.mubr.f32.gmra.mxu0 %v1809
        %v2000 = vpop.f32.mrf.mxu0
        %v2001 = vadd.f32 %v1762, %v2000
        %v2002 = vpop.f32.mrf.mxu0
        %2003 = vmatprep.mubr.f32.mxu0 0.0
        %2004 = vmatmul.mubr.f32.gmra.mxu0 %v1812
        %v2005 = vpop.f32.mrf.mxu0
        %v2006 = vadd.f32 %v1762, %v2005
        %v2007 = vpop.f32.mrf.mxu0
        %2008 = vmatprep.mubr.f32.mxu0 0.0
        %2009 = vmatmul.mubr.f32.gmra.mxu0 %v1815
        %v2010 = vpop.f32.mrf.mxu0
        %v2011 = vadd.f32 %v1762, %v2010
        %v2012 = vpop.f32.mrf.mxu0
        %2013 = vmatprep.mubr.f32.mxu0 0.0
        %2014 = vmatmul.mubr.f32.gmra.mxu0 %v1818
        %v2015 = vpop.f32.mrf.mxu0
        %v2016 = vadd.f32 %v1762, %v2015
        %v2017 = vpop.f32.mrf.mxu0
        %2018 = vmatprep.mubr.f32.mxu0 0.0
        %2019 = vmatmul.mubr.f32.gmra.mxu0 %v1821
        %v2020 = vpop.f32.mrf.mxu0
        %v2021 = vadd.f32 %v1762, %v2020
        %v2022 = vpop.f32.mrf.mxu0
        %2023 = vmatprep.mubr.f32.mxu0 0.0
        %2024 = vmatmul.mubr.f32.gmra.mxu0 %v1824
        %v2025 = vpop.f32.mrf.mxu0
        %v2026 = vadd.f32 %v1762, %v2025
        %v2027 = vpop.f32.mrf.mxu0
        %2028 = vmatprep.mubr.f32.mxu0 0.0
        %2029 = vmatmul.mubr.f32.gmra.mxu0 %v1827
        %v2030 = vpop.f32.mrf.mxu0
        %v2031 = vadd.f32 %v1762, %v2030
        %v2032 = vpop.f32.mrf.mxu0
        %2033 = vmatprep.mubr.f32.mxu0 0.0
        %2034 = vmatmul.mubr.f32.gmra.mxu0 %v1830
        %v2035 = vpop.f32.mrf.mxu0
        %v2036 = vadd.f32 %v1762, %v2035
        %v2037 = vpop.f32.mrf.mxu0
        %2038 = vmatprep.mubr.f32.mxu0 0.0
        %2039 = vmatmul.mubr.f32.gmra.mxu0 %v1833
        %v2040 = vpop.f32.mrf.mxu0
        %v2041 = vadd.f32 %v1762, %v2040
        %v2042 = vpop.f32.mrf.mxu0
        %2043 = vmatprep.mubr.f32.mxu0 0.0
        %2044 = vmatmul.mubr.f32.gmra.mxu0 %v1836
        %v2045 = vpop.f32.mrf.mxu0
        %v2046 = vadd.f32 %v1762, %v2045
        %v2047 = vpop.f32.mrf.mxu0
        %2048 = vmatprep.mubr.f32.mxu0 0.0
        %2049 = vmatmul.mubr.f32.gmra.mxu0 %v1839
        %v2050 = vpop.f32.mrf.mxu0
        %v2051 = vadd.f32 %v1762, %v2050
        %v2052 = vpop.f32.mrf.mxu0
        %2053 = vmatprep.mubr.f32.mxu0 0.0
        %2054 = vmatmul.mubr.f32.gmra.mxu0 %v1842
        %v2055 = vpop.f32.mrf.mxu0
        %v2056 = vadd.f32 %v1762, %v2055
        %v2057 = vpop.f32.mrf.mxu0
        %2058 = vmatprep.mubr.f32.mxu0 0.0
        %2059 = vmatmul.mubr.f32.gmra.mxu0 %v1845
        %v2060 = vpop.f32.mrf.mxu0
        %v2061 = vadd.f32 %v1762, %v2060
        %v2062 = vpop.f32.mrf.mxu0
        %2063 = vmatprep.mubr.f32.mxu0 0.0
        %2064 = vmatmul.mubr.f32.gmra.mxu0 %v1848
        %v2065 = vpop.f32.mrf.mxu0
        %v2066 = vadd.f32 %v1762, %v2065
        %v2067 = vpop.f32.mrf.mxu0
        %2068 = vmatprep.mubr.f32.mxu0 0.0
        %2069 = vmatmul.mubr.f32.gmra.mxu0 %v1851
        %v2070 = vpop.f32.mrf.mxu0
        %v2071 = vadd.f32 %v1762, %v2070
        %v2072 = vpop.f32.mrf.mxu0
        %2073 = vmatprep.mubr.f32.mxu0 0.0
        %2074 = vmatmul.mubr.f32.gmra.mxu0 %v1854
        %v2075 = vpop.f32.mrf.mxu0
        %v2076 = vadd.f32 %v1762, %v2075
        %v2077 = vpop.f32.mrf.mxu0
        %2078 = vmatprep.mubr.f32.mxu0 0.0
        %2079 = vmatmul.mubr.f32.gmra.mxu0 %v1857
        %v2080 = vpop.f32.mrf.mxu0
        %v2081 = vadd.f32 %v1762, %v2080
        %v2082 = vpop.f32.mrf.mxu0
        %2083 = vdwg.mxu0
        %v2084 = vmax.f32 %v1926, 0.0
        %v2085 = vmax.f32 %v1931, 0.0
        %v2086 = vmax.f32 %v1936, 0.0
        %v2087 = vmax.f32 %v1941, 0.0
        %v2088 = vmax.f32 %v1946, 0.0
        %v2089 = vmax.f32 %v1951, 0.0
        %v2090 = vmax.f32 %v1956, 0.0
        %v2091 = vmax.f32 %v1961, 0.0
        %v2092 = vmax.f32 %v1966, 0.0
        %v2093 = vmax.f32 %v1971, 0.0
        %v2094 = vmax.f32 %v1976, 0.0
        %v2095 = vmax.f32 %v1981, 0.0
        %v2096 = vmax.f32 %v1986, 0.0
        %v2097 = vmax.f32 %v1991, 0.0
        %v2098 = vmax.f32 %v1996, 0.0
        %v2099 = vmax.f32 %v2001, 0.0
        %v2100 = vmax.f32 %v2006, 0.0
        %v2101 = vmax.f32 %v2011, 0.0
        %v2102 = vmax.f32 %v2016, 0.0
        %v2103 = vmax.f32 %v2021, 0.0
        %v2104 = vmax.f32 %v2026, 0.0
        %v2105 = vmax.f32 %v2031, 0.0
        %v2106 = vmax.f32 %v2036, 0.0
        %v2107 = vmax.f32 %v2041, 0.0
        %v2108 = vmax.f32 %v2046, 0.0
        %v2109 = vmax.f32 %v2051, 0.0
        %v2110 = vmax.f32 %v2056, 0.0
        %v2111 = vmax.f32 %v2061, 0.0
        %v2112 = vmax.f32 %v2066, 0.0
        %v2113 = vmax.f32 %v2071, 0.0
        %v2114 = vmax.f32 %v2076, 0.0
        %v2115 = vmax.f32 %v2081, 0.0
        %v2116 = vlaneseq
        %v2117 = vshrl.u32 %v2116, 7
        %v2118 = vsub.s32 6, %v2117
        %v2119 = vrot.slane %v621, %v2118
        %v2121 = vsel %vm623, %v2084, 0
        %v2124 = vsel %vm623, %v2085, 0
        %v2127 = vsel %vm623, %v2086, 0
        %v2130 = vsel %vm623, %v2087, 0
        %v2133 = vsel %vm623, %v2088, 0
        %v2136 = vsel %vm623, %v2089, 0
        %v2139 = vsel %vm623, %v2090, 0
        %v2142 = vsel %vm623, %v2091, 0
        %v2145 = vsel %vm623, %v2092, 0
        %v2148 = vsel %vm623, %v2093, 0
        %v2151 = vsel %vm623, %v2094, 0
        %v2154 = vsel %vm623, %v2095, 0
        %v2157 = vsel %vm623, %v2096, 0
        %v2160 = vsel %vm623, %v2097, 0
        %v2163 = vsel %vm623, %v2098, 0
        %v2166 = vsel %vm623, %v2099, 0
        %v2169 = vsel %vm623, %v2100, 0
        %v2172 = vsel %vm623, %v2101, 0
        %v2175 = vsel %vm623, %v2102, 0
        %v2178 = vsel %vm623, %v2103, 0
        %v2181 = vsel %vm623, %v2104, 0
        %v2184 = vsel %vm623, %v2105, 0
        %v2187 = vsel %vm623, %v2106, 0
        %v2190 = vsel %vm623, %v2107, 0
        %v2193 = vsel %vm623, %v2108, 0
        %v2196 = vsel %vm623, %v2109, 0
        %v2199 = vsel %vm623, %v2110, 0
        %v2202 = vsel %vm623, %v2111, 0
        %v2205 = vsel %vm623, %v2112, 0
        %v2208 = vsel %vm623, %v2113, 0
        %v2211 = vsel %vm623, %v2114, 0
        %v2214 = vsel %vm623, %v2115, 0
        %2216 = vmatprep.subr.mxu0 0.0
        %2217 = vmatpush1.msra.mxu0 0.0
        %2218 = vmatprep.subr.mxu0 0.0
        %2219 = vmatpush1.msra.mxu0 0.0
        %2220 = vmatprep.subr.mxu0 0.0
        %2221 = vmatpush1.msra.mxu0 0.0
        %2222 = vmatprep.subr.mxu0 0.0
        %2223 = vmatpush1.msra.mxu0 0.0
        %2224 = vmatprep.subr.mxu0 0.0
        %2225 = vmatpush1.msra.mxu0 0.0
        %2226 = vmatprep.subr.mxu0 0.0
        %2227 = vmatpush1.msra.mxu0 0.0
        %2228 = vmatprep.subr.mxu0 0.0
        %2229 = vmatpush1.msra.mxu0 0.0
        %2230 = vmatprep.subr.mxu0 0.0
        %2231 = vmatpush1.msra.mxu0 0.0
        %2232 = vmatprep.subr.mxu0 0.0
        %2233 = vmatpush1.msra.mxu0 0.0
        %2234 = vmatprep.subr.mxu0 0.0
        %2235 = vmatpush1.msra.mxu0 0.0
        %2236 = vmatprep.subr.mxu0 0.0
        %2237 = vmatpush1.msra.mxu0 0.0
        %2238 = vmatprep.subr.mxu0 0.0
        %2239 = vmatpush1.msra.mxu0 0.0
        %2240 = vmatprep.subr.mxu0 0.0
        %2241 = vmatpush1.msra.mxu0 %v616
        %2242 = vmatprep.subr.mxu0 0.0
        %2243 = vmatpush1.msra.mxu0 %v615
        %2244 = vmatprep.subr.mxu0 0.0
        %2245 = vmatpush1.msra.mxu0 %v614
        %2246 = vmatprep.subr.mxu0 0.0
        %2247 = vmatpush1.msra.mxu0 %v613
        %2248 = vmatprep.subr.mxu0 0.0
        %2249 = vmatpush2.msra.mxu0 0.0
        %2250 = vmatprep.subr.mxu0 0.0
        %2251 = vmatpush2.msra.mxu0 0.0
        %2252 = vmatprep.subr.mxu0 0.0
        %2253 = vmatpush2.msra.mxu0 0.0
        %2254 = vmatprep.subr.mxu0 0.0
        %2255 = vmatpush2.msra.mxu0 0.0
        %2256 = vmatprep.subr.mxu0 0.0
        %2257 = vmatpush2.msra.mxu0 0.0
        %2258 = vmatprep.subr.mxu0 0.0
        %2259 = vmatpush2.msra.mxu0 0.0
        %2260 = vmatprep.subr.mxu0 0.0
        %2261 = vmatpush2.msra.mxu0 0.0
        %2262 = vmatprep.subr.mxu0 0.0
        %2263 = vmatpush2.msra.mxu0 0.0
        %2264 = vmatprep.subr.mxu0 0.0
        %2265 = vmatpush2.msra.mxu0 0.0
        %2266 = vmatprep.subr.mxu0 0.0
        %2267 = vmatpush2.msra.mxu0 0.0
        %2268 = vmatprep.subr.mxu0 0.0
        %2269 = vmatpush2.msra.mxu0 0.0
        %2270 = vmatprep.subr.mxu0 0.0
        %2271 = vmatpush2.msra.mxu0 0.0
        %2272 = vmatprep.subr.mxu0 0.0
        %2273 = vmatpush2.msra.mxu0 0.0
        %2274 = vmatprep.subr.mxu0 0.0
        %2275 = vmatpush2.msra.mxu0 0.0
        %2276 = vmatprep.subr.mxu0 0.0
        %2277 = vmatpush2.msra.mxu0 0.0
        %2278 = vmatprep.subr.mxu0 0.0
        %2279 = vmatpush2.msra.mxu0 0.0
        %2280 = vmatprep.mubr.f32.mxu0 0.0
        %2281 = vmatmul.mubr.f32.gmra.mxu0 %v2121
        %v2282 = vpop.f32.mrf.mxu0
        %v2283 = vadd.f32 %v2119, %v2282
        %v2284 = vpop.f32.mrf.mxu0
        %2285 = vmatprep.mubr.f32.mxu0 0.0
        %2286 = vmatmul.mubr.f32.gmra.mxu0 %v2124
        %v2287 = vpop.f32.mrf.mxu0
        %v2288 = vadd.f32 %v2119, %v2287
        %v2289 = vpop.f32.mrf.mxu0
        %2290 = vmatprep.mubr.f32.mxu0 0.0
        %2291 = vmatmul.mubr.f32.gmra.mxu0 %v2127
        %v2292 = vpop.f32.mrf.mxu0
        %v2293 = vadd.f32 %v2119, %v2292
        %v2294 = vpop.f32.mrf.mxu0
        %2295 = vmatprep.mubr.f32.mxu0 0.0
        %2296 = vmatmul.mubr.f32.gmra.mxu0 %v2130
        %v2297 = vpop.f32.mrf.mxu0
        %v2298 = vadd.f32 %v2119, %v2297
        %v2299 = vpop.f32.mrf.mxu0
        %2300 = vmatprep.mubr.f32.mxu0 0.0
        %2301 = vmatmul.mubr.f32.gmra.mxu0 %v2133
        %v2302 = vpop.f32.mrf.mxu0
        %v2303 = vadd.f32 %v2119, %v2302
        %v2304 = vpop.f32.mrf.mxu0
        %2305 = vmatprep.mubr.f32.mxu0 0.0
        %2306 = vmatmul.mubr.f32.gmra.mxu0 %v2136
        %v2307 = vpop.f32.mrf.mxu0
        %v2308 = vpop.f32.mrf.mxu0
        %2309 = vmatprep.mubr.f32.mxu0 0.0
        %2310 = vmatmul.mubr.f32.gmra.mxu0 %v2139
        %v2311 = vpop.f32.mrf.mxu0
        %v2312 = vpop.f32.mrf.mxu0
        %2313 = vmatprep.mubr.f32.mxu0 0.0
        %2314 = vmatmul.mubr.f32.gmra.mxu0 %v2142
        %v2315 = vpop.f32.mrf.mxu0
        %v2316 = vpop.f32.mrf.mxu0
        %2317 = vmatprep.mubr.f32.mxu0 0.0
        %2318 = vmatmul.mubr.f32.gmra.mxu0 %v2145
        %v2319 = vpop.f32.mrf.mxu0
        %v2320 = vadd.f32 %v2119, %v2319
        %v2321 = vpop.f32.mrf.mxu0
        %2322 = vmatprep.mubr.f32.mxu0 0.0
        %2323 = vmatmul.mubr.f32.gmra.mxu0 %v2148
        %v2324 = vpop.f32.mrf.mxu0
        %v2325 = vadd.f32 %v2119, %v2324
        %v2326 = vpop.f32.mrf.mxu0
        %2327 = vmatprep.mubr.f32.mxu0 0.0
        %2328 = vmatmul.mubr.f32.gmra.mxu0 %v2151
        %v2329 = vpop.f32.mrf.mxu0
        %v2330 = vadd.f32 %v2119, %v2329
        %v2331 = vpop.f32.mrf.mxu0
        %2332 = vmatprep.mubr.f32.mxu0 0.0
        %2333 = vmatmul.mubr.f32.gmra.mxu0 %v2154
        %v2334 = vpop.f32.mrf.mxu0
        %v2335 = vadd.f32 %v2119, %v2334
        %v2336 = vpop.f32.mrf.mxu0
        %2337 = vmatprep.mubr.f32.mxu0 0.0
        %2338 = vmatmul.mubr.f32.gmra.mxu0 %v2157
        %v2339 = vpop.f32.mrf.mxu0
        %v2340 = vadd.f32 %v2119, %v2339
        %v2341 = vpop.f32.mrf.mxu0
        %2342 = vmatprep.mubr.f32.mxu0 0.0
        %2343 = vmatmul.mubr.f32.gmra.mxu0 %v2160
        %v2344 = vpop.f32.mrf.mxu0
        %v2345 = vpop.f32.mrf.mxu0
        %2346 = vmatprep.mubr.f32.mxu0 0.0
        %2347 = vmatmul.mubr.f32.gmra.mxu0 %v2163
        %v2348 = vpop.f32.mrf.mxu0
        %v2349 = vpop.f32.mrf.mxu0
        %2350 = vmatprep.mubr.f32.mxu0 0.0
        %2351 = vmatmul.mubr.f32.gmra.mxu0 %v2166
        %v2352 = vpop.f32.mrf.mxu0
        %v2353 = vpop.f32.mrf.mxu0
        %2354 = vmatprep.mubr.f32.mxu0 0.0
        %2355 = vmatmul.mubr.f32.gmra.mxu0 %v2169
        %v2356 = vpop.f32.mrf.mxu0
        %v2357 = vadd.f32 %v2119, %v2356
        %v2358 = vpop.f32.mrf.mxu0
        %2359 = vmatprep.mubr.f32.mxu0 0.0
        %2360 = vmatmul.mubr.f32.gmra.mxu0 %v2172
        %v2361 = vpop.f32.mrf.mxu0
        %v2362 = vadd.f32 %v2119, %v2361
        %v2363 = vpop.f32.mrf.mxu0
        %2364 = vmatprep.mubr.f32.mxu0 0.0
        %2365 = vmatmul.mubr.f32.gmra.mxu0 %v2175
        %v2366 = vpop.f32.mrf.mxu0
        %v2367 = vadd.f32 %v2119, %v2366
        %v2368 = vpop.f32.mrf.mxu0
        %2369 = vmatprep.mubr.f32.mxu0 0.0
        %2370 = vmatmul.mubr.f32.gmra.mxu0 %v2178
        %v2371 = vpop.f32.mrf.mxu0
        %v2372 = vadd.f32 %v2119, %v2371
        %v2373 = vpop.f32.mrf.mxu0
        %2374 = vmatprep.mubr.f32.mxu0 0.0
        %2375 = vmatmul.mubr.f32.gmra.mxu0 %v2181
        %v2376 = vpop.f32.mrf.mxu0
        %v2377 = vadd.f32 %v2119, %v2376
        %v2378 = vpop.f32.mrf.mxu0
        %2379 = vmatprep.mubr.f32.mxu0 0.0
        %2380 = vmatmul.mubr.f32.gmra.mxu0 %v2184
        %v2381 = vpop.f32.mrf.mxu0
        %v2382 = vpop.f32.mrf.mxu0
        %2383 = vmatprep.mubr.f32.mxu0 0.0
        %2384 = vmatmul.mubr.f32.gmra.mxu0 %v2187
        %v2385 = vpop.f32.mrf.mxu0
        %v2386 = vpop.f32.mrf.mxu0
        %2387 = vmatprep.mubr.f32.mxu0 0.0
        %2388 = vmatmul.mubr.f32.gmra.mxu0 %v2190
        %v2389 = vpop.f32.mrf.mxu0
        %v2390 = vpop.f32.mrf.mxu0
        %2391 = vmatprep.mubr.f32.mxu0 0.0
        %2392 = vmatmul.mubr.f32.gmra.mxu0 %v2193
        %v2393 = vpop.f32.mrf.mxu0
        %v2394 = vadd.f32 %v2119, %v2393
        %v2395 = vpop.f32.mrf.mxu0
        %2396 = vmatprep.mubr.f32.mxu0 0.0
        %2397 = vmatmul.mubr.f32.gmra.mxu0 %v2196
        %v2398 = vpop.f32.mrf.mxu0
        %v2399 = vadd.f32 %v2119, %v2398
        %v2400 = vpop.f32.mrf.mxu0
        %2401 = vmatprep.mubr.f32.mxu0 0.0
        %2402 = vmatmul.mubr.f32.gmra.mxu0 %v2199
        %v2403 = vpop.f32.mrf.mxu0
        %v2404 = vadd.f32 %v2119, %v2403
        %v2405 = vpop.f32.mrf.mxu0
        %2406 = vmatprep.mubr.f32.mxu0 0.0
        %2407 = vmatmul.mubr.f32.gmra.mxu0 %v2202
        %v2408 = vpop.f32.mrf.mxu0
        %v2409 = vadd.f32 %v2119, %v2408
        %v2410 = vpop.f32.mrf.mxu0
        %2411 = vmatprep.mubr.f32.mxu0 0.0
        %2412 = vmatmul.mubr.f32.gmra.mxu0 %v2205
        %v2413 = vpop.f32.mrf.mxu0
        %v2414 = vadd.f32 %v2119, %v2413
        %v2415 = vpop.f32.mrf.mxu0
        %2416 = vmatprep.mubr.f32.mxu0 0.0
        %2417 = vmatmul.mubr.f32.gmra.mxu0 %v2208
        %v2418 = vpop.f32.mrf.mxu0
        %v2419 = vpop.f32.mrf.mxu0
        %2420 = vmatprep.mubr.f32.mxu0 0.0
        %2421 = vmatmul.mubr.f32.gmra.mxu0 %v2211
        %v2422 = vpop.f32.mrf.mxu0
        %v2423 = vpop.f32.mrf.mxu0
        %2424 = vmatprep.mubr.f32.mxu0 0.0
        %2425 = vmatmul.mubr.f32.gmra.mxu0 %v2214
        %v2426 = vpop.f32.mrf.mxu0
        %v2427 = vpop.f32.mrf.mxu0
        %2428 = vdwg.mxu0
        %v2429 = vsel %vm623, %v2283, -inf
        %v2430 = vsel %vm623, %v2288, -inf
        %v2431 = vmax.f32 %v2429, %v2430
        %v2432 = vsel %vm623, %v2293, -inf
        %v2433 = vmax.f32 %v2431, %v2432
        %v2434 = vsel %vm623, %v2298, -inf
        %v2435 = vmax.f32 %v2433, %v2434
        %v2436 = vsel %vm623, %v2303, -inf
        %v2437 = vmax.f32 %v2435, %v2436
        %v2438 = vsel %vm623, %v2320, -inf
        %v2439 = vsel %vm623, %v2325, -inf
        %v2440 = vmax.f32 %v2438, %v2439
        %v2441 = vsel %vm623, %v2330, -inf
        %v2442 = vmax.f32 %v2440, %v2441
        %v2443 = vsel %vm623, %v2335, -inf
        %v2444 = vmax.f32 %v2442, %v2443
        %v2445 = vsel %vm623, %v2340, -inf
        %v2446 = vmax.f32 %v2444, %v2445
        %v2447 = vsel %vm623, %v2357, -inf
        %v2448 = vsel %vm623, %v2362, -inf
        %v2449 = vmax.f32 %v2447, %v2448
        %v2450 = vsel %vm623, %v2367, -inf
        %v2451 = vmax.f32 %v2449, %v2450
        %v2452 = vsel %vm623, %v2372, -inf
        %v2453 = vmax.f32 %v2451, %v2452
        %v2454 = vsel %vm623, %v2377, -inf
        %v2455 = vmax.f32 %v2453, %v2454
        %v2456 = vsel %vm623, %v2394, -inf
        %v2457 = vsel %vm623, %v2399, -inf
        %v2458 = vmax.f32 %v2456, %v2457
        %v2459 = vsel %vm623, %v2404, -inf
        %v2460 = vmax.f32 %v2458, %v2459
        %v2461 = vsel %vm623, %v2409, -inf
        %v2462 = vmax.f32 %v2460, %v2461
        %v2463 = vsel %vm623, %v2414, -inf
        %v2464 = vmax.f32 %v2462, %v2463
        %v2465 = vlaneseq
        %v2466 = vshrl.u32 %v2465, 7
        %v2467 = vsub.s32 7, %v2466
        %v2468 = vrot.slane %v621, %v2467
        %v2470 = vsel %vm623, %v2437, 0
        %v2473 = vsel %vm623, %v2446, 0
        %v2476 = vsel %vm623, %v2455, 0
        %v2479 = vsel %vm623, %v2464, 0
        %2481 = vmatprep.subr.mxu0 0.0
        %2482 = vmatpush1.msra.mxu0 0.0
        %2483 = vmatprep.subr.mxu0 0.0
        %2484 = vmatpush1.msra.mxu0 0.0
        %2485 = vmatprep.subr.mxu0 0.0
        %2486 = vmatpush1.msra.mxu0 0.0
        %2487 = vmatprep.subr.mxu0 0.0
        %2488 = vmatpush1.msra.mxu0 0.0
        %2489 = vmatprep.subr.mxu0 0.0
        %2490 = vmatpush1.msra.mxu0 0.0
        %2491 = vmatprep.subr.mxu0 0.0
        %2492 = vmatpush1.msra.mxu0 0.0
        %2493 = vmatprep.subr.mxu0 0.0
        %2494 = vmatpush1.msra.mxu0 0.0
        %2495 = vmatprep.subr.mxu0 0.0
        %2496 = vmatpush1.msra.mxu0 0.0
        %2497 = vmatprep.subr.mxu0 0.0
        %2498 = vmatpush1.msra.mxu0 0.0
        %2499 = vmatprep.subr.mxu0 0.0
        %2500 = vmatpush1.msra.mxu0 0.0
        %2501 = vmatprep.subr.mxu0 0.0
        %2502 = vmatpush1.msra.mxu0 0.0
        %2503 = vmatprep.subr.mxu0 0.0
        %2504 = vmatpush1.msra.mxu0 0.0
        %2505 = vmatprep.subr.mxu0 0.0
        %2506 = vmatpush1.msra.mxu0 %v620
        %2507 = vmatprep.subr.mxu0 0.0
        %2508 = vmatpush1.msra.mxu0 %v619
        %2509 = vmatprep.subr.mxu0 0.0
        %2510 = vmatpush1.msra.mxu0 %v618
        %2511 = vmatprep.subr.mxu0 0.0
        %2512 = vmatpush1.msra.mxu0 %v617
        %2513 = vmatprep.subr.mxu0 0.0
        %2514 = vmatpush2.msra.mxu0 0.0
        %2515 = vmatprep.subr.mxu0 0.0
        %2516 = vmatpush2.msra.mxu0 0.0
        %2517 = vmatprep.subr.mxu0 0.0
        %2518 = vmatpush2.msra.mxu0 0.0
        %2519 = vmatprep.subr.mxu0 0.0
        %2520 = vmatpush2.msra.mxu0 0.0
        %2521 = vmatprep.subr.mxu0 0.0
        %2522 = vmatpush2.msra.mxu0 0.0
        %2523 = vmatprep.subr.mxu0 0.0
        %2524 = vmatpush2.msra.mxu0 0.0
        %2525 = vmatprep.subr.mxu0 0.0
        %2526 = vmatpush2.msra.mxu0 0.0
        %2527 = vmatprep.subr.mxu0 0.0
        %2528 = vmatpush2.msra.mxu0 0.0
        %2529 = vmatprep.subr.mxu0 0.0
        %2530 = vmatpush2.msra.mxu0 0.0
        %2531 = vmatprep.subr.mxu0 0.0
        %2532 = vmatpush2.msra.mxu0 0.0
        %2533 = vmatprep.subr.mxu0 0.0
        %2534 = vmatpush2.msra.mxu0 0.0
        %2535 = vmatprep.subr.mxu0 0.0
        %2536 = vmatpush2.msra.mxu0 0.0
        %2537 = vmatprep.subr.mxu0 0.0
        %2538 = vmatpush2.msra.mxu0 0.0
        %2539 = vmatprep.subr.mxu0 0.0
        %2540 = vmatpush2.msra.mxu0 0.0
        %2541 = vmatprep.subr.mxu0 0.0
        %2542 = vmatpush2.msra.mxu0 0.0
        %2543 = vmatprep.subr.mxu0 0.0
        %2544 = vmatpush2.msra.mxu0 0.0
        %2545 = vmatprep.mubr.f32.mxu0 0.0
        %2546 = vmatmul.mubr.f32.gmra.mxu0 %v2470
        %v2547 = vpop.f32.mrf.mxu0
        %v2548 = vadd.f32 %v2468, %v2547
        %v2549 = vpop.f32.mrf.mxu0
        %2550 = vmatprep.mubr.f32.mxu0 0.0
        %2551 = vmatmul.mubr.f32.gmra.mxu0 %v2473
        %v2552 = vpop.f32.mrf.mxu0
        %v2553 = vadd.f32 %v2468, %v2552
        %v2554 = vpop.f32.mrf.mxu0
        %2555 = vmatprep.mubr.f32.mxu0 0.0
        %2556 = vmatmul.mubr.f32.gmra.mxu0 %v2476
        %v2557 = vpop.f32.mrf.mxu0
        %v2558 = vadd.f32 %v2468, %v2557
        %v2559 = vpop.f32.mrf.mxu0
        %2560 = vmatprep.mubr.f32.mxu0 0.0
        %2561 = vmatmul.mubr.f32.gmra.mxu0 %v2479
        %v2562 = vpop.f32.mrf.mxu0
        %v2563 = vadd.f32 %v2468, %v2562
        %v2564 = vpop.f32.mrf.mxu0
        %2565 = vdwg.mxu0
        %2570 = vrot.lane.b32.xlu0 %v2548, 64
        %v2571 = vpop.permute.xlu0 %2570
        %2572 = vrot.lane.b32.xlu0 %v2553, 64
        %v2573 = vpop.permute.xlu0 %2572
        %2574 = vrot.lane.b32.xlu0 %v2558, 64
        %v2575 = vpop.permute.xlu0 %2574
        %2576 = vrot.lane.b32.xlu0 %v2563, 64
        %v2577 = vpop.permute.xlu0 %2576
        %v2582 = vadd.f32 %v749, %v2571
        %v2583 = vadd.f32 %v750, %v2573
        %v2584 = vadd.f32 %v751, %v2575
        %v2585 = vadd.f32 %v752, %v2577
        %v2586 = vmax.f32 %v2582, 0.0
        %v2587 = vmax.f32 %v2583, 0.0
        %v2588 = vmax.f32 %v2584, 0.0
        %v2589 = vmax.f32 %v2585, 0.0
        %2594 = vrot.lane.b32.xlu0 %v2586, 64
        %v2595 = vpop.permute.xlu0 %2594
        %2596 = vrot.lane.b32.xlu0 %v2587, 64
        %v2597 = vpop.permute.xlu0 %2596
        %2598 = vrot.lane.b32.xlu0 %v2588, 64
        %v2599 = vpop.permute.xlu0 %2598
        %2600 = vrot.lane.b32.xlu0 %v2589, 64
        %v2601 = vpop.permute.xlu0 %2600
        %v2606 = vsel %vm623, %v2595, 0.0
        %2607 = vadd.xlane.f32.xlu0 %v2606
        %v2608 = vpop.xlane.xlu0 %2607
        %v2609 = vsel %vm623, %v2597, 0.0
        %2610 = vadd.xlane.f32.xlu0 %v2609
        %v2611 = vpop.xlane.xlu0 %2610
        %v2612 = vsel %vm623, %v2599, 0.0
        %2613 = vadd.xlane.f32.xlu0 %v2612
        %v2614 = vpop.xlane.xlu0 %2613
        %v2615 = vsel %vm623, %v2601, 0.0
        %2616 = vadd.xlane.f32.xlu0 %v2615
        %v2617 = vpop.xlane.xlu0 %2616
        %v2618 = vrcp.pop 32.0
        %v2619 = vmul.f32 %v2608, %v2618
        %v2620 = vmul.f32 %v2611, %v2618
        %v2621 = vmul.f32 %v2614, %v2618
        %v2622 = vmul.f32 %v2617, %v2618
        %v2623 = vsub.f32 %v2586, %v2619
        %v2624 = vsub.f32 %v2587, %v2620
        %v2625 = vsub.f32 %v2588, %v2621
        %v2626 = vsub.f32 %v2589, %v2622
        %v2627 = vmul.f32 %v2623, %v2623
        %v2628 = vmul.f32 %v2624, %v2624
        %v2629 = vmul.f32 %v2625, %v2625
        %v2630 = vmul.f32 %v2626, %v2626
        %2635 = vrot.lane.b32.xlu0 %v2627, 64
        %v2636 = vpop.permute.xlu0 %2635
        %2637 = vrot.lane.b32.xlu0 %v2628, 64
        %v2638 = vpop.permute.xlu0 %2637
        %2639 = vrot.lane.b32.xlu0 %v2629, 64
        %v2640 = vpop.permute.xlu0 %2639
        %2641 = vrot.lane.b32.xlu0 %v2630, 64
        %v2642 = vpop.permute.xlu0 %2641
        %v2647 = vsel %vm623, %v2636, 0.0
        %2648 = vadd.xlane.f32.xlu0 %v2647
        %v2649 = vpop.xlane.xlu0 %2648
        %v2650 = vsel %vm623, %v2638, 0.0
        %2651 = vadd.xlane.f32.xlu0 %v2650
        %v2652 = vpop.xlane.xlu0 %2651
        %v2653 = vsel %vm623, %v2640, 0.0
        %2654 = vadd.xlane.f32.xlu0 %v2653
        %v2655 = vpop.xlane.xlu0 %2654
        %v2656 = vsel %vm623, %v2642, 0.0
        %2657 = vadd.xlane.f32.xlu0 %v2656
        %v2658 = vpop.xlane.xlu0 %2657
        %v2659 = vmul.f32 %v2649, %v2618
        %v2660 = vmul.f32 %v2652, %v2618
        %v2661 = vmul.f32 %v2655, %v2618
        %v2662 = vmul.f32 %v2658, %v2618
        %v2663 = vadd.f32 %v2659, 1e-05
        %v2664 = vadd.f32 %v2660, 1e-05
        %v2665 = vadd.f32 %v2661, 1e-05
        %v2666 = vadd.f32 %v2662, 1e-05
        %v2667 = vrsqrt.pop %v2663
        %v2668 = vrsqrt.pop %v2664
        %v2669 = vrsqrt.pop %v2665
        %v2670 = vrsqrt.pop %v2666
        %v2671 = vmul.f32 %v2623, %v2667
        %v2672 = vmul.f32 %v2624, %v2668
        %v2673 = vmul.f32 %v2625, %v2669
        %v2674 = vmul.f32 %v2626, %v2670
        %v2675 = vlaneseq
        %v2676 = vshrl.u32 %v2675, 7
        %v2677 = vsub.s32 0, %v2676
        %v2678 = vrot.slane %v622, %v2677
        %2680 = vrot.lane.b32.xlu0 %v2678, 64
        %v2681 = vpop.permute.xlu0 %2680
        %v2683 = vmul.f32 %v2671, %v2681
        %v2684 = vmul.f32 %v2672, %v2681
        %v2685 = vmul.f32 %v2673, %v2681
        %v2686 = vmul.f32 %v2674, %v2681
        %v2687 = vlaneseq
        %v2688 = vshrl.u32 %v2687, 7
        %v2689 = vsub.s32 1, %v2688
        %v2690 = vrot.slane %v622, %v2689
        %2692 = vrot.lane.b32.xlu0 %v2690, 64
        %v2693 = vpop.permute.xlu0 %2692
        %v2695 = vadd.f32 %v2683, %v2693
        %v2696 = vadd.f32 %v2684, %v2693
        %v2697 = vadd.f32 %v2685, %v2693
        %v2698 = vadd.f32 %v2686, %v2693
        %s2699 = scalar_lea.vmem [#allocation6], 32
        %v2700 = vld [vmem:[%s2699] sm:$0xff]
        %v2701 = vld [vmem:[%s2699 + $0x8] sm:$0xff]
        %v2702 = vld [vmem:[%s2699 + $0x10] sm:$0xff]
        %v2703 = vld [vmem:[%s2699 + $0x18] sm:$0xff]
        %s2704 = scalar_lea.vmem [#allocation7], 32
        %v2705 = vld [vmem:[%s2704] sm:$0xff]
        %v2706 = vld [vmem:[%s2704 + $0x8] sm:$0xff]
        %v2707 = vld [vmem:[%s2704 + $0x10] sm:$0xff]
        %v2708 = vld [vmem:[%s2704 + $0x18] sm:$0xff]
        %s2709 = scalar_lea.vmem %s5, 16
        %v2710 = vld [vmem:[%s2709] sm:$0xf]
        %v2711 = vld [vmem:[%s2709 + $0x4] sm:$0xf]
        %v2712 = vld [vmem:[%s2709 + $0x8] sm:$0xf]
        %v2713 = vld [vmem:[%s2709 + $0xc] sm:$0xf]
        %s2714 = scalar_lea.vmem [#allocation9], 128
        %v2715 = vld [vmem:[%s2714] sm:$0xff]
        %v2716 = vld [vmem:[%s2714 + $0x8] sm:$0xff]
        %v2717 = vld [vmem:[%s2714 + $0x10] sm:$0xff]
        %v2718 = vld [vmem:[%s2714 + $0x18] sm:$0xff]
        %v2719 = vld [vmem:[%s2714 + $0x20] sm:$0xff]
        %v2720 = vld [vmem:[%s2714 + $0x28] sm:$0xff]
        %v2721 = vld [vmem:[%s2714 + $0x30] sm:$0xff]
        %v2722 = vld [vmem:[%s2714 + $0x38] sm:$0xff]
        %v2723 = vld [vmem:[%s2714 + $0x40] sm:$0xff]
        %v2724 = vld [vmem:[%s2714 + $0x48] sm:$0xff]
        %v2725 = vld [vmem:[%s2714 + $0x50] sm:$0xff]
        %v2726 = vld [vmem:[%s2714 + $0x58] sm:$0xff]
        %v2727 = vld [vmem:[%s2714 + $0x60] sm:$0xff]
        %v2728 = vld [vmem:[%s2714 + $0x68] sm:$0xff]
        %v2729 = vld [vmem:[%s2714 + $0x70] sm:$0xff]
        %v2730 = vld [vmem:[%s2714 + $0x78] sm:$0xff]
        %s2731 = scalar_lea.vmem %s7, 16
        %v2732 = vld [vmem:[%s2731] sm:$0xff]
        %v2733 = vld [vmem:[%s2731 + $0x8] sm:$0x3]
        %2738 = vrot.lane.b32.xlu0 %v2695, 64
        %v2739 = vpop.permute.xlu0 %2738
        %2740 = vrot.lane.b32.xlu0 %v2696, 64
        %v2741 = vpop.permute.xlu0 %2740
        %2742 = vrot.lane.b32.xlu0 %v2697, 64
        %v2743 = vpop.permute.xlu0 %2742
        %2744 = vrot.lane.b32.xlu0 %v2698, 64
        %v2745 = vpop.permute.xlu0 %2744
        %v2746 = vsel %vm623, %v2739, 0
        %v2748 = vsel %vm623, %v2741, 0
        %v2750 = vsel %vm623, %v2743, 0
        %v2752 = vsel %vm623, %v2745, 0
        %2754 = vmatprep.subr.mxu0 0.0
        %2755 = vmatpush1.msra.mxu0 0.0
        %2756 = vmatprep.subr.mxu0 0.0
        %2757 = vmatpush1.msra.mxu0 0.0
        %2758 = vmatprep.subr.mxu0 0.0
        %2759 = vmatpush1.msra.mxu0 0.0
        %2760 = vmatprep.subr.mxu0 0.0
        %2761 = vmatpush1.msra.mxu0 0.0
        %2762 = vmatprep.subr.mxu0 0.0
        %2763 = vmatpush1.msra.mxu0 0.0
        %2764 = vmatprep.subr.mxu0 0.0
        %2765 = vmatpush1.msra.mxu0 0.0
        %2766 = vmatprep.subr.mxu0 0.0
        %2767 = vmatpush1.msra.mxu0 0.0
        %2768 = vmatprep.subr.mxu0 0.0
        %2769 = vmatpush1.msra.mxu0 0.0
        %2770 = vmatprep.subr.mxu0 0.0
        %2771 = vmatpush1.msra.mxu0 0.0
        %2772 = vmatprep.subr.mxu0 0.0
        %2773 = vmatpush1.msra.mxu0 0.0
        %2774 = vmatprep.subr.mxu0 0.0
        %2775 = vmatpush1.msra.mxu0 0.0
        %2776 = vmatprep.subr.mxu0 0.0
        %2777 = vmatpush1.msra.mxu0 0.0
        %2778 = vmatprep.subr.mxu0 0.0
        %2779 = vmatpush1.msra.mxu0 %v2708
        %2780 = vmatprep.subr.mxu0 0.0
        %2781 = vmatpush1.msra.mxu0 %v2707
        %2782 = vmatprep.subr.mxu0 0.0
        %2783 = vmatpush1.msra.mxu0 %v2706
        %2784 = vmatprep.subr.mxu0 0.0
        %2785 = vmatpush1.msra.mxu0 %v2705
        %2786 = vmatprep.subr.mxu0 0.0
        %2787 = vmatpush2.msra.mxu0 0.0
        %2788 = vmatprep.subr.mxu0 0.0
        %2789 = vmatpush2.msra.mxu0 0.0
        %2790 = vmatprep.subr.mxu0 0.0
        %2791 = vmatpush2.msra.mxu0 0.0
        %2792 = vmatprep.subr.mxu0 0.0
        %2793 = vmatpush2.msra.mxu0 0.0
        %2794 = vmatprep.subr.mxu0 0.0
        %2795 = vmatpush2.msra.mxu0 0.0
        %2796 = vmatprep.subr.mxu0 0.0
        %2797 = vmatpush2.msra.mxu0 0.0
        %2798 = vmatprep.subr.mxu0 0.0
        %2799 = vmatpush2.msra.mxu0 0.0
        %2800 = vmatprep.subr.mxu0 0.0
        %2801 = vmatpush2.msra.mxu0 0.0
        %2802 = vmatprep.subr.mxu0 0.0
        %2803 = vmatpush2.msra.mxu0 0.0
        %2804 = vmatprep.subr.mxu0 0.0
        %2805 = vmatpush2.msra.mxu0 0.0
        %2806 = vmatprep.subr.mxu0 0.0
        %2807 = vmatpush2.msra.mxu0 0.0
        %2808 = vmatprep.subr.mxu0 0.0
        %2809 = vmatpush2.msra.mxu0 0.0
        %2810 = vmatprep.subr.mxu0 0.0
        %2811 = vmatpush2.msra.mxu0 0.0
        %2812 = vmatprep.subr.mxu0 0.0
        %2813 = vmatpush2.msra.mxu0 0.0
        %2814 = vmatprep.subr.mxu0 0.0
        %2815 = vmatpush2.msra.mxu0 0.0
        %2816 = vmatprep.subr.mxu0 0.0
        %2817 = vmatpush2.msra.mxu0 0.0
        %2818 = vmatprep.mubr.f32.mxu0 0.0
        %2819 = vmatmul.mubr.f32.gmra.mxu0 %v2746
        %v2820 = vpop.f32.mrf.mxu0
        %v2821 = vadd.f32 0.0, %v2820
        %v2822 = vpop.f32.mrf.mxu0
        %2823 = vmatprep.mubr.f32.mxu0 0.0
        %2824 = vmatmul.mubr.f32.gmra.mxu0 %v2748
        %v2825 = vpop.f32.mrf.mxu0
        %v2826 = vadd.f32 0.0, %v2825
        %v2827 = vpop.f32.mrf.mxu0
        %2828 = vmatprep.mubr.f32.mxu0 0.0
        %2829 = vmatmul.mubr.f32.gmra.mxu0 %v2750
        %v2830 = vpop.f32.mrf.mxu0
        %v2831 = vadd.f32 0.0, %v2830
        %v2832 = vpop.f32.mrf.mxu0
        %2833 = vmatprep.mubr.f32.mxu0 0.0
        %2834 = vmatmul.mubr.f32.gmra.mxu0 %v2752
        %v2835 = vpop.f32.mrf.mxu0
        %v2836 = vadd.f32 0.0, %v2835
        %v2837 = vpop.f32.mrf.mxu0
        %2838 = vdwg.mxu0
        %2839 = vmatprep.subr.mxu0 0.0
        %2840 = vmatpush1.msra.mxu0 0.0
        %2841 = vmatprep.subr.mxu0 0.0
        %2842 = vmatpush1.msra.mxu0 0.0
        %2843 = vmatprep.subr.mxu0 0.0
        %2844 = vmatpush1.msra.mxu0 0.0
        %2845 = vmatprep.subr.mxu0 0.0
        %2846 = vmatpush1.msra.mxu0 0.0
        %2847 = vmatprep.subr.mxu0 0.0
        %2848 = vmatpush1.msra.mxu0 0.0
        %2849 = vmatprep.subr.mxu0 0.0
        %2850 = vmatpush1.msra.mxu0 0.0
        %2851 = vmatprep.subr.mxu0 0.0
        %2852 = vmatpush1.msra.mxu0 0.0
        %2853 = vmatprep.subr.mxu0 0.0
        %2854 = vmatpush1.msra.mxu0 0.0
        %2855 = vmatprep.subr.mxu0 0.0
        %2856 = vmatpush1.msra.mxu0 0.0
        %2857 = vmatprep.subr.mxu0 0.0
        %2858 = vmatpush1.msra.mxu0 0.0
        %2859 = vmatprep.subr.mxu0 0.0
        %2860 = vmatpush1.msra.mxu0 0.0
        %2861 = vmatprep.subr.mxu0 0.0
        %2862 = vmatpush1.msra.mxu0 0.0
        %2863 = vmatprep.subr.mxu0 0.0
        %2864 = vmatpush1.msra.mxu0 %v2703
        %2865 = vmatprep.subr.mxu0 0.0
        %2866 = vmatpush1.msra.mxu0 %v2702
        %2867 = vmatprep.subr.mxu0 0.0
        %2868 = vmatpush1.msra.mxu0 %v2701
        %2869 = vmatprep.subr.mxu0 0.0
        %2870 = vmatpush1.msra.mxu0 %v2700
        %2871 = vmatprep.subr.mxu0 0.0
        %2872 = vmatpush2.msra.mxu0 0.0
        %2873 = vmatprep.subr.mxu0 0.0
        %2874 = vmatpush2.msra.mxu0 0.0
        %2875 = vmatprep.subr.mxu0 0.0
        %2876 = vmatpush2.msra.mxu0 0.0
        %2877 = vmatprep.subr.mxu0 0.0
        %2878 = vmatpush2.msra.mxu0 0.0
        %2879 = vmatprep.subr.mxu0 0.0
        %2880 = vmatpush2.msra.mxu0 0.0
        %2881 = vmatprep.subr.mxu0 0.0
        %2882 = vmatpush2.msra.mxu0 0.0
        %2883 = vmatprep.subr.mxu0 0.0
        %2884 = vmatpush2.msra.mxu0 0.0
        %2885 = vmatprep.subr.mxu0 0.0
        %2886 = vmatpush2.msra.mxu0 0.0
        %2887 = vmatprep.subr.mxu0 0.0
        %2888 = vmatpush2.msra.mxu0 0.0
        %2889 = vmatprep.subr.mxu0 0.0
        %2890 = vmatpush2.msra.mxu0 0.0
        %2891 = vmatprep.subr.mxu0 0.0
        %2892 = vmatpush2.msra.mxu0 0.0
        %2893 = vmatprep.subr.mxu0 0.0
        %2894 = vmatpush2.msra.mxu0 0.0
        %2895 = vmatprep.subr.mxu0 0.0
        %2896 = vmatpush2.msra.mxu0 0.0
        %2897 = vmatprep.subr.mxu0 0.0
        %2898 = vmatpush2.msra.mxu0 0.0
        %2899 = vmatprep.subr.mxu0 0.0
        %2900 = vmatpush2.msra.mxu0 0.0
        %2901 = vmatprep.subr.mxu0 0.0
        %2902 = vmatpush2.msra.mxu0 0.0
        %2903 = vmatprep.mubr.f32.mxu0 0.0
        %2904 = vmatmul.mubr.f32.gmra.mxu0 %v625
        %v2905 = vpop.f32.mrf.mxu0
        %v2906 = vadd.f32 %v2821, %v2905
        %v2907 = vpop.f32.mrf.mxu0
        %2908 = vmatprep.mubr.f32.mxu0 0.0
        %2909 = vmatmul.mubr.f32.gmra.mxu0 %v628
        %v2910 = vpop.f32.mrf.mxu0
        %v2911 = vadd.f32 %v2826, %v2910
        %v2912 = vpop.f32.mrf.mxu0
        %2913 = vmatprep.mubr.f32.mxu0 0.0
        %2914 = vmatmul.mubr.f32.gmra.mxu0 %v631
        %v2915 = vpop.f32.mrf.mxu0
        %v2916 = vadd.f32 %v2831, %v2915
        %v2917 = vpop.f32.mrf.mxu0
        %2918 = vmatprep.mubr.f32.mxu0 0.0
        %2919 = vmatmul.mubr.f32.gmra.mxu0 %v634
        %v2920 = vpop.f32.mrf.mxu0
        %v2921 = vadd.f32 %v2836, %v2920
        %v2922 = vpop.f32.mrf.mxu0
        %2923 = vdwg.mxu0
        %v2924 = vlaneseq
        %v2925 = vshrl.u32 %v2924, 7
        %v2926 = vsub.s32 0, %v2925
        %v2927 = vrot.slane %v2732, %v2926
        %v2928 = vadd.f32 %v2906, %v2927
        %v2929 = vadd.f32 %v2911, %v2927
        %v2930 = vadd.f32 %v2916, %v2927
        %v2931 = vadd.f32 %v2921, %v2927
        %v2932 = vlaneseq
        %v2933 = vshrl.u32 %v2932, 7
        %v2934 = vsub.s32 1, %v2933
        %v2935 = vrot.slane %v2732, %v2934
        %2937 = vrot.lane.b32.xlu0 %v2935, 32
        %v2938 = vpop.permute.xlu0 %2937
        %v2940 = vadd.f32 %v2906, %v2938
        %v2941 = vadd.f32 %v2911, %v2938
        %v2942 = vadd.f32 %v2916, %v2938
        %v2943 = vadd.f32 %v2921, %v2938
        %v2944 = vlaneseq
        %v2945 = vshrl.u32 %v2944, 7
        %v2946 = vsub.s32 2, %v2945
        %v2947 = vrot.slane %v2732, %v2946
        %2949 = vrot.lane.b32.xlu0 %v2947, 64
        %v2950 = vpop.permute.xlu0 %2949
        %v2952 = vadd.f32 %v2906, %v2950
        %v2953 = vadd.f32 %v2911, %v2950
        %v2954 = vadd.f32 %v2916, %v2950
        %v2955 = vadd.f32 %v2921, %v2950
        %v2956 = vlaneseq
        %v2957 = vshrl.u32 %v2956, 7
        %v2958 = vsub.s32 3, %v2957
        %v2959 = vrot.slane %v2732, %v2958
        %v2964 = vunpack.c.l.b16 %v2710
        %v2965 = vunpack.c.l.b16 %v2711
        %v2966 = vunpack.c.l.b16 %v2712
        %v2967 = vunpack.c.l.b16 %v2713
        %v2968 = vpack.c.b16 %v2965, %v2964
        %v2969 = vpack.c.b16 %v2967, %v2966
        %2972 = vmatprep.subr.bf16.mxu0 0
        %2973 = vmatpush1.bf16.msra.mxu0 0
        %2974 = vmatprep.subr.bf16.mxu0 0
        %2975 = vmatpush1.bf16.msra.mxu0 0
        %2976 = vmatprep.subr.bf16.mxu0 0
        %2977 = vmatpush1.bf16.msra.mxu0 0
        %2978 = vmatprep.subr.bf16.mxu0 0
        %2979 = vmatpush1.bf16.msra.mxu0 0
        %2980 = vmatprep.subr.bf16.mxu0 0
        %2981 = vmatpush1.bf16.msra.mxu0 0
        %2982 = vmatprep.subr.bf16.mxu0 0
        %2983 = vmatpush1.bf16.msra.mxu0 0
        %2984 = vmatprep.subr.bf16.mxu0 0
        %2985 = vmatpush1.bf16.msra.mxu0 %v2969
        %2986 = vmatprep.subr.bf16.mxu0 0
        %2987 = vmatpush1.bf16.msra.mxu0 %v2968
        %2988 = vmatprep.subr.bf16.mxu0 0
        %2989 = vmatpush2.bf16.msra.mxu0 0
        %2990 = vmatprep.subr.bf16.mxu0 0
        %2991 = vmatpush2.bf16.msra.mxu0 0
        %2992 = vmatprep.subr.bf16.mxu0 0
        %2993 = vmatpush2.bf16.msra.mxu0 0
        %2994 = vmatprep.subr.bf16.mxu0 0
        %2995 = vmatpush2.bf16.msra.mxu0 0
        %2996 = vmatprep.subr.bf16.mxu0 0
        %2997 = vmatpush2.bf16.msra.mxu0 0
        %2998 = vmatprep.subr.bf16.mxu0 0
        %2999 = vmatpush2.bf16.msra.mxu0 0
        %3000 = vmatprep.subr.bf16.mxu0 0
        %3001 = vmatpush2.bf16.msra.mxu0 0
        %3002 = vmatprep.subr.bf16.mxu0 0
        %3003 = vmatpush2.bf16.msra.mxu0 0
        %3004 = vmatprep.mubr.bf16.mxu0 0
        %3005 = vmatmul.mubr.bf16.gmra.mxu0 %v850
        %v3006 = vpop.f32.mrf.mxu0
        %v3007 = vadd.f32 %v2959, %v3006
        %v3008 = vpop.f32.mrf.mxu0
        %v3009 = vpop.f32.mrf.mxu0
        %v3010 = vadd.f32 %v2959, %v3009
        %v3011 = vpop.f32.mrf.mxu0
        %3012 = vmatprep.mubr.bf16.mxu0 0
        %3013 = vmatmul.mubr.bf16.gmra.mxu0 %v853
        %v3014 = vpop.f32.mrf.mxu0
        %v3015 = vadd.f32 %v2959, %v3014
        %v3016 = vpop.f32.mrf.mxu0
        %v3017 = vpop.f32.mrf.mxu0
        %v3018 = vadd.f32 %v2959, %v3017
        %v3019 = vpop.f32.mrf.mxu0
        %3020 = vmatprep.mubr.bf16.mxu0 0
        %3021 = vmatmul.mubr.bf16.gmra.mxu0 %v856
        %v3022 = vpop.f32.mrf.mxu0
        %v3023 = vadd.f32 %v2959, %v3022
        %v3024 = vpop.f32.mrf.mxu0
        %v3025 = vpop.f32.mrf.mxu0
        %v3026 = vadd.f32 %v2959, %v3025
        %v3027 = vpop.f32.mrf.mxu0
        %3028 = vmatprep.mubr.bf16.mxu0 0
        %3029 = vmatmul.mubr.bf16.gmra.mxu0 %v859
        %v3030 = vpop.f32.mrf.mxu0
        %v3031 = vadd.f32 %v2959, %v3030
        %v3032 = vpop.f32.mrf.mxu0
        %v3033 = vpop.f32.mrf.mxu0
        %v3034 = vadd.f32 %v2959, %v3033
        %v3035 = vpop.f32.mrf.mxu0
        %3036 = vmatprep.mubr.bf16.mxu0 0
        %3037 = vmatmul.mubr.bf16.gmra.mxu0 %v862
        %v3038 = vpop.f32.mrf.mxu0
        %v3039 = vadd.f32 %v2959, %v3038
        %v3040 = vpop.f32.mrf.mxu0
        %v3041 = vpop.f32.mrf.mxu0
        %v3042 = vadd.f32 %v2959, %v3041
        %v3043 = vpop.f32.mrf.mxu0
        %3044 = vmatprep.mubr.bf16.mxu0 0
        %3045 = vmatmul.mubr.bf16.gmra.mxu0 %v865
        %v3046 = vpop.f32.mrf.mxu0
        %v3047 = vadd.f32 %v2959, %v3046
        %v3048 = vpop.f32.mrf.mxu0
        %v3049 = vpop.f32.mrf.mxu0
        %v3050 = vadd.f32 %v2959, %v3049
        %v3051 = vpop.f32.mrf.mxu0
        %3052 = vmatprep.mubr.bf16.mxu0 0
        %3053 = vmatmul.mubr.bf16.gmra.mxu0 %v868
        %v3054 = vpop.f32.mrf.mxu0
        %v3055 = vadd.f32 %v2959, %v3054
        %v3056 = vpop.f32.mrf.mxu0
        %v3057 = vpop.f32.mrf.mxu0
        %v3058 = vadd.f32 %v2959, %v3057
        %v3059 = vpop.f32.mrf.mxu0
        %3060 = vmatprep.mubr.bf16.mxu0 0
        %3061 = vmatmul.mubr.bf16.gmra.mxu0 %v871
        %v3062 = vpop.f32.mrf.mxu0
        %v3063 = vadd.f32 %v2959, %v3062
        %v3064 = vpop.f32.mrf.mxu0
        %v3065 = vpop.f32.mrf.mxu0
        %v3066 = vadd.f32 %v2959, %v3065
        %v3067 = vpop.f32.mrf.mxu0
        %3068 = vmatprep.mubr.bf16.mxu0 0
        %3069 = vmatmul.mubr.bf16.gmra.mxu0 %v874
        %v3070 = vpop.f32.mrf.mxu0
        %v3071 = vadd.f32 %v2959, %v3070
        %v3072 = vpop.f32.mrf.mxu0
        %v3073 = vpop.f32.mrf.mxu0
        %v3074 = vadd.f32 %v2959, %v3073
        %v3075 = vpop.f32.mrf.mxu0
        %3076 = vmatprep.mubr.bf16.mxu0 0
        %3077 = vmatmul.mubr.bf16.gmra.mxu0 %v877
        %v3078 = vpop.f32.mrf.mxu0
        %v3079 = vadd.f32 %v2959, %v3078
        %v3080 = vpop.f32.mrf.mxu0
        %v3081 = vpop.f32.mrf.mxu0
        %v3082 = vadd.f32 %v2959, %v3081
        %v3083 = vpop.f32.mrf.mxu0
        %3084 = vmatprep.mubr.bf16.mxu0 0
        %3085 = vmatmul.mubr.bf16.gmra.mxu0 %v880
        %v3086 = vpop.f32.mrf.mxu0
        %v3087 = vadd.f32 %v2959, %v3086
        %v3088 = vpop.f32.mrf.mxu0
        %v3089 = vpop.f32.mrf.mxu0
        %v3090 = vadd.f32 %v2959, %v3089
        %v3091 = vpop.f32.mrf.mxu0
        %3092 = vmatprep.mubr.bf16.mxu0 0
        %3093 = vmatmul.mubr.bf16.gmra.mxu0 %v883
        %v3094 = vpop.f32.mrf.mxu0
        %v3095 = vadd.f32 %v2959, %v3094
        %v3096 = vpop.f32.mrf.mxu0
        %v3097 = vpop.f32.mrf.mxu0
        %v3098 = vadd.f32 %v2959, %v3097
        %v3099 = vpop.f32.mrf.mxu0
        %3100 = vmatprep.mubr.bf16.mxu0 0
        %3101 = vmatmul.mubr.bf16.gmra.mxu0 %v886
        %v3102 = vpop.f32.mrf.mxu0
        %v3103 = vadd.f32 %v2959, %v3102
        %v3104 = vpop.f32.mrf.mxu0
        %v3105 = vpop.f32.mrf.mxu0
        %v3106 = vadd.f32 %v2959, %v3105
        %v3107 = vpop.f32.mrf.mxu0
        %3108 = vmatprep.mubr.bf16.mxu0 0
        %3109 = vmatmul.mubr.bf16.gmra.mxu0 %v889
        %v3110 = vpop.f32.mrf.mxu0
        %v3111 = vadd.f32 %v2959, %v3110
        %v3112 = vpop.f32.mrf.mxu0
        %v3113 = vpop.f32.mrf.mxu0
        %v3114 = vadd.f32 %v2959, %v3113
        %v3115 = vpop.f32.mrf.mxu0
        %3116 = vmatprep.mubr.bf16.mxu0 0
        %3117 = vmatmul.mubr.bf16.gmra.mxu0 %v892
        %v3118 = vpop.f32.mrf.mxu0
        %v3119 = vadd.f32 %v2959, %v3118
        %v3120 = vpop.f32.mrf.mxu0
        %v3121 = vpop.f32.mrf.mxu0
        %v3122 = vadd.f32 %v2959, %v3121
        %v3123 = vpop.f32.mrf.mxu0
        %3124 = vmatprep.mubr.bf16.mxu0 0
        %3125 = vmatmul.mubr.bf16.gmra.mxu0 %v895
        %v3126 = vpop.f32.mrf.mxu0
        %v3127 = vadd.f32 %v2959, %v3126
        %v3128 = vpop.f32.mrf.mxu0
        %v3129 = vpop.f32.mrf.mxu0
        %v3130 = vadd.f32 %v2959, %v3129
        %v3131 = vpop.f32.mrf.mxu0
        %3132 = vdwg.mxu0
        %v3133 = vlaneseq
        %v3134 = vshrl.u32 %v3133, 7
        %v3135 = vsub.s32 4, %v3134
        %v3136 = vrot.slane %v2732, %v3135
        %3137 = vmatprep.subr.mxu0 0.0
        %3138 = vmatpush1.msra.mxu0 0.0
        %3139 = vmatprep.subr.mxu0 0.0
        %3140 = vmatpush1.msra.mxu0 0.0
        %3141 = vmatprep.subr.mxu0 0.0
        %3142 = vmatpush1.msra.mxu0 0.0
        %3143 = vmatprep.subr.mxu0 0.0
        %3144 = vmatpush1.msra.mxu0 0.0
        %3145 = vmatprep.subr.mxu0 0.0
        %3146 = vmatpush1.msra.mxu0 0.0
        %3147 = vmatprep.subr.mxu0 0.0
        %3148 = vmatpush1.msra.mxu0 0.0
        %3149 = vmatprep.subr.mxu0 0.0
        %3150 = vmatpush1.msra.mxu0 0.0
        %3151 = vmatprep.subr.mxu0 0.0
        %3152 = vmatpush1.msra.mxu0 0.0
        %3153 = vmatprep.subr.mxu0 0.0
        %3154 = vmatpush1.msra.mxu0 0.0
        %3155 = vmatprep.subr.mxu0 0.0
        %3156 = vmatpush1.msra.mxu0 0.0
        %3157 = vmatprep.subr.mxu0 0.0
        %3158 = vmatpush1.msra.mxu0 0.0
        %3159 = vmatprep.subr.mxu0 0.0
        %3160 = vmatpush1.msra.mxu0 0.0
        %3161 = vmatprep.subr.mxu0 0.0
        %3162 = vmatpush1.msra.mxu0 %v2718
        %3163 = vmatprep.subr.mxu0 0.0
        %3164 = vmatpush1.msra.mxu0 %v2717
        %3165 = vmatprep.subr.mxu0 0.0
        %3166 = vmatpush1.msra.mxu0 %v2716
        %3167 = vmatprep.subr.mxu0 0.0
        %3168 = vmatpush1.msra.mxu0 %v2715
        %3169 = vmatprep.subr.mxu0 0.0
        %3170 = vmatpush2.msra.mxu0 0.0
        %3171 = vmatprep.subr.mxu0 0.0
        %3172 = vmatpush2.msra.mxu0 0.0
        %3173 = vmatprep.subr.mxu0 0.0
        %3174 = vmatpush2.msra.mxu0 0.0
        %3175 = vmatprep.subr.mxu0 0.0
        %3176 = vmatpush2.msra.mxu0 0.0
        %3177 = vmatprep.subr.mxu0 0.0
        %3178 = vmatpush2.msra.mxu0 0.0
        %3179 = vmatprep.subr.mxu0 0.0
        %3180 = vmatpush2.msra.mxu0 0.0
        %3181 = vmatprep.subr.mxu0 0.0
        %3182 = vmatpush2.msra.mxu0 0.0
        %3183 = vmatprep.subr.mxu0 0.0
        %3184 = vmatpush2.msra.mxu0 0.0
        %3185 = vmatprep.subr.mxu0 0.0
        %3186 = vmatpush2.msra.mxu0 0.0
        %3187 = vmatprep.subr.mxu0 0.0
        %3188 = vmatpush2.msra.mxu0 0.0
        %3189 = vmatprep.subr.mxu0 0.0
        %3190 = vmatpush2.msra.mxu0 0.0
        %3191 = vmatprep.subr.mxu0 0.0
        %3192 = vmatpush2.msra.mxu0 0.0
        %3193 = vmatprep.subr.mxu0 0.0
        %3194 = vmatpush2.msra.mxu0 0.0
        %3195 = vmatprep.subr.mxu0 0.0
        %3196 = vmatpush2.msra.mxu0 0.0
        %3197 = vmatprep.subr.mxu0 0.0
        %3198 = vmatpush2.msra.mxu0 0.0
        %3199 = vmatprep.subr.mxu0 0.0
        %3200 = vmatpush2.msra.mxu0 0.0
        %3201 = vmatprep.mubr.f32.mxu0 0.0
        %3202 = vmatmul.mubr.f32.gmra.mxu0 %v1090
        %v3203 = vpop.f32.mrf.mxu0
        %v3204 = vadd.f32 %v3136, %v3203
        %v3205 = vpop.f32.mrf.mxu0
        %3206 = vdwg.mxu0
        %v3211 = vcombine.high %v2940, %v2940
        %v3213 = vunpack.c.l.s4 1966171168
        %v3214 = vunpack.c.0.s8 %v3213
        %v3215 = vlaneseq
        %v3216 = vshrl.u32 %v3215, 7
        %v3217 = vsub.s32 %v3214, %v3216
        %v3218 = vrot.slane %v2940, %v3217
        %v3220 = vunpack.c.l.s4 1966171168
        %v3221 = vunpack.c.0.s8 %v3220
        %v3222 = vlaneseq
        %v3223 = vshrl.u32 %v3222, 7
        %v3224 = vsub.s32 %v3221, %v3223
        %v3225 = vrot.slane %v3211, %v3224
        %v3226 = vcombine.high %v3218, %v3218
        %v3227 = vcombine.high %v3225, %v3225
        %v3229 = vunpack.c.l.s4 1966171168
        %v3230 = vunpack.c.0.s8 %v3229
        %v3231 = vlaneseq
        %v3232 = vshrl.u32 %v3231, 7
        %v3233 = vsub.s32 %v3230, %v3232
        %v3234 = vrot.slane %v3218, %v3233
        %v3236 = vunpack.c.l.s4 1966171168
        %v3237 = vunpack.c.0.s8 %v3236
        %v3238 = vlaneseq
        %v3239 = vshrl.u32 %v3238, 7
        %v3240 = vsub.s32 %v3237, %v3239
        %v3241 = vrot.slane %v3225, %v3240
        %v3243 = vunpack.c.l.s4 1966171168
        %v3244 = vunpack.c.0.s8 %v3243
        %v3245 = vlaneseq
        %v3246 = vshrl.u32 %v3245, 7
        %v3247 = vsub.s32 %v3244, %v3246
        %v3248 = vrot.slane %v3226, %v3247
        %v3250 = vunpack.c.l.s4 1966171168
        %v3251 = vunpack.c.0.s8 %v3250
        %v3252 = vlaneseq
        %v3253 = vshrl.u32 %v3252, 7
        %v3254 = vsub.s32 %v3251, %v3253
        %v3255 = vrot.slane %v3227, %v3254
        %v3256 = vcombine.high %v3234, %v3234
        %v3257 = vcombine.high %v3241, %v3241
        %v3258 = vcombine.high %v3248, %v3248
        %v3259 = vcombine.high %v3255, %v3255
        %v3260 = vcombine.high %v2941, %v2941
        %v3262 = vunpack.c.l.s4 1966171168
        %v3263 = vunpack.c.0.s8 %v3262
        %v3264 = vlaneseq
        %v3265 = vshrl.u32 %v3264, 7
        %v3266 = vsub.s32 %v3263, %v3265
        %v3267 = vrot.slane %v2941, %v3266
        %v3269 = vunpack.c.l.s4 1966171168
        %v3270 = vunpack.c.0.s8 %v3269
        %v3271 = vlaneseq
        %v3272 = vshrl.u32 %v3271, 7
        %v3273 = vsub.s32 %v3270, %v3272
        %v3274 = vrot.slane %v3260, %v3273
        %v3275 = vcombine.high %v3267, %v3267
        %v3276 = vcombine.high %v3274, %v3274
        %v3278 = vunpack.c.l.s4 1966171168
        %v3279 = vunpack.c.0.s8 %v3278
        %v3280 = vlaneseq
        %v3281 = vshrl.u32 %v3280, 7
        %v3282 = vsub.s32 %v3279, %v3281
        %v3283 = vrot.slane %v3267, %v3282
        %v3285 = vunpack.c.l.s4 1966171168
        %v3286 = vunpack.c.0.s8 %v3285
        %v3287 = vlaneseq
        %v3288 = vshrl.u32 %v3287, 7
        %v3289 = vsub.s32 %v3286, %v3288
        %v3290 = vrot.slane %v3274, %v3289
        %v3292 = vunpack.c.l.s4 1966171168
        %v3293 = vunpack.c.0.s8 %v3292
        %v3294 = vlaneseq
        %v3295 = vshrl.u32 %v3294, 7
        %v3296 = vsub.s32 %v3293, %v3295
        %v3297 = vrot.slane %v3275, %v3296
        %v3299 = vunpack.c.l.s4 1966171168
        %v3300 = vunpack.c.0.s8 %v3299
        %v3301 = vlaneseq
        %v3302 = vshrl.u32 %v3301, 7
        %v3303 = vsub.s32 %v3300, %v3302
        %v3304 = vrot.slane %v3276, %v3303
        %v3305 = vcombine.high %v3283, %v3283
        %v3306 = vcombine.high %v3290, %v3290
        %v3307 = vcombine.high %v3297, %v3297
        %v3308 = vcombine.high %v3304, %v3304
        %v3309 = vcombine.high %v2942, %v2942
        %v3311 = vunpack.c.l.s4 1966171168
        %v3312 = vunpack.c.0.s8 %v3311
        %v3313 = vlaneseq
        %v3314 = vshrl.u32 %v3313, 7
        %v3315 = vsub.s32 %v3312, %v3314
        %v3316 = vrot.slane %v2942, %v3315
        %v3318 = vunpack.c.l.s4 1966171168
        %v3319 = vunpack.c.0.s8 %v3318
        %v3320 = vlaneseq
        %v3321 = vshrl.u32 %v3320, 7
        %v3322 = vsub.s32 %v3319, %v3321
        %v3323 = vrot.slane %v3309, %v3322
        %v3324 = vcombine.high %v3316, %v3316
        %v3325 = vcombine.high %v3323, %v3323
        %v3327 = vunpack.c.l.s4 1966171168
        %v3328 = vunpack.c.0.s8 %v3327
        %v3329 = vlaneseq
        %v3330 = vshrl.u32 %v3329, 7
        %v3331 = vsub.s32 %v3328, %v3330
        %v3332 = vrot.slane %v3316, %v3331
        %v3334 = vunpack.c.l.s4 1966171168
        %v3335 = vunpack.c.0.s8 %v3334
        %v3336 = vlaneseq
        %v3337 = vshrl.u32 %v3336, 7
        %v3338 = vsub.s32 %v3335, %v3337
        %v3339 = vrot.slane %v3323, %v3338
        %v3341 = vunpack.c.l.s4 1966171168
        %v3342 = vunpack.c.0.s8 %v3341
        %v3343 = vlaneseq
        %v3344 = vshrl.u32 %v3343, 7
        %v3345 = vsub.s32 %v3342, %v3344
        %v3346 = vrot.slane %v3324, %v3345
        %v3348 = vunpack.c.l.s4 1966171168
        %v3349 = vunpack.c.0.s8 %v3348
        %v3350 = vlaneseq
        %v3351 = vshrl.u32 %v3350, 7
        %v3352 = vsub.s32 %v3349, %v3351
        %v3353 = vrot.slane %v3325, %v3352
        %v3354 = vcombine.high %v3332, %v3332
        %v3355 = vcombine.high %v3339, %v3339
        %v3356 = vcombine.high %v3346, %v3346
        %v3357 = vcombine.high %v3353, %v3353
        %v3358 = vcombine.high %v2943, %v2943
        %v3360 = vunpack.c.l.s4 1966171168
        %v3361 = vunpack.c.0.s8 %v3360
        %v3362 = vlaneseq
        %v3363 = vshrl.u32 %v3362, 7
        %v3364 = vsub.s32 %v3361, %v3363
        %v3365 = vrot.slane %v2943, %v3364
        %v3367 = vunpack.c.l.s4 1966171168
        %v3368 = vunpack.c.0.s8 %v3367
        %v3369 = vlaneseq
        %v3370 = vshrl.u32 %v3369, 7
        %v3371 = vsub.s32 %v3368, %v3370
        %v3372 = vrot.slane %v3358, %v3371
        %v3373 = vcombine.high %v3365, %v3365
        %v3374 = vcombine.high %v3372, %v3372
        %v3376 = vunpack.c.l.s4 1966171168
        %v3377 = vunpack.c.0.s8 %v3376
        %v3378 = vlaneseq
        %v3379 = vshrl.u32 %v3378, 7
        %v3380 = vsub.s32 %v3377, %v3379
        %v3381 = vrot.slane %v3365, %v3380
        %v3383 = vunpack.c.l.s4 1966171168
        %v3384 = vunpack.c.0.s8 %v3383
        %v3385 = vlaneseq
        %v3386 = vshrl.u32 %v3385, 7
        %v3387 = vsub.s32 %v3384, %v3386
        %v3388 = vrot.slane %v3372, %v3387
        %v3390 = vunpack.c.l.s4 1966171168
        %v3391 = vunpack.c.0.s8 %v3390
        %v3392 = vlaneseq
        %v3393 = vshrl.u32 %v3392, 7
        %v3394 = vsub.s32 %v3391, %v3393
        %v3395 = vrot.slane %v3373, %v3394
        %v3397 = vunpack.c.l.s4 1966171168
        %v3398 = vunpack.c.0.s8 %v3397
        %v3399 = vlaneseq
        %v3400 = vshrl.u32 %v3399, 7
        %v3401 = vsub.s32 %v3398, %v3400
        %v3402 = vrot.slane %v3374, %v3401
        %v3403 = vcombine.high %v3381, %v3381
        %v3404 = vcombine.high %v3388, %v3388
        %v3405 = vcombine.high %v3395, %v3395
        %v3406 = vcombine.high %v3402, %v3402
        %v3407 = vlaneseq
        %v3408 = vshrl.u32 %v3407, 7
        %v3409 = vsub.s32 0, %v3408
        %v3410 = vrot.slane %v3234, %v3409
        %v3411 = vlaneseq
        %v3412 = vshrl.u32 %v3411, 7
        %v3413 = vsub.s32 0, %v3412
        %v3414 = vrot.slane %v3248, %v3413
        %v3415 = vlaneseq
        %v3416 = vshrl.u32 %v3415, 7
        %v3417 = vsub.s32 0, %v3416
        %v3418 = vrot.slane %v3256, %v3417
        %v3419 = vlaneseq
        %v3420 = vshrl.u32 %v3419, 7
        %v3421 = vsub.s32 0, %v3420
        %v3422 = vrot.slane %v3258, %v3421
        %v3423 = vlaneseq
        %v3424 = vshrl.u32 %v3423, 7
        %v3425 = vsub.s32 0, %v3424
        %v3426 = vrot.slane %v3241, %v3425
        %v3427 = vlaneseq
        %v3428 = vshrl.u32 %v3427, 7
        %v3429 = vsub.s32 0, %v3428
        %v3430 = vrot.slane %v3255, %v3429
        %v3431 = vlaneseq
        %v3432 = vshrl.u32 %v3431, 7
        %v3433 = vsub.s32 0, %v3432
        %v3434 = vrot.slane %v3257, %v3433
        %v3435 = vlaneseq
        %v3436 = vshrl.u32 %v3435, 7
        %v3437 = vsub.s32 0, %v3436
        %v3438 = vrot.slane %v3259, %v3437
        %v3439 = vlaneseq
        %v3440 = vshrl.u32 %v3439, 7
        %v3441 = vsub.s32 0, %v3440
        %v3442 = vrot.slane %v3283, %v3441
        %v3443 = vlaneseq
        %v3444 = vshrl.u32 %v3443, 7
        %v3445 = vsub.s32 0, %v3444
        %v3446 = vrot.slane %v3297, %v3445
        %v3447 = vlaneseq
        %v3448 = vshrl.u32 %v3447, 7
        %v3449 = vsub.s32 0, %v3448
        %v3450 = vrot.slane %v3305, %v3449
        %v3451 = vlaneseq
        %v3452 = vshrl.u32 %v3451, 7
        %v3453 = vsub.s32 0, %v3452
        %v3454 = vrot.slane %v3307, %v3453
        %v3455 = vlaneseq
        %v3456 = vshrl.u32 %v3455, 7
        %v3457 = vsub.s32 0, %v3456
        %v3458 = vrot.slane %v3290, %v3457
        %v3459 = vlaneseq
        %v3460 = vshrl.u32 %v3459, 7
        %v3461 = vsub.s32 0, %v3460
        %v3462 = vrot.slane %v3304, %v3461
        %v3463 = vlaneseq
        %v3464 = vshrl.u32 %v3463, 7
        %v3465 = vsub.s32 0, %v3464
        %v3466 = vrot.slane %v3306, %v3465
        %v3467 = vlaneseq
        %v3468 = vshrl.u32 %v3467, 7
        %v3469 = vsub.s32 0, %v3468
        %v3470 = vrot.slane %v3308, %v3469
        %v3471 = vlaneseq
        %v3472 = vshrl.u32 %v3471, 7
        %v3473 = vsub.s32 0, %v3472
        %v3474 = vrot.slane %v3332, %v3473
        %v3475 = vlaneseq
        %v3476 = vshrl.u32 %v3475, 7
        %v3477 = vsub.s32 0, %v3476
        %v3478 = vrot.slane %v3346, %v3477
        %v3479 = vlaneseq
        %v3480 = vshrl.u32 %v3479, 7
        %v3481 = vsub.s32 0, %v3480
        %v3482 = vrot.slane %v3354, %v3481
        %v3483 = vlaneseq
        %v3484 = vshrl.u32 %v3483, 7
        %v3485 = vsub.s32 0, %v3484
        %v3486 = vrot.slane %v3356, %v3485
        %v3487 = vlaneseq
        %v3488 = vshrl.u32 %v3487, 7
        %v3489 = vsub.s32 0, %v3488
        %v3490 = vrot.slane %v3339, %v3489
        %v3491 = vlaneseq
        %v3492 = vshrl.u32 %v3491, 7
        %v3493 = vsub.s32 0, %v3492
        %v3494 = vrot.slane %v3353, %v3493
        %v3495 = vlaneseq
        %v3496 = vshrl.u32 %v3495, 7
        %v3497 = vsub.s32 0, %v3496
        %v3498 = vrot.slane %v3355, %v3497
        %v3499 = vlaneseq
        %v3500 = vshrl.u32 %v3499, 7
        %v3501 = vsub.s32 0, %v3500
        %v3502 = vrot.slane %v3357, %v3501
        %v3503 = vlaneseq
        %v3504 = vshrl.u32 %v3503, 7
        %v3505 = vsub.s32 0, %v3504
        %v3506 = vrot.slane %v3381, %v3505
        %v3507 = vlaneseq
        %v3508 = vshrl.u32 %v3507, 7
        %v3509 = vsub.s32 0, %v3508
        %v3510 = vrot.slane %v3395, %v3509
        %v3511 = vlaneseq
        %v3512 = vshrl.u32 %v3511, 7
        %v3513 = vsub.s32 0, %v3512
        %v3514 = vrot.slane %v3403, %v3513
        %v3515 = vlaneseq
        %v3516 = vshrl.u32 %v3515, 7
        %v3517 = vsub.s32 0, %v3516
        %v3518 = vrot.slane %v3405, %v3517
        %v3519 = vlaneseq
        %v3520 = vshrl.u32 %v3519, 7
        %v3521 = vsub.s32 0, %v3520
        %v3522 = vrot.slane %v3388, %v3521
        %v3523 = vlaneseq
        %v3524 = vshrl.u32 %v3523, 7
        %v3525 = vsub.s32 0, %v3524
        %v3526 = vrot.slane %v3402, %v3525
        %v3527 = vlaneseq
        %v3528 = vshrl.u32 %v3527, 7
        %v3529 = vsub.s32 0, %v3528
        %v3530 = vrot.slane %v3404, %v3529
        %v3531 = vlaneseq
        %v3532 = vshrl.u32 %v3531, 7
        %v3533 = vsub.s32 0, %v3532
        %v3534 = vrot.slane %v3406, %v3533
        %3535 = vrot.lane.b32.xlu0 %v3410, 96
        %v3536 = vpop.permute.xlu0 %3535
        %3537 = vrot.lane.b32.xlu0 %v3414, 96
        %v3538 = vpop.permute.xlu0 %3537
        %3539 = vrot.lane.b32.xlu0 %v3418, 96
        %v3540 = vpop.permute.xlu0 %3539
        %3541 = vrot.lane.b32.xlu0 %v3422, 96
        %v3542 = vpop.permute.xlu0 %3541
        %3543 = vrot.lane.b32.xlu0 %v3426, 96
        %v3544 = vpop.permute.xlu0 %3543
        %3545 = vrot.lane.b32.xlu0 %v3430, 96
        %v3546 = vpop.permute.xlu0 %3545
        %3547 = vrot.lane.b32.xlu0 %v3434, 96
        %v3548 = vpop.permute.xlu0 %3547
        %3549 = vrot.lane.b32.xlu0 %v3438, 96
        %v3550 = vpop.permute.xlu0 %3549
        %3551 = vrot.lane.b32.xlu0 %v3442, 96
        %v3552 = vpop.permute.xlu0 %3551
        %3553 = vrot.lane.b32.xlu0 %v3446, 96
        %v3554 = vpop.permute.xlu0 %3553
        %3555 = vrot.lane.b32.xlu0 %v3450, 96
        %v3556 = vpop.permute.xlu0 %3555
        %3557 = vrot.lane.b32.xlu0 %v3454, 96
        %v3558 = vpop.permute.xlu0 %3557
        %3559 = vrot.lane.b32.xlu0 %v3458, 96
        %v3560 = vpop.permute.xlu0 %3559
        %3561 = vrot.lane.b32.xlu0 %v3462, 96
        %v3562 = vpop.permute.xlu0 %3561
        %3563 = vrot.lane.b32.xlu0 %v3466, 96
        %v3564 = vpop.permute.xlu0 %3563
        %3565 = vrot.lane.b32.xlu0 %v3470, 96
        %v3566 = vpop.permute.xlu0 %3565
        %3567 = vrot.lane.b32.xlu0 %v3474, 96
        %v3568 = vpop.permute.xlu0 %3567
        %3569 = vrot.lane.b32.xlu0 %v3478, 96
        %v3570 = vpop.permute.xlu0 %3569
        %3571 = vrot.lane.b32.xlu0 %v3482, 96
        %v3572 = vpop.permute.xlu0 %3571
        %3573 = vrot.lane.b32.xlu0 %v3486, 96
        %v3574 = vpop.permute.xlu0 %3573
        %3575 = vrot.lane.b32.xlu0 %v3490, 96
        %v3576 = vpop.permute.xlu0 %3575
        %3577 = vrot.lane.b32.xlu0 %v3494, 96
        %v3578 = vpop.permute.xlu0 %3577
        %3579 = vrot.lane.b32.xlu0 %v3498, 96
        %v3580 = vpop.permute.xlu0 %3579
        %3581 = vrot.lane.b32.xlu0 %v3502, 96
        %v3582 = vpop.permute.xlu0 %3581
        %3583 = vrot.lane.b32.xlu0 %v3506, 96
        %v3584 = vpop.permute.xlu0 %3583
        %3585 = vrot.lane.b32.xlu0 %v3510, 96
        %v3586 = vpop.permute.xlu0 %3585
        %3587 = vrot.lane.b32.xlu0 %v3514, 96
        %v3588 = vpop.permute.xlu0 %3587
        %3589 = vrot.lane.b32.xlu0 %v3518, 96
        %v3590 = vpop.permute.xlu0 %3589
        %3591 = vrot.lane.b32.xlu0 %v3522, 96
        %v3592 = vpop.permute.xlu0 %3591
        %3593 = vrot.lane.b32.xlu0 %v3526, 96
        %v3594 = vpop.permute.xlu0 %3593
        %3595 = vrot.lane.b32.xlu0 %v3530, 96
        %v3596 = vpop.permute.xlu0 %3595
        %3597 = vrot.lane.b32.xlu0 %v3534, 96
        %v3598 = vpop.permute.xlu0 %3597
        %v3631 = vadd.f32 %v2928, %v3536
        %v3632 = vadd.f32 %v2928, %v3538
        %v3633 = vadd.f32 %v2928, %v3540
        %v3634 = vadd.f32 %v2928, %v3542
        %v3635 = vadd.f32 %v2928, %v3544
        %v3636 = vadd.f32 %v2928, %v3546
        %v3637 = vadd.f32 %v2928, %v3548
        %v3638 = vadd.f32 %v2928, %v3550
        %v3639 = vadd.f32 %v2929, %v3552
        %v3640 = vadd.f32 %v2929, %v3554
        %v3641 = vadd.f32 %v2929, %v3556
        %v3642 = vadd.f32 %v2929, %v3558
        %v3643 = vadd.f32 %v2929, %v3560
        %v3644 = vadd.f32 %v2929, %v3562
        %v3645 = vadd.f32 %v2929, %v3564
        %v3646 = vadd.f32 %v2929, %v3566
        %v3647 = vadd.f32 %v2930, %v3568
        %v3648 = vadd.f32 %v2930, %v3570
        %v3649 = vadd.f32 %v2930, %v3572
        %v3650 = vadd.f32 %v2930, %v3574
        %v3651 = vadd.f32 %v2930, %v3576
        %v3652 = vadd.f32 %v2930, %v3578
        %v3653 = vadd.f32 %v2930, %v3580
        %v3654 = vadd.f32 %v2930, %v3582
        %v3655 = vadd.f32 %v2931, %v3584
        %v3656 = vadd.f32 %v2931, %v3586
        %v3657 = vadd.f32 %v2931, %v3588
        %v3658 = vadd.f32 %v2931, %v3590
        %v3659 = vadd.f32 %v2931, %v3592
        %v3660 = vadd.f32 %v2931, %v3594
        %v3661 = vadd.f32 %v2931, %v3596
        %v3662 = vadd.f32 %v2931, %v3598
        %v3663 = vadd.f32 %v3631, %v3007
        %v3664 = vadd.f32 %v3632, %v3010
        %v3665 = vadd.f32 %v3633, %v3015
        %v3666 = vadd.f32 %v3634, %v3018
        %v3667 = vadd.f32 %v3635, %v3023
        %v3668 = vadd.f32 %v3636, %v3026
        %v3669 = vadd.f32 %v3637, %v3031
        %v3670 = vadd.f32 %v3638, %v3034
        %v3671 = vadd.f32 %v3639, %v3039
        %v3672 = vadd.f32 %v3640, %v3042
        %v3673 = vadd.f32 %v3641, %v3047
        %v3674 = vadd.f32 %v3642, %v3050
        %v3675 = vadd.f32 %v3643, %v3055
        %v3676 = vadd.f32 %v3644, %v3058
        %v3677 = vadd.f32 %v3645, %v3063
        %v3678 = vadd.f32 %v3646, %v3066
        %v3679 = vadd.f32 %v3647, %v3071
        %v3680 = vadd.f32 %v3648, %v3074
        %v3681 = vadd.f32 %v3649, %v3079
        %v3682 = vadd.f32 %v3650, %v3082
        %v3683 = vadd.f32 %v3651, %v3087
        %v3684 = vadd.f32 %v3652, %v3090
        %v3685 = vadd.f32 %v3653, %v3095
        %v3686 = vadd.f32 %v3654, %v3098
        %v3687 = vadd.f32 %v3655, %v3103
        %v3688 = vadd.f32 %v3656, %v3106
        %v3689 = vadd.f32 %v3657, %v3111
        %v3690 = vadd.f32 %v3658, %v3114
        %v3691 = vadd.f32 %v3659, %v3119
        %v3692 = vadd.f32 %v3660, %v3122
        %v3693 = vadd.f32 %v3661, %v3127
        %v3694 = vadd.f32 %v3662, %v3130
        %v3697 = vunpack.c.l.s4 1966171168
        %v3698 = vunpack.c.0.s8 %v3697
        %v3699 = vlaneseq
        %v3700 = vshrl.u32 %v3699, 7
        %v3701 = vsub.s32 %v3698, %v3700
        %v3702 = vrot.slane %v3204, %v3701
        %v3703 = vcombine.high %v3702, %v3702
        %v3705 = vunpack.c.l.s4 1966171168
        %v3706 = vunpack.c.0.s8 %v3705
        %v3707 = vlaneseq
        %v3708 = vshrl.u32 %v3707, 7
        %v3709 = vsub.s32 %v3706, %v3708
        %v3710 = vrot.slane %v3702, %v3709
        %v3712 = vunpack.c.l.s4 1966171168
        %v3713 = vunpack.c.0.s8 %v3712
        %v3714 = vlaneseq
        %v3715 = vshrl.u32 %v3714, 7
        %v3716 = vsub.s32 %v3713, %v3715
        %v3717 = vrot.slane %v3703, %v3716
        %v3718 = vcombine.high %v3710, %v3710
        %v3719 = vcombine.high %v3717, %v3717
        %v3720 = vlaneseq
        %v3721 = vshrl.u32 %v3720, 7
        %v3722 = vsub.s32 0, %v3721
        %v3723 = vrot.slane %v3710, %v3722
        %v3724 = vlaneseq
        %v3725 = vshrl.u32 %v3724, 7
        %v3726 = vsub.s32 0, %v3725
        %v3727 = vrot.slane %v3717, %v3726
        %v3728 = vlaneseq
        %v3729 = vshrl.u32 %v3728, 7
        %v3730 = vsub.s32 0, %v3729
        %v3731 = vrot.slane %v3718, %v3730
        %v3732 = vlaneseq
        %v3733 = vshrl.u32 %v3732, 7
        %v3734 = vsub.s32 0, %v3733
        %v3735 = vrot.slane %v3719, %v3734
        %v3740 = vadd.f32 %v3663, %v3723
        %v3741 = vadd.f32 %v3664, %v3723
        %v3742 = vadd.f32 %v3665, %v3723
        %v3743 = vadd.f32 %v3666, %v3723
        %v3744 = vadd.f32 %v3667, %v3723
        %v3745 = vadd.f32 %v3668, %v3723
        %v3746 = vadd.f32 %v3669, %v3723
        %v3747 = vadd.f32 %v3670, %v3723
        %v3748 = vadd.f32 %v3671, %v3727
        %v3749 = vadd.f32 %v3672, %v3727
        %v3750 = vadd.f32 %v3673, %v3727
        %v3751 = vadd.f32 %v3674, %v3727
        %v3752 = vadd.f32 %v3675, %v3727
        %v3753 = vadd.f32 %v3676, %v3727
        %v3754 = vadd.f32 %v3677, %v3727
        %v3755 = vadd.f32 %v3678, %v3727
        %v3756 = vadd.f32 %v3679, %v3731
        %v3757 = vadd.f32 %v3680, %v3731
        %v3758 = vadd.f32 %v3681, %v3731
        %v3759 = vadd.f32 %v3682, %v3731
        %v3760 = vadd.f32 %v3683, %v3731
        %v3761 = vadd.f32 %v3684, %v3731
        %v3762 = vadd.f32 %v3685, %v3731
        %v3763 = vadd.f32 %v3686, %v3731
        %v3764 = vadd.f32 %v3687, %v3735
        %v3765 = vadd.f32 %v3688, %v3735
        %v3766 = vadd.f32 %v3689, %v3735
        %v3767 = vadd.f32 %v3690, %v3735
        %v3768 = vadd.f32 %v3691, %v3735
        %v3769 = vadd.f32 %v3692, %v3735
        %v3770 = vadd.f32 %v3693, %v3735
        %v3771 = vadd.f32 %v3694, %v3735
        %v3772 = vmax.f32 %v3740, 0.0
        %v3773 = vmax.f32 %v3741, 0.0
        %v3774 = vmax.f32 %v3742, 0.0
        %v3775 = vmax.f32 %v3743, 0.0
        %v3776 = vmax.f32 %v3744, 0.0
        %v3777 = vmax.f32 %v3745, 0.0
        %v3778 = vmax.f32 %v3746, 0.0
        %v3779 = vmax.f32 %v3747, 0.0
        %v3780 = vmax.f32 %v3748, 0.0
        %v3781 = vmax.f32 %v3749, 0.0
        %v3782 = vmax.f32 %v3750, 0.0
        %v3783 = vmax.f32 %v3751, 0.0
        %v3784 = vmax.f32 %v3752, 0.0
        %v3785 = vmax.f32 %v3753, 0.0
        %v3786 = vmax.f32 %v3754, 0.0
        %v3787 = vmax.f32 %v3755, 0.0
        %v3788 = vmax.f32 %v3756, 0.0
        %v3789 = vmax.f32 %v3757, 0.0
        %v3790 = vmax.f32 %v3758, 0.0
        %v3791 = vmax.f32 %v3759, 0.0
        %v3792 = vmax.f32 %v3760, 0.0
        %v3793 = vmax.f32 %v3761, 0.0
        %v3794 = vmax.f32 %v3762, 0.0
        %v3795 = vmax.f32 %v3763, 0.0
        %v3796 = vmax.f32 %v3764, 0.0
        %v3797 = vmax.f32 %v3765, 0.0
        %v3798 = vmax.f32 %v3766, 0.0
        %v3799 = vmax.f32 %v3767, 0.0
        %v3800 = vmax.f32 %v3768, 0.0
        %v3801 = vmax.f32 %v3769, 0.0
        %v3802 = vmax.f32 %v3770, 0.0
        %v3803 = vmax.f32 %v3771, 0.0
        %v3804 = vlaneseq
        %v3805 = vshrl.u32 %v3804, 7
        %v3806 = vsub.s32 5, %v3805
        %v3807 = vrot.slane %v2732, %v3806
        %v3809 = vsel %vm623, %v3772, 0
        %v3812 = vsel %vm623, %v3773, 0
        %v3815 = vsel %vm623, %v3774, 0
        %v3818 = vsel %vm623, %v3775, 0
        %v3821 = vsel %vm623, %v3776, 0
        %v3824 = vsel %vm623, %v3777, 0
        %v3827 = vsel %vm623, %v3778, 0
        %v3830 = vsel %vm623, %v3779, 0
        %v3833 = vsel %vm623, %v3780, 0
        %v3836 = vsel %vm623, %v3781, 0
        %v3839 = vsel %vm623, %v3782, 0
        %v3842 = vsel %vm623, %v3783, 0
        %v3845 = vsel %vm623, %v3784, 0
        %v3848 = vsel %vm623, %v3785, 0
        %v3851 = vsel %vm623, %v3786, 0
        %v3854 = vsel %vm623, %v3787, 0
        %v3857 = vsel %vm623, %v3788, 0
        %v3860 = vsel %vm623, %v3789, 0
        %v3863 = vsel %vm623, %v3790, 0
        %v3866 = vsel %vm623, %v3791, 0
        %v3869 = vsel %vm623, %v3792, 0
        %v3872 = vsel %vm623, %v3793, 0
        %v3875 = vsel %vm623, %v3794, 0
        %v3878 = vsel %vm623, %v3795, 0
        %v3881 = vsel %vm623, %v3796, 0
        %v3884 = vsel %vm623, %v3797, 0
        %v3887 = vsel %vm623, %v3798, 0
        %v3890 = vsel %vm623, %v3799, 0
        %v3893 = vsel %vm623, %v3800, 0
        %v3896 = vsel %vm623, %v3801, 0
        %v3899 = vsel %vm623, %v3802, 0
        %v3902 = vsel %vm623, %v3803, 0
        %3904 = vmatprep.subr.mxu0 0.0
        %3905 = vmatpush1.msra.mxu0 0.0
        %3906 = vmatprep.subr.mxu0 0.0
        %3907 = vmatpush1.msra.mxu0 0.0
        %3908 = vmatprep.subr.mxu0 0.0
        %3909 = vmatpush1.msra.mxu0 0.0
        %3910 = vmatprep.subr.mxu0 0.0
        %3911 = vmatpush1.msra.mxu0 0.0
        %3912 = vmatprep.subr.mxu0 0.0
        %3913 = vmatpush1.msra.mxu0 0.0
        %3914 = vmatprep.subr.mxu0 0.0
        %3915 = vmatpush1.msra.mxu0 0.0
        %3916 = vmatprep.subr.mxu0 0.0
        %3917 = vmatpush1.msra.mxu0 0.0
        %3918 = vmatprep.subr.mxu0 0.0
        %3919 = vmatpush1.msra.mxu0 0.0
        %3920 = vmatprep.subr.mxu0 0.0
        %3921 = vmatpush1.msra.mxu0 0.0
        %3922 = vmatprep.subr.mxu0 0.0
        %3923 = vmatpush1.msra.mxu0 0.0
        %3924 = vmatprep.subr.mxu0 0.0
        %3925 = vmatpush1.msra.mxu0 0.0
        %3926 = vmatprep.subr.mxu0 0.0
        %3927 = vmatpush1.msra.mxu0 0.0
        %3928 = vmatprep.subr.mxu0 0.0
        %3929 = vmatpush1.msra.mxu0 %v2722
        %3930 = vmatprep.subr.mxu0 0.0
        %3931 = vmatpush1.msra.mxu0 %v2721
        %3932 = vmatprep.subr.mxu0 0.0
        %3933 = vmatpush1.msra.mxu0 %v2720
        %3934 = vmatprep.subr.mxu0 0.0
        %3935 = vmatpush1.msra.mxu0 %v2719
        %3936 = vmatprep.subr.mxu0 0.0
        %3937 = vmatpush2.msra.mxu0 0.0
        %3938 = vmatprep.subr.mxu0 0.0
        %3939 = vmatpush2.msra.mxu0 0.0
        %3940 = vmatprep.subr.mxu0 0.0
        %3941 = vmatpush2.msra.mxu0 0.0
        %3942 = vmatprep.subr.mxu0 0.0
        %3943 = vmatpush2.msra.mxu0 0.0
        %3944 = vmatprep.subr.mxu0 0.0
        %3945 = vmatpush2.msra.mxu0 0.0
        %3946 = vmatprep.subr.mxu0 0.0
        %3947 = vmatpush2.msra.mxu0 0.0
        %3948 = vmatprep.subr.mxu0 0.0
        %3949 = vmatpush2.msra.mxu0 0.0
        %3950 = vmatprep.subr.mxu0 0.0
        %3951 = vmatpush2.msra.mxu0 0.0
        %3952 = vmatprep.subr.mxu0 0.0
        %3953 = vmatpush2.msra.mxu0 0.0
        %3954 = vmatprep.subr.mxu0 0.0
        %3955 = vmatpush2.msra.mxu0 0.0
        %3956 = vmatprep.subr.mxu0 0.0
        %3957 = vmatpush2.msra.mxu0 0.0
        %3958 = vmatprep.subr.mxu0 0.0
        %3959 = vmatpush2.msra.mxu0 0.0
        %3960 = vmatprep.subr.mxu0 0.0
        %3961 = vmatpush2.msra.mxu0 0.0
        %3962 = vmatprep.subr.mxu0 0.0
        %3963 = vmatpush2.msra.mxu0 0.0
        %3964 = vmatprep.subr.mxu0 0.0
        %3965 = vmatpush2.msra.mxu0 0.0
        %3966 = vmatprep.subr.mxu0 0.0
        %3967 = vmatpush2.msra.mxu0 0.0
        %3968 = vmatprep.mubr.f32.mxu0 0.0
        %3969 = vmatmul.mubr.f32.gmra.mxu0 %v3809
        %v3970 = vpop.f32.mrf.mxu0
        %v3971 = vadd.f32 %v3807, %v3970
        %v3972 = vpop.f32.mrf.mxu0
        %3973 = vmatprep.mubr.f32.mxu0 0.0
        %3974 = vmatmul.mubr.f32.gmra.mxu0 %v3812
        %v3975 = vpop.f32.mrf.mxu0
        %v3976 = vadd.f32 %v3807, %v3975
        %v3977 = vpop.f32.mrf.mxu0
        %3978 = vmatprep.mubr.f32.mxu0 0.0
        %3979 = vmatmul.mubr.f32.gmra.mxu0 %v3815
        %v3980 = vpop.f32.mrf.mxu0
        %v3981 = vadd.f32 %v3807, %v3980
        %v3982 = vpop.f32.mrf.mxu0
        %3983 = vmatprep.mubr.f32.mxu0 0.0
        %3984 = vmatmul.mubr.f32.gmra.mxu0 %v3818
        %v3985 = vpop.f32.mrf.mxu0
        %v3986 = vadd.f32 %v3807, %v3985
        %v3987 = vpop.f32.mrf.mxu0
        %3988 = vmatprep.mubr.f32.mxu0 0.0
        %3989 = vmatmul.mubr.f32.gmra.mxu0 %v3821
        %v3990 = vpop.f32.mrf.mxu0
        %v3991 = vadd.f32 %v3807, %v3990
        %v3992 = vpop.f32.mrf.mxu0
        %3993 = vmatprep.mubr.f32.mxu0 0.0
        %3994 = vmatmul.mubr.f32.gmra.mxu0 %v3824
        %v3995 = vpop.f32.mrf.mxu0
        %v3996 = vadd.f32 %v3807, %v3995
        %v3997 = vpop.f32.mrf.mxu0
        %3998 = vmatprep.mubr.f32.mxu0 0.0
        %3999 = vmatmul.mubr.f32.gmra.mxu0 %v3827
        %v4000 = vpop.f32.mrf.mxu0
        %v4001 = vadd.f32 %v3807, %v4000
        %v4002 = vpop.f32.mrf.mxu0
        %4003 = vmatprep.mubr.f32.mxu0 0.0
        %4004 = vmatmul.mubr.f32.gmra.mxu0 %v3830
        %v4005 = vpop.f32.mrf.mxu0
        %v4006 = vadd.f32 %v3807, %v4005
        %v4007 = vpop.f32.mrf.mxu0
        %4008 = vmatprep.mubr.f32.mxu0 0.0
        %4009 = vmatmul.mubr.f32.gmra.mxu0 %v3833
        %v4010 = vpop.f32.mrf.mxu0
        %v4011 = vadd.f32 %v3807, %v4010
        %v4012 = vpop.f32.mrf.mxu0
        %4013 = vmatprep.mubr.f32.mxu0 0.0
        %4014 = vmatmul.mubr.f32.gmra.mxu0 %v3836
        %v4015 = vpop.f32.mrf.mxu0
        %v4016 = vadd.f32 %v3807, %v4015
        %v4017 = vpop.f32.mrf.mxu0
        %4018 = vmatprep.mubr.f32.mxu0 0.0
        %4019 = vmatmul.mubr.f32.gmra.mxu0 %v3839
        %v4020 = vpop.f32.mrf.mxu0
        %v4021 = vadd.f32 %v3807, %v4020
        %v4022 = vpop.f32.mrf.mxu0
        %4023 = vmatprep.mubr.f32.mxu0 0.0
        %4024 = vmatmul.mubr.f32.gmra.mxu0 %v3842
        %v4025 = vpop.f32.mrf.mxu0
        %v4026 = vadd.f32 %v3807, %v4025
        %v4027 = vpop.f32.mrf.mxu0
        %4028 = vmatprep.mubr.f32.mxu0 0.0
        %4029 = vmatmul.mubr.f32.gmra.mxu0 %v3845
        %v4030 = vpop.f32.mrf.mxu0
        %v4031 = vadd.f32 %v3807, %v4030
        %v4032 = vpop.f32.mrf.mxu0
        %4033 = vmatprep.mubr.f32.mxu0 0.0
        %4034 = vmatmul.mubr.f32.gmra.mxu0 %v3848
        %v4035 = vpop.f32.mrf.mxu0
        %v4036 = vadd.f32 %v3807, %v4035
        %v4037 = vpop.f32.mrf.mxu0
        %4038 = vmatprep.mubr.f32.mxu0 0.0
        %4039 = vmatmul.mubr.f32.gmra.mxu0 %v3851
        %v4040 = vpop.f32.mrf.mxu0
        %v4041 = vadd.f32 %v3807, %v4040
        %v4042 = vpop.f32.mrf.mxu0
        %4043 = vmatprep.mubr.f32.mxu0 0.0
        %4044 = vmatmul.mubr.f32.gmra.mxu0 %v3854
        %v4045 = vpop.f32.mrf.mxu0
        %v4046 = vadd.f32 %v3807, %v4045
        %v4047 = vpop.f32.mrf.mxu0
        %4048 = vmatprep.mubr.f32.mxu0 0.0
        %4049 = vmatmul.mubr.f32.gmra.mxu0 %v3857
        %v4050 = vpop.f32.mrf.mxu0
        %v4051 = vadd.f32 %v3807, %v4050
        %v4052 = vpop.f32.mrf.mxu0
        %4053 = vmatprep.mubr.f32.mxu0 0.0
        %4054 = vmatmul.mubr.f32.gmra.mxu0 %v3860
        %v4055 = vpop.f32.mrf.mxu0
        %v4056 = vadd.f32 %v3807, %v4055
        %v4057 = vpop.f32.mrf.mxu0
        %4058 = vmatprep.mubr.f32.mxu0 0.0
        %4059 = vmatmul.mubr.f32.gmra.mxu0 %v3863
        %v4060 = vpop.f32.mrf.mxu0
        %v4061 = vadd.f32 %v3807, %v4060
        %v4062 = vpop.f32.mrf.mxu0
        %4063 = vmatprep.mubr.f32.mxu0 0.0
        %4064 = vmatmul.mubr.f32.gmra.mxu0 %v3866
        %v4065 = vpop.f32.mrf.mxu0
        %v4066 = vadd.f32 %v3807, %v4065
        %v4067 = vpop.f32.mrf.mxu0
        %4068 = vmatprep.mubr.f32.mxu0 0.0
        %4069 = vmatmul.mubr.f32.gmra.mxu0 %v3869
        %v4070 = vpop.f32.mrf.mxu0
        %v4071 = vadd.f32 %v3807, %v4070
        %v4072 = vpop.f32.mrf.mxu0
        %4073 = vmatprep.mubr.f32.mxu0 0.0
        %4074 = vmatmul.mubr.f32.gmra.mxu0 %v3872
        %v4075 = vpop.f32.mrf.mxu0
        %v4076 = vadd.f32 %v3807, %v4075
        %v4077 = vpop.f32.mrf.mxu0
        %4078 = vmatprep.mubr.f32.mxu0 0.0
        %4079 = vmatmul.mubr.f32.gmra.mxu0 %v3875
        %v4080 = vpop.f32.mrf.mxu0
        %v4081 = vadd.f32 %v3807, %v4080
        %v4082 = vpop.f32.mrf.mxu0
        %4083 = vmatprep.mubr.f32.mxu0 0.0
        %4084 = vmatmul.mubr.f32.gmra.mxu0 %v3878
        %v4085 = vpop.f32.mrf.mxu0
        %v4086 = vadd.f32 %v3807, %v4085
        %v4087 = vpop.f32.mrf.mxu0
        %4088 = vmatprep.mubr.f32.mxu0 0.0
        %4089 = vmatmul.mubr.f32.gmra.mxu0 %v3881
        %v4090 = vpop.f32.mrf.mxu0
        %v4091 = vadd.f32 %v3807, %v4090
        %v4092 = vpop.f32.mrf.mxu0
        %4093 = vmatprep.mubr.f32.mxu0 0.0
        %4094 = vmatmul.mubr.f32.gmra.mxu0 %v3884
        %v4095 = vpop.f32.mrf.mxu0
        %v4096 = vadd.f32 %v3807, %v4095
        %v4097 = vpop.f32.mrf.mxu0
        %4098 = vmatprep.mubr.f32.mxu0 0.0
        %4099 = vmatmul.mubr.f32.gmra.mxu0 %v3887
        %v4100 = vpop.f32.mrf.mxu0
        %v4101 = vadd.f32 %v3807, %v4100
        %v4102 = vpop.f32.mrf.mxu0
        %4103 = vmatprep.mubr.f32.mxu0 0.0
        %4104 = vmatmul.mubr.f32.gmra.mxu0 %v3890
        %v4105 = vpop.f32.mrf.mxu0
        %v4106 = vadd.f32 %v3807, %v4105
        %v4107 = vpop.f32.mrf.mxu0
        %4108 = vmatprep.mubr.f32.mxu0 0.0
        %4109 = vmatmul.mubr.f32.gmra.mxu0 %v3893
        %v4110 = vpop.f32.mrf.mxu0
        %v4111 = vadd.f32 %v3807, %v4110
        %v4112 = vpop.f32.mrf.mxu0
        %4113 = vmatprep.mubr.f32.mxu0 0.0
        %4114 = vmatmul.mubr.f32.gmra.mxu0 %v3896
        %v4115 = vpop.f32.mrf.mxu0
        %v4116 = vadd.f32 %v3807, %v4115
        %v4117 = vpop.f32.mrf.mxu0
        %4118 = vmatprep.mubr.f32.mxu0 0.0
        %4119 = vmatmul.mubr.f32.gmra.mxu0 %v3899
        %v4120 = vpop.f32.mrf.mxu0
        %v4121 = vadd.f32 %v3807, %v4120
        %v4122 = vpop.f32.mrf.mxu0
        %4123 = vmatprep.mubr.f32.mxu0 0.0
        %4124 = vmatmul.mubr.f32.gmra.mxu0 %v3902
        %v4125 = vpop.f32.mrf.mxu0
        %v4126 = vadd.f32 %v3807, %v4125
        %v4127 = vpop.f32.mrf.mxu0
        %4128 = vdwg.mxu0
        %v4129 = vmax.f32 %v3971, 0.0
        %v4130 = vmax.f32 %v3976, 0.0
        %v4131 = vmax.f32 %v3981, 0.0
        %v4132 = vmax.f32 %v3986, 0.0
        %v4133 = vmax.f32 %v3991, 0.0
        %v4134 = vmax.f32 %v3996, 0.0
        %v4135 = vmax.f32 %v4001, 0.0
        %v4136 = vmax.f32 %v4006, 0.0
        %v4137 = vmax.f32 %v4011, 0.0
        %v4138 = vmax.f32 %v4016, 0.0
        %v4139 = vmax.f32 %v4021, 0.0
        %v4140 = vmax.f32 %v4026, 0.0
        %v4141 = vmax.f32 %v4031, 0.0
        %v4142 = vmax.f32 %v4036, 0.0
        %v4143 = vmax.f32 %v4041, 0.0
        %v4144 = vmax.f32 %v4046, 0.0
        %v4145 = vmax.f32 %v4051, 0.0
        %v4146 = vmax.f32 %v4056, 0.0
        %v4147 = vmax.f32 %v4061, 0.0
        %v4148 = vmax.f32 %v4066, 0.0
        %v4149 = vmax.f32 %v4071, 0.0
        %v4150 = vmax.f32 %v4076, 0.0
        %v4151 = vmax.f32 %v4081, 0.0
        %v4152 = vmax.f32 %v4086, 0.0
        %v4153 = vmax.f32 %v4091, 0.0
        %v4154 = vmax.f32 %v4096, 0.0
        %v4155 = vmax.f32 %v4101, 0.0
        %v4156 = vmax.f32 %v4106, 0.0
        %v4157 = vmax.f32 %v4111, 0.0
        %v4158 = vmax.f32 %v4116, 0.0
        %v4159 = vmax.f32 %v4121, 0.0
        %v4160 = vmax.f32 %v4126, 0.0
        %v4161 = vlaneseq
        %v4162 = vshrl.u32 %v4161, 7
        %v4163 = vsub.s32 6, %v4162
        %v4164 = vrot.slane %v2732, %v4163
        %v4166 = vsel %vm623, %v4129, 0
        %v4169 = vsel %vm623, %v4130, 0
        %v4172 = vsel %vm623, %v4131, 0
        %v4175 = vsel %vm623, %v4132, 0
        %v4178 = vsel %vm623, %v4133, 0
        %v4181 = vsel %vm623, %v4134, 0
        %v4184 = vsel %vm623, %v4135, 0
        %v4187 = vsel %vm623, %v4136, 0
        %v4190 = vsel %vm623, %v4137, 0
        %v4193 = vsel %vm623, %v4138, 0
        %v4196 = vsel %vm623, %v4139, 0
        %v4199 = vsel %vm623, %v4140, 0
        %v4202 = vsel %vm623, %v4141, 0
        %v4205 = vsel %vm623, %v4142, 0
        %v4208 = vsel %vm623, %v4143, 0
        %v4211 = vsel %vm623, %v4144, 0
        %v4214 = vsel %vm623, %v4145, 0
        %v4217 = vsel %vm623, %v4146, 0
        %v4220 = vsel %vm623, %v4147, 0
        %v4223 = vsel %vm623, %v4148, 0
        %v4226 = vsel %vm623, %v4149, 0
        %v4229 = vsel %vm623, %v4150, 0
        %v4232 = vsel %vm623, %v4151, 0
        %v4235 = vsel %vm623, %v4152, 0
        %v4238 = vsel %vm623, %v4153, 0
        %v4241 = vsel %vm623, %v4154, 0
        %v4244 = vsel %vm623, %v4155, 0
        %v4247 = vsel %vm623, %v4156, 0
        %v4250 = vsel %vm623, %v4157, 0
        %v4253 = vsel %vm623, %v4158, 0
        %v4256 = vsel %vm623, %v4159, 0
        %v4259 = vsel %vm623, %v4160, 0
        %4261 = vmatprep.subr.mxu0 0.0
        %4262 = vmatpush1.msra.mxu0 0.0
        %4263 = vmatprep.subr.mxu0 0.0
        %4264 = vmatpush1.msra.mxu0 0.0
        %4265 = vmatprep.subr.mxu0 0.0
        %4266 = vmatpush1.msra.mxu0 0.0
        %4267 = vmatprep.subr.mxu0 0.0
        %4268 = vmatpush1.msra.mxu0 0.0
        %4269 = vmatprep.subr.mxu0 0.0
        %4270 = vmatpush1.msra.mxu0 0.0
        %4271 = vmatprep.subr.mxu0 0.0
        %4272 = vmatpush1.msra.mxu0 0.0
        %4273 = vmatprep.subr.mxu0 0.0
        %4274 = vmatpush1.msra.mxu0 0.0
        %4275 = vmatprep.subr.mxu0 0.0
        %4276 = vmatpush1.msra.mxu0 0.0
        %4277 = vmatprep.subr.mxu0 0.0
        %4278 = vmatpush1.msra.mxu0 0.0
        %4279 = vmatprep.subr.mxu0 0.0
        %4280 = vmatpush1.msra.mxu0 0.0
        %4281 = vmatprep.subr.mxu0 0.0
        %4282 = vmatpush1.msra.mxu0 0.0
        %4283 = vmatprep.subr.mxu0 0.0
        %4284 = vmatpush1.msra.mxu0 0.0
        %4285 = vmatprep.subr.mxu0 0.0
        %4286 = vmatpush1.msra.mxu0 %v2726
        %4287 = vmatprep.subr.mxu0 0.0
        %4288 = vmatpush1.msra.mxu0 %v2725
        %4289 = vmatprep.subr.mxu0 0.0
        %4290 = vmatpush1.msra.mxu0 %v2724
        %4291 = vmatprep.subr.mxu0 0.0
        %4292 = vmatpush1.msra.mxu0 %v2723
        %4293 = vmatprep.subr.mxu0 0.0
        %4294 = vmatpush2.msra.mxu0 0.0
        %4295 = vmatprep.subr.mxu0 0.0
        %4296 = vmatpush2.msra.mxu0 0.0
        %4297 = vmatprep.subr.mxu0 0.0
        %4298 = vmatpush2.msra.mxu0 0.0
        %4299 = vmatprep.subr.mxu0 0.0
        %4300 = vmatpush2.msra.mxu0 0.0
        %4301 = vmatprep.subr.mxu0 0.0
        %4302 = vmatpush2.msra.mxu0 0.0
        %4303 = vmatprep.subr.mxu0 0.0
        %4304 = vmatpush2.msra.mxu0 0.0
        %4305 = vmatprep.subr.mxu0 0.0
        %4306 = vmatpush2.msra.mxu0 0.0
        %4307 = vmatprep.subr.mxu0 0.0
        %4308 = vmatpush2.msra.mxu0 0.0
        %4309 = vmatprep.subr.mxu0 0.0
        %4310 = vmatpush2.msra.mxu0 0.0
        %4311 = vmatprep.subr.mxu0 0.0
        %4312 = vmatpush2.msra.mxu0 0.0
        %4313 = vmatprep.subr.mxu0 0.0
        %4314 = vmatpush2.msra.mxu0 0.0
        %4315 = vmatprep.subr.mxu0 0.0
        %4316 = vmatpush2.msra.mxu0 0.0
        %4317 = vmatprep.subr.mxu0 0.0
        %4318 = vmatpush2.msra.mxu0 0.0
        %4319 = vmatprep.subr.mxu0 0.0
        %4320 = vmatpush2.msra.mxu0 0.0
        %4321 = vmatprep.subr.mxu0 0.0
        %4322 = vmatpush2.msra.mxu0 0.0
        %4323 = vmatprep.subr.mxu0 0.0
        %4324 = vmatpush2.msra.mxu0 0.0
        %4325 = vmatprep.mubr.f32.mxu0 0.0
        %4326 = vmatmul.mubr.f32.gmra.mxu0 %v4166
        %v4327 = vpop.f32.mrf.mxu0
        %v4328 = vadd.f32 %v4164, %v4327
        %v4329 = vpop.f32.mrf.mxu0
        %4330 = vmatprep.mubr.f32.mxu0 0.0
        %4331 = vmatmul.mubr.f32.gmra.mxu0 %v4169
        %v4332 = vpop.f32.mrf.mxu0
        %v4333 = vadd.f32 %v4164, %v4332
        %v4334 = vpop.f32.mrf.mxu0
        %4335 = vmatprep.mubr.f32.mxu0 0.0
        %4336 = vmatmul.mubr.f32.gmra.mxu0 %v4172
        %v4337 = vpop.f32.mrf.mxu0
        %v4338 = vadd.f32 %v4164, %v4337
        %v4339 = vpop.f32.mrf.mxu0
        %4340 = vmatprep.mubr.f32.mxu0 0.0
        %4341 = vmatmul.mubr.f32.gmra.mxu0 %v4175
        %v4342 = vpop.f32.mrf.mxu0
        %v4343 = vadd.f32 %v4164, %v4342
        %v4344 = vpop.f32.mrf.mxu0
        %4345 = vmatprep.mubr.f32.mxu0 0.0
        %4346 = vmatmul.mubr.f32.gmra.mxu0 %v4178
        %v4347 = vpop.f32.mrf.mxu0
        %v4348 = vadd.f32 %v4164, %v4347
        %v4349 = vpop.f32.mrf.mxu0
        %4350 = vmatprep.mubr.f32.mxu0 0.0
        %4351 = vmatmul.mubr.f32.gmra.mxu0 %v4181
        %v4352 = vpop.f32.mrf.mxu0
        %v4353 = vpop.f32.mrf.mxu0
        %4354 = vmatprep.mubr.f32.mxu0 0.0
        %4355 = vmatmul.mubr.f32.gmra.mxu0 %v4184
        %v4356 = vpop.f32.mrf.mxu0
        %v4357 = vpop.f32.mrf.mxu0
        %4358 = vmatprep.mubr.f32.mxu0 0.0
        %4359 = vmatmul.mubr.f32.gmra.mxu0 %v4187
        %v4360 = vpop.f32.mrf.mxu0
        %v4361 = vpop.f32.mrf.mxu0
        %4362 = vmatprep.mubr.f32.mxu0 0.0
        %4363 = vmatmul.mubr.f32.gmra.mxu0 %v4190
        %v4364 = vpop.f32.mrf.mxu0
        %v4365 = vadd.f32 %v4164, %v4364
        %v4366 = vpop.f32.mrf.mxu0
        %4367 = vmatprep.mubr.f32.mxu0 0.0
        %4368 = vmatmul.mubr.f32.gmra.mxu0 %v4193
        %v4369 = vpop.f32.mrf.mxu0
        %v4370 = vadd.f32 %v4164, %v4369
        %v4371 = vpop.f32.mrf.mxu0
        %4372 = vmatprep.mubr.f32.mxu0 0.0
        %4373 = vmatmul.mubr.f32.gmra.mxu0 %v4196
        %v4374 = vpop.f32.mrf.mxu0
        %v4375 = vadd.f32 %v4164, %v4374
        %v4376 = vpop.f32.mrf.mxu0
        %4377 = vmatprep.mubr.f32.mxu0 0.0
        %4378 = vmatmul.mubr.f32.gmra.mxu0 %v4199
        %v4379 = vpop.f32.mrf.mxu0
        %v4380 = vadd.f32 %v4164, %v4379
        %v4381 = vpop.f32.mrf.mxu0
        %4382 = vmatprep.mubr.f32.mxu0 0.0
        %4383 = vmatmul.mubr.f32.gmra.mxu0 %v4202
        %v4384 = vpop.f32.mrf.mxu0
        %v4385 = vadd.f32 %v4164, %v4384
        %v4386 = vpop.f32.mrf.mxu0
        %4387 = vmatprep.mubr.f32.mxu0 0.0
        %4388 = vmatmul.mubr.f32.gmra.mxu0 %v4205
        %v4389 = vpop.f32.mrf.mxu0
        %v4390 = vpop.f32.mrf.mxu0
        %4391 = vmatprep.mubr.f32.mxu0 0.0
        %4392 = vmatmul.mubr.f32.gmra.mxu0 %v4208
        %v4393 = vpop.f32.mrf.mxu0
        %v4394 = vpop.f32.mrf.mxu0
        %4395 = vmatprep.mubr.f32.mxu0 0.0
        %4396 = vmatmul.mubr.f32.gmra.mxu0 %v4211
        %v4397 = vpop.f32.mrf.mxu0
        %v4398 = vpop.f32.mrf.mxu0
        %4399 = vmatprep.mubr.f32.mxu0 0.0
        %4400 = vmatmul.mubr.f32.gmra.mxu0 %v4214
        %v4401 = vpop.f32.mrf.mxu0
        %v4402 = vadd.f32 %v4164, %v4401
        %v4403 = vpop.f32.mrf.mxu0
        %4404 = vmatprep.mubr.f32.mxu0 0.0
        %4405 = vmatmul.mubr.f32.gmra.mxu0 %v4217
        %v4406 = vpop.f32.mrf.mxu0
        %v4407 = vadd.f32 %v4164, %v4406
        %v4408 = vpop.f32.mrf.mxu0
        %4409 = vmatprep.mubr.f32.mxu0 0.0
        %4410 = vmatmul.mubr.f32.gmra.mxu0 %v4220
        %v4411 = vpop.f32.mrf.mxu0
        %v4412 = vadd.f32 %v4164, %v4411
        %v4413 = vpop.f32.mrf.mxu0
        %4414 = vmatprep.mubr.f32.mxu0 0.0
        %4415 = vmatmul.mubr.f32.gmra.mxu0 %v4223
        %v4416 = vpop.f32.mrf.mxu0
        %v4417 = vadd.f32 %v4164, %v4416
        %v4418 = vpop.f32.mrf.mxu0
        %4419 = vmatprep.mubr.f32.mxu0 0.0
        %4420 = vmatmul.mubr.f32.gmra.mxu0 %v4226
        %v4421 = vpop.f32.mrf.mxu0
        %v4422 = vadd.f32 %v4164, %v4421
        %v4423 = vpop.f32.mrf.mxu0
        %4424 = vmatprep.mubr.f32.mxu0 0.0
        %4425 = vmatmul.mubr.f32.gmra.mxu0 %v4229
        %v4426 = vpop.f32.mrf.mxu0
        %v4427 = vpop.f32.mrf.mxu0
        %4428 = vmatprep.mubr.f32.mxu0 0.0
        %4429 = vmatmul.mubr.f32.gmra.mxu0 %v4232
        %v4430 = vpop.f32.mrf.mxu0
        %v4431 = vpop.f32.mrf.mxu0
        %4432 = vmatprep.mubr.f32.mxu0 0.0
        %4433 = vmatmul.mubr.f32.gmra.mxu0 %v4235
        %v4434 = vpop.f32.mrf.mxu0
        %v4435 = vpop.f32.mrf.mxu0
        %4436 = vmatprep.mubr.f32.mxu0 0.0
        %4437 = vmatmul.mubr.f32.gmra.mxu0 %v4238
        %v4438 = vpop.f32.mrf.mxu0
        %v4439 = vadd.f32 %v4164, %v4438
        %v4440 = vpop.f32.mrf.mxu0
        %4441 = vmatprep.mubr.f32.mxu0 0.0
        %4442 = vmatmul.mubr.f32.gmra.mxu0 %v4241
        %v4443 = vpop.f32.mrf.mxu0
        %v4444 = vadd.f32 %v4164, %v4443
        %v4445 = vpop.f32.mrf.mxu0
        %4446 = vmatprep.mubr.f32.mxu0 0.0
        %4447 = vmatmul.mubr.f32.gmra.mxu0 %v4244
        %v4448 = vpop.f32.mrf.mxu0
        %v4449 = vadd.f32 %v4164, %v4448
        %v4450 = vpop.f32.mrf.mxu0
        %4451 = vmatprep.mubr.f32.mxu0 0.0
        %4452 = vmatmul.mubr.f32.gmra.mxu0 %v4247
        %v4453 = vpop.f32.mrf.mxu0
        %v4454 = vadd.f32 %v4164, %v4453
        %v4455 = vpop.f32.mrf.mxu0
        %4456 = vmatprep.mubr.f32.mxu0 0.0
        %4457 = vmatmul.mubr.f32.gmra.mxu0 %v4250
        %v4458 = vpop.f32.mrf.mxu0
        %v4459 = vadd.f32 %v4164, %v4458
        %v4460 = vpop.f32.mrf.mxu0
        %4461 = vmatprep.mubr.f32.mxu0 0.0
        %4462 = vmatmul.mubr.f32.gmra.mxu0 %v4253
        %v4463 = vpop.f32.mrf.mxu0
        %v4464 = vpop.f32.mrf.mxu0
        %4465 = vmatprep.mubr.f32.mxu0 0.0
        %4466 = vmatmul.mubr.f32.gmra.mxu0 %v4256
        %v4467 = vpop.f32.mrf.mxu0
        %v4468 = vpop.f32.mrf.mxu0
        %4469 = vmatprep.mubr.f32.mxu0 0.0
        %4470 = vmatmul.mubr.f32.gmra.mxu0 %v4259
        %v4471 = vpop.f32.mrf.mxu0
        %v4472 = vpop.f32.mrf.mxu0
        %4473 = vdwg.mxu0
        %v4474 = vsel %vm623, %v4328, -inf
        %v4475 = vsel %vm623, %v4333, -inf
        %v4476 = vmax.f32 %v4474, %v4475
        %v4477 = vsel %vm623, %v4338, -inf
        %v4478 = vmax.f32 %v4476, %v4477
        %v4479 = vsel %vm623, %v4343, -inf
        %v4480 = vmax.f32 %v4478, %v4479
        %v4481 = vsel %vm623, %v4348, -inf
        %v4482 = vmax.f32 %v4480, %v4481
        %v4483 = vsel %vm623, %v4365, -inf
        %v4484 = vsel %vm623, %v4370, -inf
        %v4485 = vmax.f32 %v4483, %v4484
        %v4486 = vsel %vm623, %v4375, -inf
        %v4487 = vmax.f32 %v4485, %v4486
        %v4488 = vsel %vm623, %v4380, -inf
        %v4489 = vmax.f32 %v4487, %v4488
        %v4490 = vsel %vm623, %v4385, -inf
        %v4491 = vmax.f32 %v4489, %v4490
        %v4492 = vsel %vm623, %v4402, -inf
        %v4493 = vsel %vm623, %v4407, -inf
        %v4494 = vmax.f32 %v4492, %v4493
        %v4495 = vsel %vm623, %v4412, -inf
        %v4496 = vmax.f32 %v4494, %v4495
        %v4497 = vsel %vm623, %v4417, -inf
        %v4498 = vmax.f32 %v4496, %v4497
        %v4499 = vsel %vm623, %v4422, -inf
        %v4500 = vmax.f32 %v4498, %v4499
        %v4501 = vsel %vm623, %v4439, -inf
        %v4502 = vsel %vm623, %v4444, -inf
        %v4503 = vmax.f32 %v4501, %v4502
        %v4504 = vsel %vm623, %v4449, -inf
        %v4505 = vmax.f32 %v4503, %v4504
        %v4506 = vsel %vm623, %v4454, -inf
        %v4507 = vmax.f32 %v4505, %v4506
        %v4508 = vsel %vm623, %v4459, -inf
        %v4509 = vmax.f32 %v4507, %v4508
        %v4510 = vlaneseq
        %v4511 = vshrl.u32 %v4510, 7
        %v4512 = vsub.s32 7, %v4511
        %v4513 = vrot.slane %v2732, %v4512
        %v4515 = vsel %vm623, %v4482, 0
        %v4518 = vsel %vm623, %v4491, 0
        %v4521 = vsel %vm623, %v4500, 0
        %v4524 = vsel %vm623, %v4509, 0
        %4526 = vmatprep.subr.mxu0 0.0
        %4527 = vmatpush1.msra.mxu0 0.0
        %4528 = vmatprep.subr.mxu0 0.0
        %4529 = vmatpush1.msra.mxu0 0.0
        %4530 = vmatprep.subr.mxu0 0.0
        %4531 = vmatpush1.msra.mxu0 0.0
        %4532 = vmatprep.subr.mxu0 0.0
        %4533 = vmatpush1.msra.mxu0 0.0
        %4534 = vmatprep.subr.mxu0 0.0
        %4535 = vmatpush1.msra.mxu0 0.0
        %4536 = vmatprep.subr.mxu0 0.0
        %4537 = vmatpush1.msra.mxu0 0.0
        %4538 = vmatprep.subr.mxu0 0.0
        %4539 = vmatpush1.msra.mxu0 0.0
        %4540 = vmatprep.subr.mxu0 0.0
        %4541 = vmatpush1.msra.mxu0 0.0
        %4542 = vmatprep.subr.mxu0 0.0
        %4543 = vmatpush1.msra.mxu0 0.0
        %4544 = vmatprep.subr.mxu0 0.0
        %4545 = vmatpush1.msra.mxu0 0.0
        %4546 = vmatprep.subr.mxu0 0.0
        %4547 = vmatpush1.msra.mxu0 0.0
        %4548 = vmatprep.subr.mxu0 0.0
        %4549 = vmatpush1.msra.mxu0 0.0
        %4550 = vmatprep.subr.mxu0 0.0
        %4551 = vmatpush1.msra.mxu0 %v2730
        %4552 = vmatprep.subr.mxu0 0.0
        %4553 = vmatpush1.msra.mxu0 %v2729
        %4554 = vmatprep.subr.mxu0 0.0
        %4555 = vmatpush1.msra.mxu0 %v2728
        %4556 = vmatprep.subr.mxu0 0.0
        %4557 = vmatpush1.msra.mxu0 %v2727
        %4558 = vmatprep.subr.mxu0 0.0
        %4559 = vmatpush2.msra.mxu0 0.0
        %4560 = vmatprep.subr.mxu0 0.0
        %4561 = vmatpush2.msra.mxu0 0.0
        %4562 = vmatprep.subr.mxu0 0.0
        %4563 = vmatpush2.msra.mxu0 0.0
        %4564 = vmatprep.subr.mxu0 0.0
        %4565 = vmatpush2.msra.mxu0 0.0
        %4566 = vmatprep.subr.mxu0 0.0
        %4567 = vmatpush2.msra.mxu0 0.0
        %4568 = vmatprep.subr.mxu0 0.0
        %4569 = vmatpush2.msra.mxu0 0.0
        %4570 = vmatprep.subr.mxu0 0.0
        %4571 = vmatpush2.msra.mxu0 0.0
        %4572 = vmatprep.subr.mxu0 0.0
        %4573 = vmatpush2.msra.mxu0 0.0
        %4574 = vmatprep.subr.mxu0 0.0
        %4575 = vmatpush2.msra.mxu0 0.0
        %4576 = vmatprep.subr.mxu0 0.0
        %4577 = vmatpush2.msra.mxu0 0.0
        %4578 = vmatprep.subr.mxu0 0.0
        %4579 = vmatpush2.msra.mxu0 0.0
        %4580 = vmatprep.subr.mxu0 0.0
        %4581 = vmatpush2.msra.mxu0 0.0
        %4582 = vmatprep.subr.mxu0 0.0
        %4583 = vmatpush2.msra.mxu0 0.0
        %4584 = vmatprep.subr.mxu0 0.0
        %4585 = vmatpush2.msra.mxu0 0.0
        %4586 = vmatprep.subr.mxu0 0.0
        %4587 = vmatpush2.msra.mxu0 0.0
        %4588 = vmatprep.subr.mxu0 0.0
        %4589 = vmatpush2.msra.mxu0 0.0
        %4590 = vmatprep.mubr.f32.mxu0 0.0
        %4591 = vmatmul.mubr.f32.gmra.mxu0 %v4515
        %v4592 = vpop.f32.mrf.mxu0
        %v4593 = vadd.f32 %v4513, %v4592
        %v4594 = vpop.f32.mrf.mxu0
        %4595 = vmatprep.mubr.f32.mxu0 0.0
        %4596 = vmatmul.mubr.f32.gmra.mxu0 %v4518
        %v4597 = vpop.f32.mrf.mxu0
        %v4598 = vadd.f32 %v4513, %v4597
        %v4599 = vpop.f32.mrf.mxu0
        %4600 = vmatprep.mubr.f32.mxu0 0.0
        %4601 = vmatmul.mubr.f32.gmra.mxu0 %v4521
        %v4602 = vpop.f32.mrf.mxu0
        %v4603 = vadd.f32 %v4513, %v4602
        %v4604 = vpop.f32.mrf.mxu0
        %4605 = vmatprep.mubr.f32.mxu0 0.0
        %4606 = vmatmul.mubr.f32.gmra.mxu0 %v4524
        %v4607 = vpop.f32.mrf.mxu0
        %v4608 = vadd.f32 %v4513, %v4607
        %v4609 = vpop.f32.mrf.mxu0
        %4610 = vdwg.mxu0
        %4615 = vrot.lane.b32.xlu0 %v4593, 64
        %v4616 = vpop.permute.xlu0 %4615
        %4617 = vrot.lane.b32.xlu0 %v4598, 64
        %v4618 = vpop.permute.xlu0 %4617
        %4619 = vrot.lane.b32.xlu0 %v4603, 64
        %v4620 = vpop.permute.xlu0 %4619
        %4621 = vrot.lane.b32.xlu0 %v4608, 64
        %v4622 = vpop.permute.xlu0 %4621
        %v4627 = vadd.f32 %v2952, %v4616
        %v4628 = vadd.f32 %v2953, %v4618
        %v4629 = vadd.f32 %v2954, %v4620
        %v4630 = vadd.f32 %v2955, %v4622
        %v4631 = vmax.f32 %v4627, 0.0
        %v4632 = vmax.f32 %v4628, 0.0
        %v4633 = vmax.f32 %v4629, 0.0
        %v4634 = vmax.f32 %v4630, 0.0
        %4639 = vrot.lane.b32.xlu0 %v4631, 64
        %v4640 = vpop.permute.xlu0 %4639
        %4641 = vrot.lane.b32.xlu0 %v4632, 64
        %v4642 = vpop.permute.xlu0 %4641
        %4643 = vrot.lane.b32.xlu0 %v4633, 64
        %v4644 = vpop.permute.xlu0 %4643
        %4645 = vrot.lane.b32.xlu0 %v4634, 64
        %v4646 = vpop.permute.xlu0 %4645
        %v4651 = vsel %vm623, %v4640, 0.0
        %4652 = vadd.xlane.f32.xlu0 %v4651
        %v4653 = vpop.xlane.xlu0 %4652
        %v4654 = vsel %vm623, %v4642, 0.0
        %4655 = vadd.xlane.f32.xlu0 %v4654
        %v4656 = vpop.xlane.xlu0 %4655
        %v4657 = vsel %vm623, %v4644, 0.0
        %4658 = vadd.xlane.f32.xlu0 %v4657
        %v4659 = vpop.xlane.xlu0 %4658
        %v4660 = vsel %vm623, %v4646, 0.0
        %4661 = vadd.xlane.f32.xlu0 %v4660
        %v4662 = vpop.xlane.xlu0 %4661
        %v4663 = vmul.f32 %v4653, %v2618
        %v4664 = vmul.f32 %v4656, %v2618
        %v4665 = vmul.f32 %v4659, %v2618
        %v4666 = vmul.f32 %v4662, %v2618
        %v4667 = vsub.f32 %v4631, %v4663
        %v4668 = vsub.f32 %v4632, %v4664
        %v4669 = vsub.f32 %v4633, %v4665
        %v4670 = vsub.f32 %v4634, %v4666
        %v4671 = vmul.f32 %v4667, %v4667
        %v4672 = vmul.f32 %v4668, %v4668
        %v4673 = vmul.f32 %v4669, %v4669
        %v4674 = vmul.f32 %v4670, %v4670
        %4679 = vrot.lane.b32.xlu0 %v4671, 64
        %v4680 = vpop.permute.xlu0 %4679
        %4681 = vrot.lane.b32.xlu0 %v4672, 64
        %v4682 = vpop.permute.xlu0 %4681
        %4683 = vrot.lane.b32.xlu0 %v4673, 64
        %v4684 = vpop.permute.xlu0 %4683
        %4685 = vrot.lane.b32.xlu0 %v4674, 64
        %v4686 = vpop.permute.xlu0 %4685
        %v4691 = vsel %vm623, %v4680, 0.0
        %4692 = vadd.xlane.f32.xlu0 %v4691
        %v4693 = vpop.xlane.xlu0 %4692
        %v4694 = vsel %vm623, %v4682, 0.0
        %4695 = vadd.xlane.f32.xlu0 %v4694
        %v4696 = vpop.xlane.xlu0 %4695
        %v4697 = vsel %vm623, %v4684, 0.0
        %4698 = vadd.xlane.f32.xlu0 %v4697
        %v4699 = vpop.xlane.xlu0 %4698
        %v4700 = vsel %vm623, %v4686, 0.0
        %4701 = vadd.xlane.f32.xlu0 %v4700
        %v4702 = vpop.xlane.xlu0 %4701
        %v4703 = vmul.f32 %v4693, %v2618
        %v4704 = vmul.f32 %v4696, %v2618
        %v4705 = vmul.f32 %v4699, %v2618
        %v4706 = vmul.f32 %v4702, %v2618
        %v4707 = vadd.f32 %v4703, 1e-05
        %v4708 = vadd.f32 %v4704, 1e-05
        %v4709 = vadd.f32 %v4705, 1e-05
        %v4710 = vadd.f32 %v4706, 1e-05
        %v4711 = vrsqrt.pop %v4707
        %v4712 = vrsqrt.pop %v4708
        %v4713 = vrsqrt.pop %v4709
        %v4714 = vrsqrt.pop %v4710
        %v4715 = vmul.f32 %v4667, %v4711
        %v4716 = vmul.f32 %v4668, %v4712
        %v4717 = vmul.f32 %v4669, %v4713
        %v4718 = vmul.f32 %v4670, %v4714
        %v4719 = vlaneseq
        %v4720 = vshrl.u32 %v4719, 7
        %v4721 = vsub.s32 0, %v4720
        %v4722 = vrot.slane %v2733, %v4721
        %4724 = vrot.lane.b32.xlu0 %v4722, 64
        %v4725 = vpop.permute.xlu0 %4724
        %v4727 = vmul.f32 %v4715, %v4725
        %v4728 = vmul.f32 %v4716, %v4725
        %v4729 = vmul.f32 %v4717, %v4725
        %v4730 = vmul.f32 %v4718, %v4725
        %v4731 = vlaneseq
        %v4732 = vshrl.u32 %v4731, 7
        %v4733 = vsub.s32 1, %v4732
        %v4734 = vrot.slane %v2733, %v4733
        %4736 = vrot.lane.b32.xlu0 %v4734, 64
        %v4737 = vpop.permute.xlu0 %4736
        %v4739 = vadd.f32 %v4727, %v4737
        %v4740 = vadd.f32 %v4728, %v4737
        %v4741 = vadd.f32 %v4729, %v4737
        %v4742 = vadd.f32 %v4730, %v4737
        %vm4743 = vcmask 782848
        %v4744 = vsel %vm4743, %v4739, 0.0
        %v4745 = vrot.slane %v4744, 4
        %v4746 = vadd.f32 %v4744, %v4745
        %v4747 = vrot.slane %v4746, 2
        %v4748 = vadd.f32 %v4746, %v4747
        %v4749 = vrot.slane %v4748, 1
        %v4750 = vadd.f32 %v4748, %v4749
        %v4751 = vsel %vm4743, %v4740, 0.0
        %v4752 = vrot.slane %v4751, 4
        %v4753 = vadd.f32 %v4751, %v4752
        %v4754 = vrot.slane %v4753, 2
        %v4755 = vadd.f32 %v4753, %v4754
        %v4756 = vrot.slane %v4755, 1
        %v4757 = vadd.f32 %v4755, %v4756
        %v4758 = vsel %vm4743, %v4741, 0.0
        %v4759 = vrot.slane %v4758, 4
        %v4760 = vadd.f32 %v4758, %v4759
        %v4761 = vrot.slane %v4760, 2
        %v4762 = vadd.f32 %v4760, %v4761
        %v4763 = vrot.slane %v4762, 1
        %v4764 = vadd.f32 %v4762, %v4763
        %v4765 = vsel %vm4743, %v4742, 0.0
        %v4766 = vrot.slane %v4765, 4
        %v4767 = vadd.f32 %v4765, %v4766
        %v4768 = vrot.slane %v4767, 2
        %v4769 = vadd.f32 %v4767, %v4768
        %v4770 = vrot.slane %v4769, 1
        %v4771 = vadd.f32 %v4769, %v4770
        %v4772 = vmul.f32 %v4750, 0.2
        %v4773 = vmul.f32 %v4757, 0.2
        %v4774 = vmul.f32 %v4764, 0.2
        %v4775 = vmul.f32 %v4771, 0.2
        %v4776 = vld [vmem:[#allocation10] sm:$0xff]
        %v4777 = vld [vmem:[#allocation10 + $0x8] sm:$0xff]
        %v4778 = vld [vmem:[#allocation10 + $0x10] sm:$0xff]
        %v4779 = vld [vmem:[#allocation10 + $0x18] sm:$0xff]
        %v4780 = vld [vmem:[%s9] sm:$0x1]
        %v4782 = vlaneseq
        %v4783 = vshrl.u32 %v4782, 7
        %v4784 = vsub.s32 0, %v4783
        %v4785 = vrot.slane %v4780, %v4784
        %vm4791 = vcmask 1041409
        %v4792 = vsel %vm4791, %v4773, %v4772
        %vm4793 = vcmask 1042434
        %v4794 = vsel %vm4793, %v4774, %v4792
        %vm4795 = vcmask 1043459
        %v4796 = vsel %vm4795, %v4775, %v4794
        %4797 = vrot.lane.b32.xlu0 %v4796, 64
        %v4798 = vpop.permute.xlu0 %4797
        %v4799 = vsel %vm623, %v4798, 0
        %4801 = vmatprep.subr.mxu0 0.0
        %4802 = vmatpush1.msra.mxu0 0.0
        %4803 = vmatprep.subr.mxu0 0.0
        %4804 = vmatpush1.msra.mxu0 0.0
        %4805 = vmatprep.subr.mxu0 0.0
        %4806 = vmatpush1.msra.mxu0 0.0
        %4807 = vmatprep.subr.mxu0 0.0
        %4808 = vmatpush1.msra.mxu0 0.0
        %4809 = vmatprep.subr.mxu0 0.0
        %4810 = vmatpush1.msra.mxu0 0.0
        %4811 = vmatprep.subr.mxu0 0.0
        %4812 = vmatpush1.msra.mxu0 0.0
        %4813 = vmatprep.subr.mxu0 0.0
        %4814 = vmatpush1.msra.mxu0 0.0
        %4815 = vmatprep.subr.mxu0 0.0
        %4816 = vmatpush1.msra.mxu0 0.0
        %4817 = vmatprep.subr.mxu0 0.0
        %4818 = vmatpush1.msra.mxu0 0.0
        %4819 = vmatprep.subr.mxu0 0.0
        %4820 = vmatpush1.msra.mxu0 0.0
        %4821 = vmatprep.subr.mxu0 0.0
        %4822 = vmatpush1.msra.mxu0 0.0
        %4823 = vmatprep.subr.mxu0 0.0
        %4824 = vmatpush1.msra.mxu0 0.0
        %4825 = vmatprep.subr.mxu0 0.0
        %4826 = vmatpush1.msra.mxu0 %v4779
        %4827 = vmatprep.subr.mxu0 0.0
        %4828 = vmatpush1.msra.mxu0 %v4778
        %4829 = vmatprep.subr.mxu0 0.0
        %4830 = vmatpush1.msra.mxu0 %v4777
        %4831 = vmatprep.subr.mxu0 0.0
        %4832 = vmatpush1.msra.mxu0 %v4776
        %4833 = vmatprep.subr.mxu0 0.0
        %4834 = vmatpush2.msra.mxu0 0.0
        %4835 = vmatprep.subr.mxu0 0.0
        %4836 = vmatpush2.msra.mxu0 0.0
        %4837 = vmatprep.subr.mxu0 0.0
        %4838 = vmatpush2.msra.mxu0 0.0
        %4839 = vmatprep.subr.mxu0 0.0
        %4840 = vmatpush2.msra.mxu0 0.0
        %4841 = vmatprep.subr.mxu0 0.0
        %4842 = vmatpush2.msra.mxu0 0.0
        %4843 = vmatprep.subr.mxu0 0.0
        %4844 = vmatpush2.msra.mxu0 0.0
        %4845 = vmatprep.subr.mxu0 0.0
        %4846 = vmatpush2.msra.mxu0 0.0
        %4847 = vmatprep.subr.mxu0 0.0
        %4848 = vmatpush2.msra.mxu0 0.0
        %4849 = vmatprep.subr.mxu0 0.0
        %4850 = vmatpush2.msra.mxu0 0.0
        %4851 = vmatprep.subr.mxu0 0.0
        %4852 = vmatpush2.msra.mxu0 0.0
        %4853 = vmatprep.subr.mxu0 0.0
        %4854 = vmatpush2.msra.mxu0 0.0
        %4855 = vmatprep.subr.mxu0 0.0
        %4856 = vmatpush2.msra.mxu0 0.0
        %4857 = vmatprep.subr.mxu0 0.0
        %4858 = vmatpush2.msra.mxu0 0.0
        %4859 = vmatprep.subr.mxu0 0.0
        %4860 = vmatpush2.msra.mxu0 0.0
        %4861 = vmatprep.subr.mxu0 0.0
        %4862 = vmatpush2.msra.mxu0 0.0
        %4863 = vmatprep.subr.mxu0 0.0
        %4864 = vmatpush2.msra.mxu0 0.0
        %4865 = vmatprep.mubr.f32.mxu0 0.0
        %4866 = vmatmul.mubr.f32.gmra.mxu0 %v4799
        %v4867 = vpop.f32.mrf.mxu0
        %v4868 = vadd.f32 %v4785, %v4867
        %v4869 = vpop.f32.mrf.mxu0
        %4870 = vdwg.mxu0
        %v4871 = vmax.f32 %v4868, 0.0
        %v4872 = vld [vmem:[%s10] sm:$0xff]
        %v4873 = vld [vmem:[%s10 + $0x8] sm:$0xff]
        %v4874 = vld [vmem:[%s10 + $0x10] sm:$0xff]
        %v4875 = vld [vmem:[%s10 + $0x18] sm:$0xff]
        %v4876 = vld [vmem:[%s11] sm:$0x1]
        %v4878 = vlaneseq
        %v4879 = vshrl.u32 %v4878, 7
        %v4880 = vsub.s32 0, %v4879
        %v4881 = vrot.slane %v4876, %v4880
        %v4884 = vsel %vm623, %v4871, 0
        %4886 = vmatprep.subr.mxu0 0.0
        %4887 = vmatpush1.msra.mxu0 0.0
        %4888 = vmatprep.subr.mxu0 0.0
        %4889 = vmatpush1.msra.mxu0 0.0
        %4890 = vmatprep.subr.mxu0 0.0
        %4891 = vmatpush1.msra.mxu0 0.0
        %4892 = vmatprep.subr.mxu0 0.0
        %4893 = vmatpush1.msra.mxu0 0.0
        %4894 = vmatprep.subr.mxu0 0.0
        %4895 = vmatpush1.msra.mxu0 0.0
        %4896 = vmatprep.subr.mxu0 0.0
        %4897 = vmatpush1.msra.mxu0 0.0
        %4898 = vmatprep.subr.mxu0 0.0
        %4899 = vmatpush1.msra.mxu0 0.0
        %4900 = vmatprep.subr.mxu0 0.0
        %4901 = vmatpush1.msra.mxu0 0.0
        %4902 = vmatprep.subr.mxu0 0.0
        %4903 = vmatpush1.msra.mxu0 0.0
        %4904 = vmatprep.subr.mxu0 0.0
        %4905 = vmatpush1.msra.mxu0 0.0
        %4906 = vmatprep.subr.mxu0 0.0
        %4907 = vmatpush1.msra.mxu0 0.0
        %4908 = vmatprep.subr.mxu0 0.0
        %4909 = vmatpush1.msra.mxu0 0.0
        %4910 = vmatprep.subr.mxu0 0.0
        %4911 = vmatpush1.msra.mxu0 %v4875
        %4912 = vmatprep.subr.mxu0 0.0
        %4913 = vmatpush1.msra.mxu0 %v4874
        %4914 = vmatprep.subr.mxu0 0.0
        %4915 = vmatpush1.msra.mxu0 %v4873
        %4916 = vmatprep.subr.mxu0 0.0
        %4917 = vmatpush1.msra.mxu0 %v4872
        %4918 = vmatprep.subr.mxu0 0.0
        %4919 = vmatpush2.msra.mxu0 0.0
        %4920 = vmatprep.subr.mxu0 0.0
        %4921 = vmatpush2.msra.mxu0 0.0
        %4922 = vmatprep.subr.mxu0 0.0
        %4923 = vmatpush2.msra.mxu0 0.0
        %4924 = vmatprep.subr.mxu0 0.0
        %4925 = vmatpush2.msra.mxu0 0.0
        %4926 = vmatprep.subr.mxu0 0.0
        %4927 = vmatpush2.msra.mxu0 0.0
        %4928 = vmatprep.subr.mxu0 0.0
        %4929 = vmatpush2.msra.mxu0 0.0
        %4930 = vmatprep.subr.mxu0 0.0
        %4931 = vmatpush2.msra.mxu0 0.0
        %4932 = vmatprep.subr.mxu0 0.0
        %4933 = vmatpush2.msra.mxu0 0.0
        %4934 = vmatprep.subr.mxu0 0.0
        %4935 = vmatpush2.msra.mxu0 0.0
        %4936 = vmatprep.subr.mxu0 0.0
        %4937 = vmatpush2.msra.mxu0 0.0
        %4938 = vmatprep.subr.mxu0 0.0
        %4939 = vmatpush2.msra.mxu0 0.0
        %4940 = vmatprep.subr.mxu0 0.0
        %4941 = vmatpush2.msra.mxu0 0.0
        %4942 = vmatprep.subr.mxu0 0.0
        %4943 = vmatpush2.msra.mxu0 0.0
        %4944 = vmatprep.subr.mxu0 0.0
        %4945 = vmatpush2.msra.mxu0 0.0
        %4946 = vmatprep.subr.mxu0 0.0
        %4947 = vmatpush2.msra.mxu0 0.0
        %4948 = vmatprep.subr.mxu0 0.0
        %4949 = vmatpush2.msra.mxu0 0.0
        %4950 = vmatprep.mubr.f32.mxu0 0.0
        %4951 = vmatmul.mubr.f32.gmra.mxu0 %v4884
        %v4952 = vpop.f32.mrf.mxu0
        %v4953 = vadd.f32 %v4881, %v4952
        %v4954 = vpop.f32.mrf.mxu0
        %4955 = vdwg.mxu0
        %v4958 = vunpack.c.l.s4 1966171168
        %v4959 = vunpack.c.0.s8 %v4958
        %v4960 = vlaneseq
        %v4961 = vshrl.u32 %v4960, 7
        %v4962 = vsub.s32 %v4959, %v4961
        %v4963 = vrot.slane %v4953, %v4962
        %v4964 = vcombine.high %v4963, %v4963
        %v4966 = vunpack.c.l.s4 1966171168
        %v4967 = vunpack.c.0.s8 %v4966
        %v4968 = vlaneseq
        %v4969 = vshrl.u32 %v4968, 7
        %v4970 = vsub.s32 %v4967, %v4969
        %v4971 = vrot.slane %v4963, %v4970
        %v4973 = vunpack.c.l.s4 1966171168
        %v4974 = vunpack.c.0.s8 %v4973
        %v4975 = vlaneseq
        %v4976 = vshrl.u32 %v4975, 7
        %v4977 = vsub.s32 %v4974, %v4976
        %v4978 = vrot.slane %v4964, %v4977
        %v4979 = vcombine.high %v4971, %v4971
        %v4980 = vcombine.high %v4978, %v4978
        %vm4985 = vcmask 24576
        %4986 = vst.msk [vmem:[%s554] sm:$0x1] %vm4985, %v4971
        %4987 = vst.msk [vmem:[%s554 + $0x1] sm:$0x1] %vm4985, %v4978
        %4988 = vst.msk [vmem:[%s554 + $0x2] sm:$0x1] %vm4985, %v4979
        %4989 = vst.msk [vmem:[%s554 + $0x3] sm:$0x1] %vm4985, %v4980
        %s4990 = smul.u32 4, %s31
        %p4991 = scmp.lt.s32.totalorder %s4990, 7
        %s4992 = scalar_select %p4991, %s4990, 7
        %s4993 = scalar_lea.vmem %s12, %s4992
        // Predicated region
        $region93: #{tpu_custom_call.1} parent=67 // pred_check
          %p4994 = pneg %p316
        $region94: #{tpu_custom_call.1} parent=67 // pred_check_branch
          %4996 = sbr.rel (%p4994) target = $region96
        $region95: #{tpu_custom_call.1} parent=67 // pred_region
          %s4997 = smul.u32 4, %s31
        $region96: #{tpu_custom_call.1} parent=67 // pred_fallthru
          _
      $region68: #{tpu_custom_call.1} parent=5 // pred_fallthru
        _
      %p4998 = scmp.le.s32.totalorder 2, %s26
      // Predicated region
      $region97: #{tpu_custom_call.1} parent=5 // pred_check
        %p4999 = pneg %p4998
      $region98: #{tpu_custom_call.1} parent=5 // pred_check_branch
        %5001 = sbr.rel (%p4999) target = $region100
      $region99: #{tpu_custom_call.1} parent=5 // pred_region
        %s5002 = ssub.s32 %s26, 2
        // Predicated region
        $region101: #{tpu_custom_call.1} parent=99 // pred_check
          %p5003 = pneg %p322
        $region102: #{tpu_custom_call.1} parent=99 // pred_check_branch
          %5005 = sbr.rel (%p5003) target = $region104
        $region103: #{tpu_custom_call.1} parent=99 // pred_region
          %s5006 = smul.u32 4, %s32
          %p5007 = scmp.lt.s32.totalorder %s5006, 7
          %s5008 = scalar_select %p5007, %s5006, 7
          %s5009 = scalar_lea.vmem %s12, %s5008
        $region104: #{tpu_custom_call.1} parent=99 // pred_fallthru
          _
      $region100: #{tpu_custom_call.1} parent=5 // pred_fallthru
        _
    $region6: #{tpu_custom_call.1} parent=1 // loop_footer
      %s30 = sadd.s32 1, %s26
    $region7: #{tpu_custom_call.1} parent=1 // loop_footer_branch
      %25 = sbr.rel target = $region3
    $region8: #{tpu_custom_call.1} parent=1 // loop_exit
      _
    %5010 = vsyncpa [#allocation3], 1
    %s5011 = scalar_lea.sflag [#allocation3], 1
    %5012 = vsyncpa %s5011, 1
    %5013 = vsyncpa [#allocation5], 1
    %s5014 = scalar_lea.sflag [#allocation5], 1
    %5015 = vsyncpa %s5014, 1
    %5016 = vsyncpa [#allocation8], 1
    %5017 = vsyncpa [#allocation11], 1

</llo_original>
